<compile_context>
chip_gen: v7x
topology: tpu7x:2x2x1
jax: 0.10.0
libtpu: 0.0.40
codegen_flags: <defaults>
</compile_context>

<pallas_src>
import functools
import jax
import jax.numpy as jnp
from jax import lax
from jax.experimental import pallas as pl
from jax.experimental.pallas import tpu as pltpu

NHEAD = 2          # nn.TransformerEncoderLayer(nhead=2)
LN_EPS = 1e-5      # PyTorch LayerNorm default eps
NEG_BIG = -1e30    # finite mask sentinel (robust even if a row were fully masked)


def _layer_norm(x, gamma, beta):
    mu = jnp.mean(x, axis=-1, keepdims=True)
    var = jnp.mean((x - mu) ** 2, axis=-1, keepdims=True)
    return (x - mu) * lax.rsqrt(var + LN_EPS) * gamma + beta


def sentence_g_kernel(action_ref, lens_ref, state_ref,
                      emb_ref, newemb_ref,
                      wqkv_ref, bqkv_ref, wo_ref, bo_ref,
                      w1_ref, b1_ref, w2t_ref, b2_ref,
                      g1_ref, be1_ref, g2_ref, be2_ref,
                      wr_ref, br_ref,
                      out_ref, reward_ref,
                      *, B, S1, SP):
    D = state_ref.shape[2]
    HD = D // NHEAD
    scale = 1.0 / (HD ** 0.5)

    # ---- glue (was wrapper): embedding gather + new_embedding + concat + pad ----
    new_emb = newemb_ref[...]                                   # (1, D)
    pad_rows = jnp.zeros((SP - S1, D), jnp.float32)
    x_parts = []
    for b in range(B):                                          # B tiny & static
        emb_row = emb_ref[action_ref[b]] + new_emb              # (1, D) dyn gather
        x_parts.append(jnp.concatenate([emb_row, state_ref[b], pad_rows], axis=0))
    x = jnp.concatenate(x_parts, axis=0)                        # (B*SP, D)

    # ---- fused in_proj for the whole padded batch: 1 MXU push instead of 3 ----
    qkv = jnp.dot(x, wqkv_ref[...], preferred_element_type=jnp.float32) + bqkv_ref[...]
    q = qkv[:, 0:D] * scale                 # PyTorch scales q (incl. its bias)
    k = qkv[:, D:2 * D]
    v = qkv[:, 2 * D:3 * D]

    wo = wo_ref[...]
    # Hoisted: identical for every batch element (JAX does not CSE iota).
    key_idx = lax.broadcasted_iota(jnp.int32, (SP, SP), dimension=1)

    # ---- attention over full SP rows (tile-aligned slices, no VMEM scratch) ----
    attn_parts = []
    for b in range(B):
        pad = key_idx >= lens_ref[b]                            # True = masked key
        r0 = b * SP                                             # tile-aligned offset
        qb = q[r0:r0 + SP, :]
        kb = k[r0:r0 + SP, :]
        vb = v[r0:r0 + SP, :]
        attn_b = None
        for h in range(NHEAD):
            c0 = h * HD
            qh = qb[:, c0:c0 + HD]
            kh = kb[:, c0:c0 + HD]
            vh = vb[:, c0:c0 + HD]
            scores = lax.dot_general(qh, kh, (((1,), (1,)), ((), ())),
                                     preferred_element_type=jnp.float32)
            scores = jnp.where(pad, NEG_BIG, scores)
            m = jnp.max(scores, axis=-1, keepdims=True)
            e = jnp.exp(scores - m)
            p = e * pl.reciprocal(jnp.sum(e, axis=-1, keepdims=True), approx=True)
            ctx = jnp.dot(p, vh, preferred_element_type=jnp.float32)   # (SP, HD)
            # Fold the output projection per head -> no lane-axis concat of heads.
            proj = jnp.dot(ctx, wo[c0:c0 + HD, :],
                           preferred_element_type=jnp.float32)          # (SP, D)
            attn_b = proj if attn_b is None else attn_b + proj
        attn_parts.append(attn_b)
    attn = jnp.concatenate(attn_parts, axis=0)                          # (B*SP, D)

    # ---- post-LN encoder layer, batched over all B*SP rows ----
    y = _layer_norm(x + attn + bo_ref[...], g1_ref[...], be1_ref[...])

    # ---- FFN: bf16 operands straight to the MXU, f32 accumulation ----
    h1 = jnp.dot(y.astype(jnp.bfloat16), w1_ref[...],
                 preferred_element_type=jnp.float32) + b1_ref[...]
    h1 = jnp.maximum(h1, 0.0)
    ff = jnp.dot(h1.astype(jnp.bfloat16), w2t_ref[...],
                 preferred_element_type=jnp.float32) + b2_ref[...]
    z = _layer_norm(y + ff, g2_ref[...], be2_ref[...])

    out_ref[...] = z

    # ---- reward head on token 0 of each batch element: one gather, one reduce ----
    rows = jnp.concatenate([z[b * SP:b * SP + 1, :] for b in range(B)], axis=0)  # (B, D)
    reward_ref[...] = jnp.sum(rows * wr_ref[...], axis=-1, keepdims=True) + br_ref[...]


def init_params(key, input_size, num_actions, hidden_size, dim_ff):
    D = input_size
    H = hidden_size          # must equal D for the concat in forward() to typecheck
    assert H == D
    ks = jax.random.split(key, 12)
    s = 0.02

    in_proj_w = jax.random.normal(ks[0], (3 * D, D), jnp.float32) * s   # torch (3D, D)
    in_proj_b = jax.random.normal(ks[1], (3 * D,), jnp.float32) * s
    w1 = jax.random.normal(ks[6], (dim_ff, D), jnp.float32) * s         # linear1.weight
    w2 = jax.random.normal(ks[8], (D, dim_ff), jnp.float32) * s         # linear2.weight

    return {
        # embedding table stored (num_actions, 1, D) so the dynamic gather indexes
        # a leading (non-tiled) axis in-kernel.
        "emb":     jax.random.normal(ks[2], (num_actions, 1, H), jnp.float32) * s,
        "new_emb": (jax.random.normal(ks[3], (H,), jnp.float32) * s).reshape(1, H),
        # fused in_proj, pre-transposed: qkv = x @ W_in^T + b_in
        "wqkv_t": in_proj_w.T,                                           # (D, 3D)
        "bqkv":   in_proj_b.reshape(1, 3 * D),
        "wo_t": (jax.random.normal(ks[4], (D, D), jnp.float32) * s).T,   # (D, D)
        "bo":   (jax.random.normal(ks[5], (D,), jnp.float32) * s).reshape(1, D),
        # FFN weights: bf16 storage, BOTH pre-transposed so the in-kernel dots are
        # plain (K, N) matmuls with no transpose/relayout of the weight.
        "w1_t": w1.T.astype(jnp.bfloat16),                               # (D, dim_ff)
        "b1":   (jax.random.normal(ks[7], (dim_ff,), jnp.float32) * s).reshape(1, dim_ff),
        "w2_t": w2.T.astype(jnp.bfloat16),                               # (dim_ff, D)
        "b2":   (jax.random.normal(ks[9], (D,), jnp.float32) * s).reshape(1, D),
        "g1":  jnp.ones((1, D), jnp.float32),  "be1": jnp.zeros((1, D), jnp.float32),
        "g2":  jnp.ones((1, D), jnp.float32),  "be2": jnp.zeros((1, D), jnp.float32),
        "wr":  jax.random.normal(ks[10], (1, D), jnp.float32) * s,
        "br":  (jax.random.normal(ks[11], (1,), jnp.float32) * s).reshape(1, 1),
    }


def sentence_based_model_g(params, state, state_length, action):
    """forward(((state, state_length), action)) -> ((output, state_length+1), reward)"""
    B, S, D = state.shape
    S1 = S + 1
    SP = ((S1 + 7) // 8) * 8        # pad seq to sublane multiple -> aligned row blocks
    dim_ff = params["w1_t"].shape[1]
    new_length = (state_length + 1).astype(jnp.int32)
    action = action.astype(jnp.int32)

    vmem = pl.BlockSpec(memory_space=pltpu.MemorySpace.VMEM)
    smem = pl.BlockSpec(memory_space=pltpu.MemorySpace.SMEM)

    weights = (params["emb"], params["new_emb"],
               params["wqkv_t"], params["bqkv"],
               params["wo_t"], params["bo"],
               params["w1_t"], params["b1"], params["w2_t"], params["b2"],
               params["g1"], params["be1"], params["g2"], params["be2"],
               params["wr"], params["br"])

    rows = B * SP
    hd = D // NHEAD
    flops = (2 * rows * D * 3 * D                                    # fused QKV
             + B * NHEAD * (4 * SP * SP * hd + 2 * SP * hd * D)      # attn + out-proj
             + 2 * rows * D * dim_ff * 2                             # FFN
             + 20 * rows * D)                                        # LN / residual
    transcendentals = B * NHEAD * SP * (SP + 1) + 2 * rows
    bytes_accessed = (state.nbytes + sum(w.nbytes for w in weights)
                      + rows * D * 4 + B * 8)

    out_flat, reward = pl.pallas_call(
        functools.partial(sentence_g_kernel, B=B, S1=S1, SP=SP),
        out_shape=(jax.ShapeDtypeStruct((rows, D), jnp.float32),
                   jax.ShapeDtypeStruct((B, 1), jnp.float32)),
        in_specs=[smem, smem, vmem] + [vmem] * len(weights),
        out_specs=(vmem, vmem),
        cost_estimate=pl.CostEstimate(flops=flops,
                                      transcendentals=transcendentals,
                                      bytes_accessed=bytes_accessed),
    )(action, new_length, state, *weights)

    out = out_flat.reshape(B, SP, D)[:, :S1, :]    # drop pad-query rows (garbage)
    return (out, new_length), reward[:, 0]


def reference_forward(params, state, state_length, action):
    """Pure-JAX reference (same bf16 FFN weights) for a correctness check."""
    B, S, D = state.shape
    S1 = S + 1
    HD = D // NHEAD
    lens = (state_length + 1).astype(jnp.int32)
    act_emb = params["emb"][action, 0, :] + params["new_emb"][0]
    x = jnp.concatenate([act_emb[:, None, :], state], axis=1)           # (B, S1, D)
    qkv = x @ params["wqkv_t"] + params["bqkv"][0]
    q = qkv[..., :D] / jnp.sqrt(1.0 * HD)
    k = qkv[..., D:2 * D]
    v = qkv[..., 2 * D:]
    split = lambda t: t.reshape(B, S1, NHEAD, HD).transpose(0, 2, 1, 3)
    q, k, v = split(q), split(k), split(v)
    scores = jnp.einsum('bhqd,bhkd->bhqk', q, k)
    mask = jnp.arange(S1)[None, :] >= lens[:, None]                     # (B, S1)
    scores = jnp.where(mask[:, None, None, :], NEG_BIG, scores)
    p = jax.nn.softmax(scores, axis=-1)
    ctx = jnp.einsum('bhqk,bhkd->bhqd', p, v)
    ctx = ctx.transpose(0, 2, 1, 3).reshape(B, S1, D)
    attn = ctx @ params["wo_t"] + params["bo"][0]

    def ln(t, g, b):
        mu = t.mean(-1, keepdims=True)
        var = ((t - mu) ** 2).mean(-1, keepdims=True)
        return (t - mu) / jnp.sqrt(var + LN_EPS) * g + b

    y = ln(x + attn, params["g1"][0], params["be1"][0])
    h1 = jnp.maximum(
        jnp.dot(y.astype(jnp.bfloat16), params["w1_t"],
                preferred_element_type=jnp.float32) + params["b1"][0], 0.0)
    ff = jnp.dot(h1.astype(jnp.bfloat16), params["w2_t"],
                 preferred_element_type=jnp.float32) + params["b2"][0]
    z = ln(y + ff, params["g2"][0], params["be2"][0])
    reward = jnp.sum(z[:, 0, :] * params["wr"][0], axis=-1) + params["br"][0, 0]
    return (z, lens), reward


if __name__ == "__main__":
    key = jax.random.PRNGKey(0)
    B, S, D = 2, 8, 32            # batch, prev-state seq len, d_model (=hidden_size)
    NUM_ACTIONS = 10
    DIM_FF = 2048                 # PyTorch TransformerEncoderLayer default dim_feedforward

    pk, sk, ak = jax.random.split(key, 3)
    params = init_params(pk, D, NUM_ACTIONS, D, DIM_FF)
    state = jax.random.normal(sk, (B, S, D), jnp.float32)
    action = jax.random.randint(ak, (B,), 0, NUM_ACTIONS)
    state_length = jnp.array([5, 8], dtype=jnp.int32)

    fwd = jax.jit(functools.partial(sentence_based_model_g, params))
    (out, new_len), reward = fwd(state, state_length, action)
    jax.block_until_ready((out, new_len, reward))

    assert out.shape == (B, S + 1, D) and out.dtype == jnp.float32
    assert new_len.shape == (B,)
    assert reward.shape == (B,)
    assert bool(jnp.all(jnp.isfinite(out))) and bool(jnp.all(jnp.isfinite(reward)))

    # Loose tolerance covers approx-reciprocal softmax + MXU accumulation order.
    (ref_out, ref_len), ref_reward = reference_forward(params, state, state_length, action)
    assert bool(jnp.allclose(out, ref_out, rtol=2e-2, atol=2e-2))
    assert bool(jnp.allclose(reward, ref_reward, rtol=2e-2, atol=2e-2))
    assert bool(jnp.all(new_len == ref_len))

    print("KERNEL_OK")
</pallas_src>

<mosaic_0001>
module attributes {stable_mosaic.version = 11 : i64} {
  func.func @sentence_g_kernel(%arg0: memref<2xi32, #tpu.memory_space<smem>>, %arg1: memref<2xi32, #tpu.memory_space<smem>>, %arg2: memref<2x8x32xf32, #tpu.memory_space<vmem>>, %arg3: memref<10x1x32xf32, #tpu.memory_space<vmem>>, %arg4: memref<1x32xf32, #tpu.memory_space<vmem>>, %arg5: memref<32x96xf32, #tpu.memory_space<vmem>>, %arg6: memref<1x96xf32, #tpu.memory_space<vmem>>, %arg7: memref<32x32xf32, #tpu.memory_space<vmem>>, %arg8: memref<1x32xf32, #tpu.memory_space<vmem>>, %arg9: memref<32x2048xbf16, #tpu.memory_space<vmem>>, %arg10: memref<1x2048xf32, #tpu.memory_space<vmem>>, %arg11: memref<2048x32xbf16, #tpu.memory_space<vmem>>, %arg12: memref<1x32xf32, #tpu.memory_space<vmem>>, %arg13: memref<1x32xf32, #tpu.memory_space<vmem>>, %arg14: memref<1x32xf32, #tpu.memory_space<vmem>>, %arg15: memref<1x32xf32, #tpu.memory_space<vmem>>, %arg16: memref<1x32xf32, #tpu.memory_space<vmem>>, %arg17: memref<1x32xf32, #tpu.memory_space<vmem>>, %arg18: memref<1x1xf32, #tpu.memory_space<vmem>>, %arg19: memref<32x32xf32, #tpu.memory_space<vmem>>, %arg20: memref<2x1xf32, #tpu.memory_space<vmem>>) attributes {dimension_semantics = [], scalar_prefetch = 0 : i64, scratch_operands = 0 : i64, tpu.core_type = #tpu.core_type<tc>} {
    %c0 = arith.constant 0 : index
    %c0_0 = arith.constant 0 : index
    %0 = vector.load %arg4[%c0, %c0_0] : memref<1x32xf32, #tpu.memory_space<vmem>>, vector<1x32xf32>
    %cst = arith.constant 0.000000e+00 : f32
    %1 = vector.broadcast %cst : f32 to vector<7x32xf32>
    %c0_1 = arith.constant 0 : index
    %2 = memref.load %arg0[%c0_1] : memref<2xi32, #tpu.memory_space<smem>>
    %3 = arith.index_cast %2 : i32 to index
    %c0_2 = arith.constant 0 : index
    %c0_3 = arith.constant 0 : index
    %4 = vector.load %arg3[%3, %c0_2, %c0_3] : memref<10x1x32xf32, #tpu.memory_space<vmem>>, vector<1x1x32xf32>
    %5 = vector.shape_cast %4 : vector<1x1x32xf32> to vector<1x32xf32>
    %6 = arith.addf %5, %0 : vector<1x32xf32>
    %c0_4 = arith.constant 0 : index
    %c0_5 = arith.constant 0 : index
    %c0_6 = arith.constant 0 : index
    %7 = vector.load %arg2[%c0_4, %c0_5, %c0_6] : memref<2x8x32xf32, #tpu.memory_space<vmem>>, vector<1x8x32xf32>
    %8 = vector.shape_cast %7 : vector<1x8x32xf32> to vector<8x32xf32>
    %9 = tpu.concatenate %6, %8, %1 in 0 : vector<1x32xf32>, vector<8x32xf32>, vector<7x32xf32> -> vector<16x32xf32>
    %c1 = arith.constant 1 : index
    %10 = memref.load %arg0[%c1] : memref<2xi32, #tpu.memory_space<smem>>
    %11 = arith.index_cast %10 : i32 to index
    %c0_7 = arith.constant 0 : index
    %c0_8 = arith.constant 0 : index
    %12 = vector.load %arg3[%11, %c0_7, %c0_8] : memref<10x1x32xf32, #tpu.memory_space<vmem>>, vector<1x1x32xf32>
    %13 = vector.shape_cast %12 : vector<1x1x32xf32> to vector<1x32xf32>
    %14 = arith.addf %13, %0 : vector<1x32xf32>
    %c1_9 = arith.constant 1 : index
    %c0_10 = arith.constant 0 : index
    %c0_11 = arith.constant 0 : index
    %15 = vector.load %arg2[%c1_9, %c0_10, %c0_11] : memref<2x8x32xf32, #tpu.memory_space<vmem>>, vector<1x8x32xf32>
    %16 = vector.shape_cast %15 : vector<1x8x32xf32> to vector<8x32xf32>
    %17 = tpu.concatenate %14, %16, %1 in 0 : vector<1x32xf32>, vector<8x32xf32>, vector<7x32xf32> -> vector<16x32xf32>
    %18 = tpu.concatenate %9, %17 in 0 : vector<16x32xf32>, vector<16x32xf32> -> vector<32x32xf32>
    %c0_12 = arith.constant 0 : index
    %c0_13 = arith.constant 0 : index
    %19 = vector.load %arg5[%c0_12, %c0_13] : memref<32x96xf32, #tpu.memory_space<vmem>>, vector<32x96xf32>
    %cst_14 = arith.constant dense<0.000000e+00> : vector<32x96xf32>
    %20 = tpu.matmul %18, %19, %cst_14 {dimension_numbers = #tpu.dot_dimension_numbers<[1], [0], [0], [1], [0, 0, 1, 1], [], []>} : vector<32x32xf32>, vector<32x96xf32>, vector<32x96xf32> -> vector<32x96xf32>
    %c0_15 = arith.constant 0 : index
    %c0_16 = arith.constant 0 : index
    %21 = vector.load %arg6[%c0_15, %c0_16] : memref<1x96xf32, #tpu.memory_space<vmem>>, vector<1x96xf32>
    %22 = vector.broadcast %21 : vector<1x96xf32> to vector<32x96xf32>
    %23 = arith.addf %20, %22 : vector<32x96xf32>
    %24 = vector.extract_strided_slice %23 {offsets = [0, 0], sizes = [32, 32], strides = [1, 1]} : vector<32x96xf32> to vector<32x32xf32>
    %cst_17 = arith.constant 2.500000e-01 : f32
    %25 = vector.broadcast %cst_17 : f32 to vector<32x32xf32>
    %26 = arith.mulf %24, %25 : vector<32x32xf32>
    %27 = vector.extract_strided_slice %23 {offsets = [0, 32], sizes = [32, 32], strides = [1, 1]} : vector<32x96xf32> to vector<32x32xf32>
    %28 = vector.extract_strided_slice %23 {offsets = [0, 64], sizes = [32, 32], strides = [1, 1]} : vector<32x96xf32> to vector<32x32xf32>
    %c0_18 = arith.constant 0 : index
    %c0_19 = arith.constant 0 : index
    %29 = vector.load %arg7[%c0_18, %c0_19] : memref<32x32xf32, #tpu.memory_space<vmem>>, vector<32x32xf32>
    %30 = tpu.iota {dimensions = array<i32: 1>} : vector<16x16xi32>
    %c0_20 = arith.constant 0 : index
    %31 = memref.load %arg1[%c0_20] : memref<2xi32, #tpu.memory_space<smem>>
    %32 = vector.broadcast %31 : i32 to vector<16x16xi32>
    %33 = arith.cmpi sge, %30, %32 : vector<16x16xi32>
    %34 = vector.extract_strided_slice %26 {offsets = [0, 0], sizes = [16, 32], strides = [1, 1]} : vector<32x32xf32> to vector<16x32xf32>
    %35 = vector.extract_strided_slice %27 {offsets = [0, 0], sizes = [16, 32], strides = [1, 1]} : vector<32x32xf32> to vector<16x32xf32>
    %36 = vector.extract_strided_slice %28 {offsets = [0, 0], sizes = [16, 32], strides = [1, 1]} : vector<32x32xf32> to vector<16x32xf32>
    %37 = vector.extract_strided_slice %34 {offsets = [0, 0], sizes = [16, 16], strides = [1, 1]} : vector<16x32xf32> to vector<16x16xf32>
    %38 = vector.extract_strided_slice %35 {offsets = [0, 0], sizes = [16, 16], strides = [1, 1]} : vector<16x32xf32> to vector<16x16xf32>
    %39 = vector.extract_strided_slice %36 {offsets = [0, 0], sizes = [16, 16], strides = [1, 1]} : vector<16x32xf32> to vector<16x16xf32>
    %cst_21 = arith.constant dense<0.000000e+00> : vector<16x16xf32>
    %40 = tpu.matmul %37, %38, %cst_21 {dimension_numbers = #tpu.dot_dimension_numbers<[1], [1], [0], [0], [0, 0, 1, 0], [], []>} : vector<16x16xf32>, vector<16x16xf32>, vector<16x16xf32> -> vector<16x16xf32>
    %cst_22 = arith.constant -1.000000e+30 : f32
    %41 = vector.broadcast %cst_22 : f32 to vector<16x16xf32>
    %42 = arith.select %33, %41, %40 : vector<16x16xi1>, vector<16x16xf32>
    %cst_23 = arith.constant dense<0xFF800000> : vector<16xf32>
    %43 = vector.multi_reduction <maximumf>, %42, %cst_23 [1] : vector<16x16xf32> to vector<16xf32>
    %44 = vector.shape_cast %43 : vector<16xf32> to vector<16x1xf32>
    %45 = vector.broadcast %44 : vector<16x1xf32> to vector<16x16xf32>
    %46 = arith.subf %42, %45 : vector<16x16xf32>
    %47 = math.exp %46 : vector<16x16xf32>
    %cst_24 = arith.constant dense<0.000000e+00> : vector<16xf32>
    %48 = vector.multi_reduction <add>, %47, %cst_24 [1] : vector<16x16xf32> to vector<16xf32>
    %49 = vector.shape_cast %48 : vector<16xf32> to vector<16x1xf32>
    %50 = tpu.reciprocal %49 {approx = true} : vector<16x1xf32> -> vector<16x1xf32>
    %51 = vector.broadcast %50 : vector<16x1xf32> to vector<16x16xf32>
    %52 = arith.mulf %47, %51 : vector<16x16xf32>
    %cst_25 = arith.constant dense<0.000000e+00> : vector<16x16xf32>
    %53 = tpu.matmul %52, %39, %cst_25 {dimension_numbers = #tpu.dot_dimension_numbers<[1], [0], [0], [1], [0, 0, 1, 1], [], []>} : vector<16x16xf32>, vector<16x16xf32>, vector<16x16xf32> -> vector<16x16xf32>
    %54 = vector.extract_strided_slice %29 {offsets = [0, 0], sizes = [16, 32], strides = [1, 1]} : vector<32x32xf32> to vector<16x32xf32>
    %cst_26 = arith.constant dense<0.000000e+00> : vector<16x32xf32>
    %55 = tpu.matmul %53, %54, %cst_26 {dimension_numbers = #tpu.dot_dimension_numbers<[1], [0], [0], [1], [0, 0, 1, 1], [], []>} : vector<16x16xf32>, vector<16x32xf32>, vector<16x32xf32> -> vector<16x32xf32>
    %56 = vector.extract_strided_slice %34 {offsets = [0, 16], sizes = [16, 16], strides = [1, 1]} : vector<16x32xf32> to vector<16x16xf32>
    %57 = vector.extract_strided_slice %35 {offsets = [0, 16], sizes = [16, 16], strides = [1, 1]} : vector<16x32xf32> to vector<16x16xf32>
    %58 = vector.extract_strided_slice %36 {offsets = [0, 16], sizes = [16, 16], strides = [1, 1]} : vector<16x32xf32> to vector<16x16xf32>
    %cst_27 = arith.constant dense<0.000000e+00> : vector<16x16xf32>
    %59 = tpu.matmul %56, %57, %cst_27 {dimension_numbers = #tpu.dot_dimension_numbers<[1], [1], [0], [0], [0, 0, 1, 0], [], []>} : vector<16x16xf32>, vector<16x16xf32>, vector<16x16xf32> -> vector<16x16xf32>
    %cst_28 = arith.constant -1.000000e+30 : f32
    %60 = vector.broadcast %cst_28 : f32 to vector<16x16xf32>
    %61 = arith.select %33, %60, %59 : vector<16x16xi1>, vector<16x16xf32>
    %cst_29 = arith.constant dense<0xFF800000> : vector<16xf32>
    %62 = vector.multi_reduction <maximumf>, %61, %cst_29 [1] : vector<16x16xf32> to vector<16xf32>
    %63 = vector.shape_cast %62 : vector<16xf32> to vector<16x1xf32>
    %64 = vector.broadcast %63 : vector<16x1xf32> to vector<16x16xf32>
    %65 = arith.subf %61, %64 : vector<16x16xf32>
    %66 = math.exp %65 : vector<16x16xf32>
    %cst_30 = arith.constant dense<0.000000e+00> : vector<16xf32>
    %67 = vector.multi_reduction <add>, %66, %cst_30 [1] : vector<16x16xf32> to vector<16xf32>
    %68 = vector.shape_cast %67 : vector<16xf32> to vector<16x1xf32>
    %69 = tpu.reciprocal %68 {approx = true} : vector<16x1xf32> -> vector<16x1xf32>
    %70 = vector.broadcast %69 : vector<16x1xf32> to vector<16x16xf32>
    %71 = arith.mulf %66, %70 : vector<16x16xf32>
    %cst_31 = arith.constant dense<0.000000e+00> : vector<16x16xf32>
    %72 = tpu.matmul %71, %58, %cst_31 {dimension_numbers = #tpu.dot_dimension_numbers<[1], [0], [0], [1], [0, 0, 1, 1], [], []>} : vector<16x16xf32>, vector<16x16xf32>, vector<16x16xf32> -> vector<16x16xf32>
    %73 = vector.extract_strided_slice %29 {offsets = [16, 0], sizes = [16, 32], strides = [1, 1]} : vector<32x32xf32> to vector<16x32xf32>
    %cst_32 = arith.constant dense<0.000000e+00> : vector<16x32xf32>
    %74 = tpu.matmul %72, %73, %cst_32 {dimension_numbers = #tpu.dot_dimension_numbers<[1], [0], [0], [1], [0, 0, 1, 1], [], []>} : vector<16x16xf32>, vector<16x32xf32>, vector<16x32xf32> -> vector<16x32xf32>
    %75 = arith.addf %55, %74 : vector<16x32xf32>
    %c1_33 = arith.constant 1 : index
    %76 = memref.load %arg1[%c1_33] : memref<2xi32, #tpu.memory_space<smem>>
    %77 = vector.broadcast %76 : i32 to vector<16x16xi32>
    %78 = arith.cmpi sge, %30, %77 : vector<16x16xi32>
    %79 = vector.extract_strided_slice %26 {offsets = [16, 0], sizes = [16, 32], strides = [1, 1]} : vector<32x32xf32> to vector<16x32xf32>
    %80 = vector.extract_strided_slice %27 {offsets = [16, 0], sizes = [16, 32], strides = [1, 1]} : vector<32x32xf32> to vector<16x32xf32>
    %81 = vector.extract_strided_slice %28 {offsets = [16, 0], sizes = [16, 32], strides = [1, 1]} : vector<32x32xf32> to vector<16x32xf32>
    %82 = vector.extract_strided_slice %79 {offsets = [0, 0], sizes = [16, 16], strides = [1, 1]} : vector<16x32xf32> to vector<16x16xf32>
    %83 = vector.extract_strided_slice %80 {offsets = [0, 0], sizes = [16, 16], strides = [1, 1]} : vector<16x32xf32> to vector<16x16xf32>
    %84 = vector.extract_strided_slice %81 {offsets = [0, 0], sizes = [16, 16], strides = [1, 1]} : vector<16x32xf32> to vector<16x16xf32>
    %cst_34 = arith.constant dense<0.000000e+00> : vector<16x16xf32>
    %85 = tpu.matmul %82, %83, %cst_34 {dimension_numbers = #tpu.dot_dimension_numbers<[1], [1], [0], [0], [0, 0, 1, 0], [], []>} : vector<16x16xf32>, vector<16x16xf32>, vector<16x16xf32> -> vector<16x16xf32>
    %cst_35 = arith.constant -1.000000e+30 : f32
    %86 = vector.broadcast %cst_35 : f32 to vector<16x16xf32>
    %87 = arith.select %78, %86, %85 : vector<16x16xi1>, vector<16x16xf32>
    %cst_36 = arith.constant dense<0xFF800000> : vector<16xf32>
    %88 = vector.multi_reduction <maximumf>, %87, %cst_36 [1] : vector<16x16xf32> to vector<16xf32>
    %89 = vector.shape_cast %88 : vector<16xf32> to vector<16x1xf32>
    %90 = vector.broadcast %89 : vector<16x1xf32> to vector<16x16xf32>
    %91 = arith.subf %87, %90 : vector<16x16xf32>
    %92 = math.exp %91 : vector<16x16xf32>
    %cst_37 = arith.constant dense<0.000000e+00> : vector<16xf32>
    %93 = vector.multi_reduction <add>, %92, %cst_37 [1] : vector<16x16xf32> to vector<16xf32>
    %94 = vector.shape_cast %93 : vector<16xf32> to vector<16x1xf32>
    %95 = tpu.reciprocal %94 {approx = true} : vector<16x1xf32> -> vector<16x1xf32>
    %96 = vector.broadcast %95 : vector<16x1xf32> to vector<16x16xf32>
    %97 = arith.mulf %92, %96 : vector<16x16xf32>
    %cst_38 = arith.constant dense<0.000000e+00> : vector<16x16xf32>
    %98 = tpu.matmul %97, %84, %cst_38 {dimension_numbers = #tpu.dot_dimension_numbers<[1], [0], [0], [1], [0, 0, 1, 1], [], []>} : vector<16x16xf32>, vector<16x16xf32>, vector<16x16xf32> -> vector<16x16xf32>
    %99 = vector.extract_strided_slice %29 {offsets = [0, 0], sizes = [16, 32], strides = [1, 1]} : vector<32x32xf32> to vector<16x32xf32>
    %cst_39 = arith.constant dense<0.000000e+00> : vector<16x32xf32>
    %100 = tpu.matmul %98, %99, %cst_39 {dimension_numbers = #tpu.dot_dimension_numbers<[1], [0], [0], [1], [0, 0, 1, 1], [], []>} : vector<16x16xf32>, vector<16x32xf32>, vector<16x32xf32> -> vector<16x32xf32>
    %101 = vector.extract_strided_slice %79 {offsets = [0, 16], sizes = [16, 16], strides = [1, 1]} : vector<16x32xf32> to vector<16x16xf32>
    %102 = vector.extract_strided_slice %80 {offsets = [0, 16], sizes = [16, 16], strides = [1, 1]} : vector<16x32xf32> to vector<16x16xf32>
    %103 = vector.extract_strided_slice %81 {offsets = [0, 16], sizes = [16, 16], strides = [1, 1]} : vector<16x32xf32> to vector<16x16xf32>
    %cst_40 = arith.constant dense<0.000000e+00> : vector<16x16xf32>
    %104 = tpu.matmul %101, %102, %cst_40 {dimension_numbers = #tpu.dot_dimension_numbers<[1], [1], [0], [0], [0, 0, 1, 0], [], []>} : vector<16x16xf32>, vector<16x16xf32>, vector<16x16xf32> -> vector<16x16xf32>
    %cst_41 = arith.constant -1.000000e+30 : f32
    %105 = vector.broadcast %cst_41 : f32 to vector<16x16xf32>
    %106 = arith.select %78, %105, %104 : vector<16x16xi1>, vector<16x16xf32>
    %cst_42 = arith.constant dense<0xFF800000> : vector<16xf32>
    %107 = vector.multi_reduction <maximumf>, %106, %cst_42 [1] : vector<16x16xf32> to vector<16xf32>
    %108 = vector.shape_cast %107 : vector<16xf32> to vector<16x1xf32>
    %109 = vector.broadcast %108 : vector<16x1xf32> to vector<16x16xf32>
    %110 = arith.subf %106, %109 : vector<16x16xf32>
    %111 = math.exp %110 : vector<16x16xf32>
    %cst_43 = arith.constant dense<0.000000e+00> : vector<16xf32>
    %112 = vector.multi_reduction <add>, %111, %cst_43 [1] : vector<16x16xf32> to vector<16xf32>
    %113 = vector.shape_cast %112 : vector<16xf32> to vector<16x1xf32>
    %114 = tpu.reciprocal %113 {approx = true} : vector<16x1xf32> -> vector<16x1xf32>
    %115 = vector.broadcast %114 : vector<16x1xf32> to vector<16x16xf32>
    %116 = arith.mulf %111, %115 : vector<16x16xf32>
    %cst_44 = arith.constant dense<0.000000e+00> : vector<16x16xf32>
    %117 = tpu.matmul %116, %103, %cst_44 {dimension_numbers = #tpu.dot_dimension_numbers<[1], [0], [0], [1], [0, 0, 1, 1], [], []>} : vector<16x16xf32>, vector<16x16xf32>, vector<16x16xf32> -> vector<16x16xf32>
    %118 = vector.extract_strided_slice %29 {offsets = [16, 0], sizes = [16, 32], strides = [1, 1]} : vector<32x32xf32> to vector<16x32xf32>
    %cst_45 = arith.constant dense<0.000000e+00> : vector<16x32xf32>
    %119 = tpu.matmul %117, %118, %cst_45 {dimension_numbers = #tpu.dot_dimension_numbers<[1], [0], [0], [1], [0, 0, 1, 1], [], []>} : vector<16x16xf32>, vector<16x32xf32>, vector<16x32xf32> -> vector<16x32xf32>
    %120 = arith.addf %100, %119 : vector<16x32xf32>
    %121 = tpu.concatenate %75, %120 in 0 : vector<16x32xf32>, vector<16x32xf32> -> vector<32x32xf32>
    %122 = arith.addf %18, %121 : vector<32x32xf32>
    %c0_46 = arith.constant 0 : index
    %c0_47 = arith.constant 0 : index
    %123 = vector.load %arg8[%c0_46, %c0_47] : memref<1x32xf32, #tpu.memory_space<vmem>>, vector<1x32xf32>
    %124 = vector.broadcast %123 : vector<1x32xf32> to vector<32x32xf32>
    %125 = arith.addf %122, %124 : vector<32x32xf32>
    %c0_48 = arith.constant 0 : index
    %c0_49 = arith.constant 0 : index
    %126 = vector.load %arg13[%c0_48, %c0_49] : memref<1x32xf32, #tpu.memory_space<vmem>>, vector<1x32xf32>
    %c0_50 = arith.constant 0 : index
    %c0_51 = arith.constant 0 : index
    %127 = vector.load %arg14[%c0_50, %c0_51] : memref<1x32xf32, #tpu.memory_space<vmem>>, vector<1x32xf32>
    %cst_52 = arith.constant dense<0.000000e+00> : vector<32xf32>
    %128 = vector.multi_reduction <add>, %125, %cst_52 [1] : vector<32x32xf32> to vector<32xf32>
    %129 = vector.shape_cast %128 : vector<32xf32> to vector<32x1xf32>
    %cst_53 = arith.constant 3.200000e+01 : f32
    %130 = vector.broadcast %cst_53 : f32 to vector<32x1xf32>
    %131 = arith.divf %129, %130 : vector<32x1xf32>
    %132 = vector.broadcast %131 : vector<32x1xf32> to vector<32x32xf32>
    %133 = arith.subf %125, %132 : vector<32x32xf32>
    %134 = arith.mulf %133, %133 : vector<32x32xf32>
    %cst_54 = arith.constant dense<0.000000e+00> : vector<32xf32>
    %135 = vector.multi_reduction <add>, %134, %cst_54 [1] : vector<32x32xf32> to vector<32xf32>
    %136 = vector.shape_cast %135 : vector<32xf32> to vector<32x1xf32>
    %cst_55 = arith.constant 3.200000e+01 : f32
    %137 = vector.broadcast %cst_55 : f32 to vector<32x1xf32>
    %138 = arith.divf %136, %137 : vector<32x1xf32>
    %139 = vector.broadcast %131 : vector<32x1xf32> to vector<32x32xf32>
    %140 = arith.subf %125, %139 : vector<32x32xf32>
    %cst_56 = arith.constant 9.99999974E-6 : f32
    %141 = vector.broadcast %cst_56 : f32 to vector<32x1xf32>
    %142 = arith.addf %138, %141 : vector<32x1xf32>
    %143 = math.rsqrt %142 : vector<32x1xf32>
    %144 = vector.broadcast %143 : vector<32x1xf32> to vector<32x32xf32>
    %145 = arith.mulf %140, %144 : vector<32x32xf32>
    %146 = vector.broadcast %126 : vector<1x32xf32> to vector<32x32xf32>
    %147 = arith.mulf %145, %146 : vector<32x32xf32>
    %148 = vector.broadcast %127 : vector<1x32xf32> to vector<32x32xf32>
    %149 = arith.addf %147, %148 : vector<32x32xf32>
    %150 = arith.truncf %149 : vector<32x32xf32> to vector<32x32xbf16>
    %c0_57 = arith.constant 0 : index
    %c0_58 = arith.constant 0 : index
    %151 = vector.load %arg9[%c0_57, %c0_58] : memref<32x2048xbf16, #tpu.memory_space<vmem>>, vector<32x2048xbf16>
    %cst_59 = arith.constant dense<0.000000e+00> : vector<32x2048xf32>
    %152 = tpu.matmul %150, %151, %cst_59 {dimension_numbers = #tpu.dot_dimension_numbers<[1], [0], [0], [1], [0, 0, 1, 1], [], []>} : vector<32x32xbf16>, vector<32x2048xbf16>, vector<32x2048xf32> -> vector<32x2048xf32>
    %c0_60 = arith.constant 0 : index
    %c0_61 = arith.constant 0 : index
    %153 = vector.load %arg10[%c0_60, %c0_61] : memref<1x2048xf32, #tpu.memory_space<vmem>>, vector<1x2048xf32>
    %154 = vector.broadcast %153 : vector<1x2048xf32> to vector<32x2048xf32>
    %155 = arith.addf %152, %154 : vector<32x2048xf32>
    %cst_62 = arith.constant 0.000000e+00 : f32
    %156 = vector.broadcast %cst_62 : f32 to vector<32x2048xf32>
    %157 = arith.maximumf %155, %156 : vector<32x2048xf32>
    %158 = arith.truncf %157 : vector<32x2048xf32> to vector<32x2048xbf16>
    %c0_63 = arith.constant 0 : index
    %c0_64 = arith.constant 0 : index
    %159 = vector.load %arg11[%c0_63, %c0_64] : memref<2048x32xbf16, #tpu.memory_space<vmem>>, vector<2048x32xbf16>
    %cst_65 = arith.constant dense<0.000000e+00> : vector<32x32xf32>
    %160 = tpu.matmul %158, %159, %cst_65 {dimension_numbers = #tpu.dot_dimension_numbers<[1], [0], [0], [1], [0, 0, 1, 1], [], []>} : vector<32x2048xbf16>, vector<2048x32xbf16>, vector<32x32xf32> -> vector<32x32xf32>
    %c0_66 = arith.constant 0 : index
    %c0_67 = arith.constant 0 : index
    %161 = vector.load %arg12[%c0_66, %c0_67] : memref<1x32xf32, #tpu.memory_space<vmem>>, vector<1x32xf32>
    %162 = vector.broadcast %161 : vector<1x32xf32> to vector<32x32xf32>
    %163 = arith.addf %160, %162 : vector<32x32xf32>
    %164 = arith.addf %149, %163 : vector<32x32xf32>
    %c0_68 = arith.constant 0 : index
    %c0_69 = arith.constant 0 : index
    %165 = vector.load %arg15[%c0_68, %c0_69] : memref<1x32xf32, #tpu.memory_space<vmem>>, vector<1x32xf32>
    %c0_70 = arith.constant 0 : index
    %c0_71 = arith.constant 0 : index
    %166 = vector.load %arg16[%c0_70, %c0_71] : memref<1x32xf32, #tpu.memory_space<vmem>>, vector<1x32xf32>
    %cst_72 = arith.constant dense<0.000000e+00> : vector<32xf32>
    %167 = vector.multi_reduction <add>, %164, %cst_72 [1] : vector<32x32xf32> to vector<32xf32>
    %168 = vector.shape_cast %167 : vector<32xf32> to vector<32x1xf32>
    %cst_73 = arith.constant 3.200000e+01 : f32
    %169 = vector.broadcast %cst_73 : f32 to vector<32x1xf32>
    %170 = arith.divf %168, %169 : vector<32x1xf32>
    %171 = vector.broadcast %170 : vector<32x1xf32> to vector<32x32xf32>
    %172 = arith.subf %164, %171 : vector<32x32xf32>
    %173 = arith.mulf %172, %172 : vector<32x32xf32>
    %cst_74 = arith.constant dense<0.000000e+00> : vector<32xf32>
    %174 = vector.multi_reduction <add>, %173, %cst_74 [1] : vector<32x32xf32> to vector<32xf32>
    %175 = vector.shape_cast %174 : vector<32xf32> to vector<32x1xf32>
    %cst_75 = arith.constant 3.200000e+01 : f32
    %176 = vector.broadcast %cst_75 : f32 to vector<32x1xf32>
    %177 = arith.divf %175, %176 : vector<32x1xf32>
    %178 = vector.broadcast %170 : vector<32x1xf32> to vector<32x32xf32>
    %179 = arith.subf %164, %178 : vector<32x32xf32>
    %cst_76 = arith.constant 9.99999974E-6 : f32
    %180 = vector.broadcast %cst_76 : f32 to vector<32x1xf32>
    %181 = arith.addf %177, %180 : vector<32x1xf32>
    %182 = math.rsqrt %181 : vector<32x1xf32>
    %183 = vector.broadcast %182 : vector<32x1xf32> to vector<32x32xf32>
    %184 = arith.mulf %179, %183 : vector<32x32xf32>
    %185 = vector.broadcast %165 : vector<1x32xf32> to vector<32x32xf32>
    %186 = arith.mulf %184, %185 : vector<32x32xf32>
    %187 = vector.broadcast %166 : vector<1x32xf32> to vector<32x32xf32>
    %188 = arith.addf %186, %187 : vector<32x32xf32>
    %c0_77 = arith.constant 0 : index
    %c0_78 = arith.constant 0 : index
    %189 = vector.load %arg19[%c0_77, %c0_78] : memref<32x32xf32, #tpu.memory_space<vmem>>, vector<32x32xf32>
    tpu.vector_store %arg19[%c0_77, %c0_78], %188 {strides = array<i32>} : memref<32x32xf32, #tpu.memory_space<vmem>>, vector<32x32xf32>,
    %190 = vector.extract_strided_slice %188 {offsets = [0, 0], sizes = [1, 32], strides = [1, 1]} : vector<32x32xf32> to vector<1x32xf32>
    %191 = vector.extract_strided_slice %188 {offsets = [16, 0], sizes = [1, 32], strides = [1, 1]} : vector<32x32xf32> to vector<1x32xf32>
    %192 = tpu.concatenate %190, %191 in 0 : vector<1x32xf32>, vector<1x32xf32> -> vector<2x32xf32>
    %c0_79 = arith.constant 0 : index
    %c0_80 = arith.constant 0 : index
    %193 = vector.load %arg17[%c0_79, %c0_80] : memref<1x32xf32, #tpu.memory_space<vmem>>, vector<1x32xf32>
    %194 = vector.broadcast %193 : vector<1x32xf32> to vector<2x32xf32>
    %195 = arith.mulf %192, %194 : vector<2x32xf32>
    %cst_81 = arith.constant dense<0.000000e+00> : vector<2xf32>
    %196 = vector.multi_reduction <add>, %195, %cst_81 [1] : vector<2x32xf32> to vector<2xf32>
    %197 = vector.shape_cast %196 : vector<2xf32> to vector<2x1xf32>
    %c0_82 = arith.constant 0 : index
    %c0_83 = arith.constant 0 : index
    %198 = vector.load %arg18[%c0_82, %c0_83] : memref<1x1xf32, #tpu.memory_space<vmem>>, vector<1x1xf32>
    %199 = vector.broadcast %198 : vector<1x1xf32> to vector<2x1xf32>
    %200 = arith.addf %197, %199 : vector<2x1xf32>
    %c0_84 = arith.constant 0 : index
    %c0_85 = arith.constant 0 : index
    %201 = vector.load %arg20[%c0_84, %c0_85] : memref<2x1xf32, #tpu.memory_space<vmem>>, vector<2x1xf32>
    tpu.vector_store %arg20[%c0_84, %c0_85], %200 {strides = array<i32>} : memref<2x1xf32, #tpu.memory_space<vmem>>, vector<2x1xf32>,
    return
  }
}

</mosaic_0001>

<llo_original>
// kernel: sentence_based_model_g.1
$region0: #{sentence_based_model_g.1}
  #allocation0 [shape = 'u32[]', space=smem, size = 0x4, offset = 0x4, fixed_abs, tag = 'smem constant byte address 0x4 - core index']
  #allocation1 [shape = 'u32[144,128]{1,0:T(1,128)}', space=vmem, size = 0x12000, scoped, tag = 'internal scratch']
  #allocation2 [shape = 'f32[1,1]{1,0:T(1,128)S(1)}', space=vmem, size = 0x200, scoped, tag = 'scoped memory for sentence_based_model_g.1']
  %s0 = inlined_call_operand.vmem [shape: s32[2], index: 0, kind: input, shape index: {}]
  %s1 = inlined_call_operand.vmem [shape: s32[2], index: 1, kind: input, shape index: {}]
  %s2 = inlined_call_operand.vmem [shape: f32[2,8,32], index: 2, kind: input, shape index: {}]
  %s3 = inlined_call_operand.vmem [shape: f32[10,1,32], index: 3, kind: input, shape index: {}]
  %s4 = inlined_call_operand.vmem [shape: f32[1,32], index: 4, kind: input, shape index: {}]
  %s5 = inlined_call_operand.vmem [shape: f32[32,96], index: 5, kind: input, shape index: {}]
  %s6 = inlined_call_operand.vmem [shape: f32[1,96], index: 6, kind: input, shape index: {}]
  %s7 = inlined_call_operand.vmem [shape: f32[32,32], index: 7, kind: input, shape index: {}]
  %s8 = inlined_call_operand.vmem [shape: f32[1,32], index: 8, kind: input, shape index: {}]
  %s9 = inlined_call_operand.vmem [shape: bf16[32,2048], index: 9, kind: input, shape index: {}]
  %s10 = inlined_call_operand.vmem [shape: f32[1,2048], index: 10, kind: input, shape index: {}]
  %s11 = inlined_call_operand.hbm [shape: bf16[2048,32], index: 11, kind: input, shape index: {}]
  %s12 = inlined_call_operand.vmem [shape: f32[1,32], index: 12, kind: input, shape index: {}]
  %s13 = inlined_call_operand.vmem [shape: f32[1,32], index: 13, kind: input, shape index: {}, may-alias: {13,15}]
  %s14 = inlined_call_operand.vmem [shape: f32[1,32], index: 14, kind: input, shape index: {}, may-alias: {14,16}]
  %s15 = inlined_call_operand.vmem [shape: f32[1,32], index: 15, kind: input, shape index: {}, may-alias: {13,15}]
  %s16 = inlined_call_operand.vmem [shape: f32[1,32], index: 16, kind: input, shape index: {}, may-alias: {14,16}]
  %s17 = inlined_call_operand.vmem [shape: f32[1,32], index: 17, kind: input, shape index: {}]
  %s18 = inlined_call_operand.<no memory space> [shape: f32[1,1], index: 18, kind: input, shape index: {}]
  %s19 = inlined_call_operand.vmem [shape: f32[32,32], index: 19, kind: output, shape index: {0}]
  %s20 = inlined_call_operand.vmem [shape: f32[2,1], index: 20, kind: output, shape index: {1}]
  %21 = xla_tuple %s19, %s20
  %s22 = sld [smem:[#allocation0]]
  $region106: #{sentence_based_model_g.1} parent=0
    _
  %s24 = ssub.s32 1, %s22
  %s25 = scalar_select 0, %s24, %s22
  %v26 = vstv %s18
  %27 = vst [vmem:[#allocation2] sm:$0x1] %v26
  $region1: #{sentence_based_model_g.1} parent=0
    #allocation3 [shape = 'u8[512]{0}', space=smem, size = 0x200, scoped, tag = 'input window, operand 0, single buffered']
    #allocation4 [shape = 's32[1]{0}', space=sflag, size = 0x4, scoped, tag = 'scoped memory for sentence_based_model_g.1']
    #allocation5 [shape = 's32[1]{0}', space=sflag, size = 0x4, scoped, tag = 'scoped memory for sentence_based_model_g.1']
    #allocation6 [shape = 'u8[512]{0}', space=smem, size = 0x200, scoped, tag = 'input window, operand 1, single buffered']
    #allocation7 [shape = 's32[1]{0}', space=sflag, size = 0x4, scoped, tag = 'scoped memory for sentence_based_model_g.1']
    #allocation8 [shape = 'u8[524288]{0}', space=vmem, size = 0x80000, scoped, tag = 'input window, operand 11, single buffered']
    %28 = vsyncpa [#allocation5], 0
    %29 = vsyncpa [#allocation7], 0
    %30 = vsyncpa [#allocation4], 0
    // Predicated region
    $region2: #{sentence_based_model_g.1} parent=1 // pred_check
      _
    $region3: #{sentence_based_model_g.1} parent=1 // pred_check_branch
      %32 = sbr.rel (0) target = $region5
    $region4: #{sentence_based_model_g.1} parent=1 // pred_region
      %s34 = ssub.s32 16, 16
      %35 = vsyncadd [#allocation5], %s34
      %s37 = sshll.u32 %s0, 4
      %s38 = int_to_ptr.vmem [resolvable:$true] %s37
      %40 = dma.vmem_to_smem %s38, 16, [#allocation3], [#allocation5]
    $region5: #{sentence_based_model_g.1} parent=1 // pred_fallthru
      _
    // Predicated region
    $region6: #{sentence_based_model_g.1} parent=1 // pred_check
      _
    $region7: #{sentence_based_model_g.1} parent=1 // pred_check_branch
      %42 = sbr.rel (0) target = $region9
    $region8: #{sentence_based_model_g.1} parent=1 // pred_region
      %s44 = ssub.s32 16, 16
      %45 = vsyncadd [#allocation7], %s44
      %s47 = sshll.u32 %s1, 4
      %s48 = int_to_ptr.vmem [resolvable:$true] %s47
      %50 = dma.vmem_to_smem %s48, 16, [#allocation6], [#allocation7]
    $region9: #{sentence_based_model_g.1} parent=1 // pred_fallthru
      _
    // Predicated region
    $region10: #{sentence_based_model_g.1} parent=1 // pred_check
      _
    $region11: #{sentence_based_model_g.1} parent=1 // pred_check_branch
      %52 = sbr.rel (0) target = $region13
    $region12: #{sentence_based_model_g.1} parent=1 // pred_region
      _
    $region13: #{sentence_based_model_g.1} parent=1 // pred_fallthru
      _
    // Predicated region
    $region14: #{sentence_based_model_g.1} parent=1 // pred_check
      _
    $region15: #{sentence_based_model_g.1} parent=1 // pred_check_branch
      %54 = sbr.rel (0) target = $region17
    $region16: #{sentence_based_model_g.1} parent=1 // pred_region
      _
    $region17: #{sentence_based_model_g.1} parent=1 // pred_fallthru
      _
    // Predicated region
    $region18: #{sentence_based_model_g.1} parent=1 // pred_check
      _
    $region19: #{sentence_based_model_g.1} parent=1 // pred_check_branch
      %56 = sbr.rel (0) target = $region21
    $region20: #{sentence_based_model_g.1} parent=1 // pred_region
      _
    $region21: #{sentence_based_model_g.1} parent=1 // pred_fallthru
      _
    // Predicated region
    $region22: #{sentence_based_model_g.1} parent=1 // pred_check
      _
    $region23: #{sentence_based_model_g.1} parent=1 // pred_check_branch
      %58 = sbr.rel (0) target = $region25
    $region24: #{sentence_based_model_g.1} parent=1 // pred_region
      _
    $region25: #{sentence_based_model_g.1} parent=1 // pred_fallthru
      _
    // Predicated region
    $region26: #{sentence_based_model_g.1} parent=1 // pred_check
      _
    $region27: #{sentence_based_model_g.1} parent=1 // pred_check_branch
      %60 = sbr.rel (0) target = $region29
    $region28: #{sentence_based_model_g.1} parent=1 // pred_region
      _
    $region29: #{sentence_based_model_g.1} parent=1 // pred_fallthru
      _
    // Predicated region
    $region30: #{sentence_based_model_g.1} parent=1 // pred_check
      _
    $region31: #{sentence_based_model_g.1} parent=1 // pred_check_branch
      %62 = sbr.rel (0) target = $region33
    $region32: #{sentence_based_model_g.1} parent=1 // pred_region
      _
    $region33: #{sentence_based_model_g.1} parent=1 // pred_fallthru
      _
    // Predicated region
    $region34: #{sentence_based_model_g.1} parent=1 // pred_check
      _
    $region35: #{sentence_based_model_g.1} parent=1 // pred_check_branch
      %64 = sbr.rel (0) target = $region37
    $region36: #{sentence_based_model_g.1} parent=1 // pred_region
      _
    $region37: #{sentence_based_model_g.1} parent=1 // pred_fallthru
      _
    // Predicated region
    $region38: #{sentence_based_model_g.1} parent=1 // pred_check
      _
    $region39: #{sentence_based_model_g.1} parent=1 // pred_check_branch
      %66 = sbr.rel (0) target = $region41
    $region40: #{sentence_based_model_g.1} parent=1 // pred_region
      _
    $region41: #{sentence_based_model_g.1} parent=1 // pred_fallthru
      _
    // Predicated region
    $region42: #{sentence_based_model_g.1} parent=1 // pred_check
      _
    $region43: #{sentence_based_model_g.1} parent=1 // pred_check_branch
      %68 = sbr.rel (0) target = $region45
    $region44: #{sentence_based_model_g.1} parent=1 // pred_region
      _
    $region45: #{sentence_based_model_g.1} parent=1 // pred_fallthru
      _
    // Predicated region
    $region46: #{sentence_based_model_g.1} parent=1 // pred_check
      _
    $region47: #{sentence_based_model_g.1} parent=1 // pred_check_branch
      %70 = sbr.rel (0) target = $region49
    $region48: #{sentence_based_model_g.1} parent=1 // pred_region
      %s72 = ssub.s32 16384, 16384
      %73 = vsyncadd [#allocation4], %s72
      %s74 = sshll.u32 [#allocation8], 4
      %s75 = int_to_ptr.vmem [resolvable:$true] %s74
      %80 = dma.hbm_to_vmem [thread:$0]  %s11, 16384, %s75, [#allocation4], 64, 64, 4
    $region49: #{sentence_based_model_g.1} parent=1 // pred_fallthru
      _
    // Predicated region
    $region50: #{sentence_based_model_g.1} parent=1 // pred_check
      _
    $region51: #{sentence_based_model_g.1} parent=1 // pred_check_branch
      %82 = sbr.rel (0) target = $region53
    $region52: #{sentence_based_model_g.1} parent=1 // pred_region
      _
    $region53: #{sentence_based_model_g.1} parent=1 // pred_fallthru
      _
    // Predicated region
    $region54: #{sentence_based_model_g.1} parent=1 // pred_check
      _
    $region55: #{sentence_based_model_g.1} parent=1 // pred_check_branch
      %84 = sbr.rel (0) target = $region57
    $region56: #{sentence_based_model_g.1} parent=1 // pred_region
      _
    $region57: #{sentence_based_model_g.1} parent=1 // pred_fallthru
      _
    // Predicated region
    $region58: #{sentence_based_model_g.1} parent=1 // pred_check
      _
    $region59: #{sentence_based_model_g.1} parent=1 // pred_check_branch
      %86 = sbr.rel (0) target = $region61
    $region60: #{sentence_based_model_g.1} parent=1 // pred_region
      _
    $region61: #{sentence_based_model_g.1} parent=1 // pred_fallthru
      _
    // Predicated region
    $region62: #{sentence_based_model_g.1} parent=1 // pred_check
      _
    $region63: #{sentence_based_model_g.1} parent=1 // pred_check_branch
      %88 = sbr.rel (0) target = $region65
    $region64: #{sentence_based_model_g.1} parent=1 // pred_region
      _
    $region65: #{sentence_based_model_g.1} parent=1 // pred_fallthru
      _
    // Predicated region
    $region66: #{sentence_based_model_g.1} parent=1 // pred_check
      _
    $region67: #{sentence_based_model_g.1} parent=1 // pred_check_branch
      %90 = sbr.rel (0) target = $region69
    $region68: #{sentence_based_model_g.1} parent=1 // pred_region
      _
    $region69: #{sentence_based_model_g.1} parent=1 // pred_fallthru
      _
    // Predicated region
    $region70: #{sentence_based_model_g.1} parent=1 // pred_check
      _
    $region71: #{sentence_based_model_g.1} parent=1 // pred_check_branch
      %92 = sbr.rel (0) target = $region73
    $region72: #{sentence_based_model_g.1} parent=1 // pred_region
      _
    $region73: #{sentence_based_model_g.1} parent=1 // pred_fallthru
      _
    // Predicated region
    $region74: #{sentence_based_model_g.1} parent=1 // pred_check
      _
    $region75: #{sentence_based_model_g.1} parent=1 // pred_check_branch
      %94 = sbr.rel (0) target = $region77
    $region76: #{sentence_based_model_g.1} parent=1 // pred_region
      _
    $region77: #{sentence_based_model_g.1} parent=1 // pred_fallthru
      _
    // Predicated region
    $region78: #{sentence_based_model_g.1} parent=1 // pred_check
      _
    $region79: #{sentence_based_model_g.1} parent=1 // pred_check_branch
      %96 = sbr.rel (0) target = $region81
    $region80: #{sentence_based_model_g.1} parent=1 // pred_region
      %97 = dma.done [#allocation5], 16
    $region81: #{sentence_based_model_g.1} parent=1 // pred_fallthru
      _
    // Predicated region
    $region82: #{sentence_based_model_g.1} parent=1 // pred_check
      _
    $region83: #{sentence_based_model_g.1} parent=1 // pred_check_branch
      %99 = sbr.rel (0) target = $region85
    $region84: #{sentence_based_model_g.1} parent=1 // pred_region
      %100 = dma.done [#allocation7], 16
    $region85: #{sentence_based_model_g.1} parent=1 // pred_fallthru
      _
    // Predicated region
    $region86: #{sentence_based_model_g.1} parent=1 // pred_check
      _
    $region87: #{sentence_based_model_g.1} parent=1 // pred_check_branch
      %102 = sbr.rel (0) target = $region89
    $region88: #{sentence_based_model_g.1} parent=1 // pred_region
      %103 = dma.done [#allocation4], 16384
    $region89: #{sentence_based_model_g.1} parent=1 // pred_fallthru
      _
    %104 = sfence
    %v106 = vld [vmem:[%s4] sm:$0x1]
    %s107 = sld [smem:[#allocation3]]
    %s108 = scalar_lea.vmem %s3, %s107
    %v109 = vld [vmem:[%s108] sm:$0x1]
    %v110 = vadd.f32 %v109, %v106
    %v111 = vld [vmem:[%s2] sm:$0xff]
    %v113 = vrot.slane %v111, 7
    %vm115 = vcmask 1040384
    %v116 = vsel %vm115, %v110, %v113
    %v117 = vsel %vm115, %v113, 0.0
    %s118 = sld [smem:[#allocation3 + $0x1]]
    %s119 = scalar_lea.vmem %s3, %s118
    %v120 = vld [vmem:[%s119] sm:$0x1]
    %v121 = vadd.f32 %v120, %v106
    %s122 = scalar_lea.vmem %s2, 8
    %v123 = vld [vmem:[%s122] sm:$0xff]
    %v125 = vrot.slane %v123, 7
    %v127 = vsel %vm115, %v121, %v125
    %v128 = vsel %vm115, %v125, 0.0
    %v129 = vld [vmem:[%s5] sm:$0xff]
    %v130 = vld [vmem:[%s5 + $0x8] sm:$0xff]
    %v131 = vld [vmem:[%s5 + $0x10] sm:$0xff]
    %v132 = vld [vmem:[%s5 + $0x18] sm:$0xff]
    %v133 = vld [vmem:[%s6] sm:$0x1]
    %v135 = vlaneseq
    %v136 = vshrl.u32 %v135, 7
    %v137 = vsub.s32 0, %v136
    %v138 = vrot.slane %v133, %v137
    %vm140 = vcmask 261120
    %v142 = vsel %vm140, %v116, 0
    %v145 = vsel %vm140, %v117, 0
    %v148 = vsel %vm140, %v127, 0
    %v151 = vsel %vm140, %v128, 0
    %153 = vmatprep.subr.mxu0 0.0
    %154 = vmatpush1.msra.mxu0 %v129
    %155 = vmatprep.subr.mxu0 0.0
    %156 = vmatpush1.msra.mxu0 %v130
    %157 = vmatprep.subr.mxu0 0.0
    %158 = vmatpush1.msra.mxu0 %v131
    %159 = vmatprep.subr.mxu0 0.0
    %160 = vmatpush1.msra.mxu0 %v132
    %161 = vmatprep.subr.mxu0 0.0
    %162 = vmatpush1.msra.mxu0 0.0
    %163 = vmatprep.subr.mxu0 0.0
    %164 = vmatpush1.msra.mxu0 0.0
    %165 = vmatprep.subr.mxu0 0.0
    %166 = vmatpush1.msra.mxu0 0.0
    %167 = vmatprep.subr.mxu0 0.0
    %168 = vmatpush1.msra.mxu0 0.0
    %169 = vmatprep.subr.mxu0 0.0
    %170 = vmatpush1.msra.mxu0 0.0
    %171 = vmatprep.subr.mxu0 0.0
    %172 = vmatpush1.msra.mxu0 0.0
    %173 = vmatprep.subr.mxu0 0.0
    %174 = vmatpush1.msra.mxu0 0.0
    %175 = vmatprep.subr.mxu0 0.0
    %176 = vmatpush1.msra.mxu0 0.0
    %177 = vmatprep.subr.mxu0 0.0
    %178 = vmatpush1.msra.mxu0 0.0
    %179 = vmatprep.subr.mxu0 0.0
    %180 = vmatpush1.msra.mxu0 0.0
    %181 = vmatprep.subr.mxu0 0.0
    %182 = vmatpush1.msra.mxu0 0.0
    %183 = vmatprep.subr.mxu0 0.0
    %184 = vmatpush1.msra.mxu0 0.0
    %185 = vmatprep.subr.mxu0 0.0
    %186 = vmatpush1.msra.mxu0 0.0
    %187 = vmatprep.subr.mxu0 0.0
    %188 = vmatpush1.msra.mxu0 0.0
    %189 = vmatprep.subr.mxu0 0.0
    %190 = vmatpush1.msra.mxu0 0.0
    %191 = vmatprep.subr.mxu0 0.0
    %192 = vmatpush1.msra.mxu0 0.0
    %193 = vmatprep.subr.mxu0 0.0
    %194 = vmatpush1.msra.mxu0 0.0
    %195 = vmatprep.subr.mxu0 0.0
    %196 = vmatpush1.msra.mxu0 0.0
    %197 = vmatprep.subr.mxu0 0.0
    %198 = vmatpush1.msra.mxu0 0.0
    %199 = vmatprep.subr.mxu0 0.0
    %200 = vmatpush1.msra.mxu0 0.0
    %201 = vmatprep.subr.mxu0 0.0
    %202 = vmatpush1.msra.mxu0 0.0
    %203 = vmatprep.subr.mxu0 0.0
    %204 = vmatpush1.msra.mxu0 0.0
    %205 = vmatprep.subr.mxu0 0.0
    %206 = vmatpush1.msra.mxu0 0.0
    %207 = vmatprep.subr.mxu0 0.0
    %208 = vmatpush1.msra.mxu0 0.0
    %209 = vmatprep.subr.mxu0 0.0
    %210 = vmatpush1.msra.mxu0 0.0
    %211 = vmatprep.subr.mxu0 0.0
    %212 = vmatpush1.msra.mxu0 0.0
    %213 = vmatprep.subr.mxu0 0.0
    %214 = vmatpush1.msra.mxu0 0.0
    %215 = vmatprep.subr.mxu0 0.0
    %216 = vmatpush1.msra.mxu0 0.0
    %217 = vmatprep.mubr.f32.mxu0 0.0
    %218 = vmatmul.mubr.f32.gmra.mrb[0].mxu0 %v142
    %v219 = vpop.f32.mrb[0].mxu0
    %v220 = vadd.f32 %v138, %v219
    %v221 = vpop.f32.mrb[0].mxu0
    %222 = vmatprep.mubr.f32.mxu0 0.0
    %223 = vmatmul.mubr.f32.gmra.mrb[0].mxu0 %v145
    %v224 = vpop.f32.mrb[0].mxu0
    %v225 = vadd.f32 %v138, %v224
    %v226 = vpop.f32.mrb[0].mxu0
    %227 = vmatprep.mubr.f32.mxu0 0.0
    %228 = vmatmul.mubr.f32.gmra.mrb[0].mxu0 %v148
    %v229 = vpop.f32.mrb[0].mxu0
    %v230 = vadd.f32 %v138, %v229
    %v231 = vpop.f32.mrb[0].mxu0
    %232 = vmatprep.mubr.f32.mxu0 0.0
    %233 = vmatmul.mubr.f32.gmra.mrb[0].mxu0 %v151
    %v234 = vpop.f32.mrb[0].mxu0
    %v235 = vadd.f32 %v138, %v234
    %v236 = vpop.f32.mrb[0].mxu0
    %237 = vdwg.mxu0
    %v238 = vmul.f32 %v220, 0.25
    %v239 = vmul.f32 %v225, 0.25
    %v240 = vmul.f32 %v230, 0.25
    %v241 = vmul.f32 %v235, 0.25
    %v242 = vld [vmem:[%s7] sm:$0xff]
    %v243 = vld [vmem:[%s7 + $0x8] sm:$0xff]
    %v244 = vld [vmem:[%s7 + $0x10] sm:$0xff]
    %v245 = vld [vmem:[%s7 + $0x18] sm:$0xff]
    %v246 = vlaneseq
    %v247 = vand.u32 %v246, 127
    %s248 = sld [smem:[#allocation6]]
    %v249 = vstv %s248
    %vm250 = vcmp.ge.s32.totalorder %v247, %v249
    %253 = vrot.lane.b32.xlu0 %v220, 96
    %v254 = vpop.permute.xlu0 %253
    %255 = vrot.lane.b32.xlu0 %v225, 96
    %v256 = vpop.permute.xlu0 %255
    %vm257 = vcmask 130048
    %v259 = vsel %vm257, %v238, 0
    %v262 = vsel %vm257, %v239, 0
    %v264 = vsel %vm257, %v254, 0
    %v266 = vsel %vm257, %v256, 0
    %268 = vmatprep.subr.mxu0 0.0
    %269 = vmatpush1.xpose.msra.mxu0 %v264
    %270 = vmatprep.subr.mxu0 0.0
    %271 = vmatpush1.xpose.msra.mxu0 %v266
    %272 = vmatprep.subr.mxu0 0.0
    %273 = vmatpush1.xpose.msra.mxu0 0.0
    %274 = vmatprep.subr.mxu0 0.0
    %275 = vmatpush1.xpose.msra.mxu0 0.0
    %276 = vmatprep.subr.mxu0 0.0
    %277 = vmatpush1.xpose.msra.mxu0 0.0
    %278 = vmatprep.subr.mxu0 0.0
    %279 = vmatpush1.xpose.msra.mxu0 0.0
    %280 = vmatprep.subr.mxu0 0.0
    %281 = vmatpush1.xpose.msra.mxu0 0.0
    %282 = vmatprep.subr.mxu0 0.0
    %283 = vmatpush1.xpose.msra.mxu0 0.0
    %284 = vmatprep.subr.mxu0 0.0
    %285 = vmatpush1.xpose.msra.mxu0 0.0
    %286 = vmatprep.subr.mxu0 0.0
    %287 = vmatpush1.xpose.msra.mxu0 0.0
    %288 = vmatprep.subr.mxu0 0.0
    %289 = vmatpush1.xpose.msra.mxu0 0.0
    %290 = vmatprep.subr.mxu0 0.0
    %291 = vmatpush1.xpose.msra.mxu0 0.0
    %292 = vmatprep.subr.mxu0 0.0
    %293 = vmatpush1.xpose.msra.mxu0 0.0
    %294 = vmatprep.subr.mxu0 0.0
    %295 = vmatpush1.xpose.msra.mxu0 0.0
    %296 = vmatprep.subr.mxu0 0.0
    %297 = vmatpush1.xpose.msra.mxu0 0.0
    %298 = vmatprep.subr.mxu0 0.0
    %299 = vmatpush1.xpose.msra.mxu0 0.0
    %300 = vmatprep.subr.mxu0 0.0
    %301 = vmatpush1.xpose.msra.mxu0 0.0
    %302 = vmatprep.subr.mxu0 0.0
    %303 = vmatpush1.xpose.msra.mxu0 0.0
    %304 = vmatprep.subr.mxu0 0.0
    %305 = vmatpush1.xpose.msra.mxu0 0.0
    %306 = vmatprep.subr.mxu0 0.0
    %307 = vmatpush1.xpose.msra.mxu0 0.0
    %308 = vmatprep.subr.mxu0 0.0
    %309 = vmatpush1.xpose.msra.mxu0 0.0
    %310 = vmatprep.subr.mxu0 0.0
    %311 = vmatpush1.xpose.msra.mxu0 0.0
    %312 = vmatprep.subr.mxu0 0.0
    %313 = vmatpush1.xpose.msra.mxu0 0.0
    %314 = vmatprep.subr.mxu0 0.0
    %315 = vmatpush1.xpose.msra.mxu0 0.0
    %316 = vmatprep.subr.mxu0 0.0
    %317 = vmatpush1.xpose.msra.mxu0 0.0
    %318 = vmatprep.subr.mxu0 0.0
    %319 = vmatpush1.xpose.msra.mxu0 0.0
    %320 = vmatprep.subr.mxu0 0.0
    %321 = vmatpush1.xpose.msra.mxu0 0.0
    %322 = vmatprep.subr.mxu0 0.0
    %323 = vmatpush1.xpose.msra.mxu0 0.0
    %324 = vmatprep.subr.mxu0 0.0
    %325 = vmatpush1.xpose.msra.mxu0 0.0
    %326 = vmatprep.subr.mxu0 0.0
    %327 = vmatpush1.xpose.msra.mxu0 0.0
    %328 = vmatprep.subr.mxu0 0.0
    %329 = vmatpush1.xpose.msra.mxu0 0.0
    %330 = vmatprep.subr.mxu0 0.0
    %331 = vmatpush1.xpose.msra.mxu0 0.0
    %332 = vmatprep.mubr.f32.mxu0 0.0
    %333 = vmatmul.mubr.f32.gmra.mrb[0].mxu0 %v259
    %v334 = vpop.f32.mrb[0].mxu0
    %v335 = vadd.f32 0.0, %v334
    %v336 = vpop.f32.mrb[0].mxu0
    %337 = vmatprep.mubr.f32.mxu0 0.0
    %338 = vmatmul.mubr.f32.gmra.mrb[0].mxu0 %v262
    %v339 = vpop.f32.mrb[0].mxu0
    %v340 = vadd.f32 0.0, %v339
    %v341 = vpop.f32.mrb[0].mxu0
    %342 = vdwg.mxu0
    %v343 = vsel %vm250, -1e+30, %v335
    %v344 = vsel %vm250, -1e+30, %v340
    %v345 = vsel %vm257, %v343, -inf
    %346 = vmax.xlane.f32.xlu0 %v345
    %v347 = vpop.xlane.xlu0 %346
    %v348 = vsel %vm257, %v344, -inf
    %349 = vmax.xlane.f32.xlu0 %v348
    %v350 = vpop.xlane.xlu0 %349
    %v351 = vsub.f32 %v343, %v347
    %v352 = vsub.f32 %v344, %v350
    %v353 = vmul.f32 %v351, 1.442695
    %v354 = vpow.pop %v353
    %v355 = vmul.f32 %v352, 1.442695
    %v356 = vpow.pop %v355
    %v357 = vsel %vm257, %v354, 0.0
    %358 = vadd.xlane.f32.xlu0 %v357
    %v359 = vpop.xlane.xlu0 %358
    %v360 = vsel %vm257, %v356, 0.0
    %361 = vadd.xlane.f32.xlu0 %v360
    %v362 = vpop.xlane.xlu0 %361
    %v363 = vrcp.pop %v359
    %v364 = vrcp.pop %v362
    %v365 = vmul.f32 %v354, %v363
    %v366 = vmul.f32 %v356, %v364
    %367 = vrot.lane.b32.xlu0 %v220, 64
    %v368 = vpop.permute.xlu0 %367
    %369 = vrot.lane.b32.xlu0 %v225, 64
    %v370 = vpop.permute.xlu0 %369
    %v374 = vsel %vm257, %v365, 0
    %v377 = vsel %vm257, %v366, 0
    %379 = vmatprep.subr.mxu0 0.0
    %380 = vmatpush1.msra.mxu0 %v368
    %381 = vmatprep.subr.mxu0 0.0
    %382 = vmatpush1.msra.mxu0 %v370
    %383 = vmatprep.subr.mxu0 0.0
    %384 = vmatpush1.msra.mxu0 0.0
    %385 = vmatprep.subr.mxu0 0.0
    %386 = vmatpush1.msra.mxu0 0.0
    %387 = vmatprep.subr.mxu0 0.0
    %388 = vmatpush1.msra.mxu0 0.0
    %389 = vmatprep.subr.mxu0 0.0
    %390 = vmatpush1.msra.mxu0 0.0
    %391 = vmatprep.subr.mxu0 0.0
    %392 = vmatpush1.msra.mxu0 0.0
    %393 = vmatprep.subr.mxu0 0.0
    %394 = vmatpush1.msra.mxu0 0.0
    %395 = vmatprep.subr.mxu0 0.0
    %396 = vmatpush1.msra.mxu0 0.0
    %397 = vmatprep.subr.mxu0 0.0
    %398 = vmatpush1.msra.mxu0 0.0
    %399 = vmatprep.subr.mxu0 0.0
    %400 = vmatpush1.msra.mxu0 0.0
    %401 = vmatprep.subr.mxu0 0.0
    %402 = vmatpush1.msra.mxu0 0.0
    %403 = vmatprep.subr.mxu0 0.0
    %404 = vmatpush1.msra.mxu0 0.0
    %405 = vmatprep.subr.mxu0 0.0
    %406 = vmatpush1.msra.mxu0 0.0
    %407 = vmatprep.subr.mxu0 0.0
    %408 = vmatpush1.msra.mxu0 0.0
    %409 = vmatprep.subr.mxu0 0.0
    %410 = vmatpush1.msra.mxu0 0.0
    %411 = vmatprep.subr.mxu0 0.0
    %412 = vmatpush1.msra.mxu0 0.0
    %413 = vmatprep.subr.mxu0 0.0
    %414 = vmatpush1.msra.mxu0 0.0
    %415 = vmatprep.subr.mxu0 0.0
    %416 = vmatpush1.msra.mxu0 0.0
    %417 = vmatprep.subr.mxu0 0.0
    %418 = vmatpush1.msra.mxu0 0.0
    %419 = vmatprep.subr.mxu0 0.0
    %420 = vmatpush1.msra.mxu0 0.0
    %421 = vmatprep.subr.mxu0 0.0
    %422 = vmatpush1.msra.mxu0 0.0
    %423 = vmatprep.subr.mxu0 0.0
    %424 = vmatpush1.msra.mxu0 0.0
    %425 = vmatprep.subr.mxu0 0.0
    %426 = vmatpush1.msra.mxu0 0.0
    %427 = vmatprep.subr.mxu0 0.0
    %428 = vmatpush1.msra.mxu0 0.0
    %429 = vmatprep.subr.mxu0 0.0
    %430 = vmatpush1.msra.mxu0 0.0
    %431 = vmatprep.subr.mxu0 0.0
    %432 = vmatpush1.msra.mxu0 0.0
    %433 = vmatprep.subr.mxu0 0.0
    %434 = vmatpush1.msra.mxu0 0.0
    %435 = vmatprep.subr.mxu0 0.0
    %436 = vmatpush1.msra.mxu0 0.0
    %437 = vmatprep.subr.mxu0 0.0
    %438 = vmatpush1.msra.mxu0 0.0
    %439 = vmatprep.subr.mxu0 0.0
    %440 = vmatpush1.msra.mxu0 0.0
    %441 = vmatprep.subr.mxu0 0.0
    %442 = vmatpush1.msra.mxu0 0.0
    %443 = vmatprep.mubr.f32.mxu0 0.0
    %444 = vmatmul.mubr.f32.gmra.mrb[0].mxu0 %v374
    %v445 = vpop.f32.mrb[0].mxu0
    %v446 = vadd.f32 0.0, %v445
    %v447 = vpop.f32.mrb[0].mxu0
    %448 = vmatprep.mubr.f32.mxu0 0.0
    %449 = vmatmul.mubr.f32.gmra.mrb[0].mxu0 %v377
    %v450 = vpop.f32.mrb[0].mxu0
    %v451 = vadd.f32 0.0, %v450
    %v452 = vpop.f32.mrb[0].mxu0
    %453 = vdwg.mxu0
    %454 = vrot.lane.b32.xlu0 %v238, 112
    %v455 = vpop.permute.xlu0 %454
    %456 = vrot.lane.b32.xlu0 %v239, 112
    %v457 = vpop.permute.xlu0 %456
    %458 = vrot.lane.b32.xlu0 %v220, 80
    %v459 = vpop.permute.xlu0 %458
    %460 = vrot.lane.b32.xlu0 %v225, 80
    %v461 = vpop.permute.xlu0 %460
    %v462 = vsel %vm257, %v455, 0
    %v464 = vsel %vm257, %v457, 0
    %v466 = vsel %vm257, %v459, 0
    %v468 = vsel %vm257, %v461, 0
    %470 = vmatprep.subr.mxu0 0.0
    %471 = vmatpush1.xpose.msra.mxu0 %v466
    %472 = vmatprep.subr.mxu0 0.0
    %473 = vmatpush1.xpose.msra.mxu0 %v468
    %474 = vmatprep.subr.mxu0 0.0
    %475 = vmatpush1.xpose.msra.mxu0 0.0
    %476 = vmatprep.subr.mxu0 0.0
    %477 = vmatpush1.xpose.msra.mxu0 0.0
    %478 = vmatprep.subr.mxu0 0.0
    %479 = vmatpush1.xpose.msra.mxu0 0.0
    %480 = vmatprep.subr.mxu0 0.0
    %481 = vmatpush1.xpose.msra.mxu0 0.0
    %482 = vmatprep.subr.mxu0 0.0
    %483 = vmatpush1.xpose.msra.mxu0 0.0
    %484 = vmatprep.subr.mxu0 0.0
    %485 = vmatpush1.xpose.msra.mxu0 0.0
    %486 = vmatprep.subr.mxu0 0.0
    %487 = vmatpush1.xpose.msra.mxu0 0.0
    %488 = vmatprep.subr.mxu0 0.0
    %489 = vmatpush1.xpose.msra.mxu0 0.0
    %490 = vmatprep.subr.mxu0 0.0
    %491 = vmatpush1.xpose.msra.mxu0 0.0
    %492 = vmatprep.subr.mxu0 0.0
    %493 = vmatpush1.xpose.msra.mxu0 0.0
    %494 = vmatprep.subr.mxu0 0.0
    %495 = vmatpush1.xpose.msra.mxu0 0.0
    %496 = vmatprep.subr.mxu0 0.0
    %497 = vmatpush1.xpose.msra.mxu0 0.0
    %498 = vmatprep.subr.mxu0 0.0
    %499 = vmatpush1.xpose.msra.mxu0 0.0
    %500 = vmatprep.subr.mxu0 0.0
    %501 = vmatpush1.xpose.msra.mxu0 0.0
    %502 = vmatprep.subr.mxu0 0.0
    %503 = vmatpush1.xpose.msra.mxu0 0.0
    %504 = vmatprep.subr.mxu0 0.0
    %505 = vmatpush1.xpose.msra.mxu0 0.0
    %506 = vmatprep.subr.mxu0 0.0
    %507 = vmatpush1.xpose.msra.mxu0 0.0
    %508 = vmatprep.subr.mxu0 0.0
    %509 = vmatpush1.xpose.msra.mxu0 0.0
    %510 = vmatprep.subr.mxu0 0.0
    %511 = vmatpush1.xpose.msra.mxu0 0.0
    %512 = vmatprep.subr.mxu0 0.0
    %513 = vmatpush1.xpose.msra.mxu0 0.0
    %514 = vmatprep.subr.mxu0 0.0
    %515 = vmatpush1.xpose.msra.mxu0 0.0
    %516 = vmatprep.subr.mxu0 0.0
    %517 = vmatpush1.xpose.msra.mxu0 0.0
    %518 = vmatprep.subr.mxu0 0.0
    %519 = vmatpush1.xpose.msra.mxu0 0.0
    %520 = vmatprep.subr.mxu0 0.0
    %521 = vmatpush1.xpose.msra.mxu0 0.0
    %522 = vmatprep.subr.mxu0 0.0
    %523 = vmatpush1.xpose.msra.mxu0 0.0
    %524 = vmatprep.subr.mxu0 0.0
    %525 = vmatpush1.xpose.msra.mxu0 0.0
    %526 = vmatprep.subr.mxu0 0.0
    %527 = vmatpush1.xpose.msra.mxu0 0.0
    %528 = vmatprep.subr.mxu0 0.0
    %529 = vmatpush1.xpose.msra.mxu0 0.0
    %530 = vmatprep.subr.mxu0 0.0
    %531 = vmatpush1.xpose.msra.mxu0 0.0
    %532 = vmatprep.subr.mxu0 0.0
    %533 = vmatpush1.xpose.msra.mxu0 0.0
    %534 = vmatprep.mubr.f32.mxu0 0.0
    %535 = vmatmul.mubr.f32.gmra.mrb[0].mxu0 %v462
    %v536 = vpop.f32.mrb[0].mxu0
    %v537 = vadd.f32 0.0, %v536
    %v538 = vpop.f32.mrb[0].mxu0
    %539 = vmatprep.mubr.f32.mxu0 0.0
    %540 = vmatmul.mubr.f32.gmra.mrb[0].mxu0 %v464
    %v541 = vpop.f32.mrb[0].mxu0
    %v542 = vadd.f32 0.0, %v541
    %v543 = vpop.f32.mrb[0].mxu0
    %544 = vdwg.mxu0
    %v545 = vsel %vm250, -1e+30, %v537
    %v546 = vsel %vm250, -1e+30, %v542
    %v547 = vsel %vm257, %v545, -inf
    %548 = vmax.xlane.f32.xlu0 %v547
    %v549 = vpop.xlane.xlu0 %548
    %v550 = vsel %vm257, %v546, -inf
    %551 = vmax.xlane.f32.xlu0 %v550
    %v552 = vpop.xlane.xlu0 %551
    %v553 = vsub.f32 %v545, %v549
    %v554 = vsub.f32 %v546, %v552
    %v555 = vmul.f32 %v553, 1.442695
    %v556 = vpow.pop %v555
    %v557 = vmul.f32 %v554, 1.442695
    %v558 = vpow.pop %v557
    %v559 = vsel %vm257, %v556, 0.0
    %560 = vadd.xlane.f32.xlu0 %v559
    %v561 = vpop.xlane.xlu0 %560
    %v562 = vsel %vm257, %v558, 0.0
    %563 = vadd.xlane.f32.xlu0 %v562
    %v564 = vpop.xlane.xlu0 %563
    %v565 = vrcp.pop %v561
    %v566 = vrcp.pop %v564
    %v567 = vmul.f32 %v556, %v565
    %v568 = vmul.f32 %v558, %v566
    %569 = vrot.lane.b32.xlu0 %v220, 48
    %v570 = vpop.permute.xlu0 %569
    %571 = vrot.lane.b32.xlu0 %v225, 48
    %v572 = vpop.permute.xlu0 %571
    %v576 = vsel %vm257, %v567, 0
    %v579 = vsel %vm257, %v568, 0
    %581 = vmatprep.subr.mxu0 0.0
    %582 = vmatpush1.msra.mxu0 %v570
    %583 = vmatprep.subr.mxu0 0.0
    %584 = vmatpush1.msra.mxu0 %v572
    %585 = vmatprep.subr.mxu0 0.0
    %586 = vmatpush1.msra.mxu0 0.0
    %587 = vmatprep.subr.mxu0 0.0
    %588 = vmatpush1.msra.mxu0 0.0
    %589 = vmatprep.subr.mxu0 0.0
    %590 = vmatpush1.msra.mxu0 0.0
    %591 = vmatprep.subr.mxu0 0.0
    %592 = vmatpush1.msra.mxu0 0.0
    %593 = vmatprep.subr.mxu0 0.0
    %594 = vmatpush1.msra.mxu0 0.0
    %595 = vmatprep.subr.mxu0 0.0
    %596 = vmatpush1.msra.mxu0 0.0
    %597 = vmatprep.subr.mxu0 0.0
    %598 = vmatpush1.msra.mxu0 0.0
    %599 = vmatprep.subr.mxu0 0.0
    %600 = vmatpush1.msra.mxu0 0.0
    %601 = vmatprep.subr.mxu0 0.0
    %602 = vmatpush1.msra.mxu0 0.0
    %603 = vmatprep.subr.mxu0 0.0
    %604 = vmatpush1.msra.mxu0 0.0
    %605 = vmatprep.subr.mxu0 0.0
    %606 = vmatpush1.msra.mxu0 0.0
    %607 = vmatprep.subr.mxu0 0.0
    %608 = vmatpush1.msra.mxu0 0.0
    %609 = vmatprep.subr.mxu0 0.0
    %610 = vmatpush1.msra.mxu0 0.0
    %611 = vmatprep.subr.mxu0 0.0
    %612 = vmatpush1.msra.mxu0 0.0
    %613 = vmatprep.subr.mxu0 0.0
    %614 = vmatpush1.msra.mxu0 0.0
    %615 = vmatprep.subr.mxu0 0.0
    %616 = vmatpush1.msra.mxu0 0.0
    %617 = vmatprep.subr.mxu0 0.0
    %618 = vmatpush1.msra.mxu0 0.0
    %619 = vmatprep.subr.mxu0 0.0
    %620 = vmatpush1.msra.mxu0 0.0
    %621 = vmatprep.subr.mxu0 0.0
    %622 = vmatpush1.msra.mxu0 0.0
    %623 = vmatprep.subr.mxu0 0.0
    %624 = vmatpush1.msra.mxu0 0.0
    %625 = vmatprep.subr.mxu0 0.0
    %626 = vmatpush1.msra.mxu0 0.0
    %627 = vmatprep.subr.mxu0 0.0
    %628 = vmatpush1.msra.mxu0 0.0
    %629 = vmatprep.subr.mxu0 0.0
    %630 = vmatpush1.msra.mxu0 0.0
    %631 = vmatprep.subr.mxu0 0.0
    %632 = vmatpush1.msra.mxu0 0.0
    %633 = vmatprep.subr.mxu0 0.0
    %634 = vmatpush1.msra.mxu0 0.0
    %635 = vmatprep.subr.mxu0 0.0
    %636 = vmatpush1.msra.mxu0 0.0
    %637 = vmatprep.subr.mxu0 0.0
    %638 = vmatpush1.msra.mxu0 0.0
    %639 = vmatprep.subr.mxu0 0.0
    %640 = vmatpush1.msra.mxu0 0.0
    %641 = vmatprep.subr.mxu0 0.0
    %642 = vmatpush1.msra.mxu0 0.0
    %643 = vmatprep.subr.mxu0 0.0
    %644 = vmatpush1.msra.mxu0 0.0
    %645 = vmatprep.mubr.f32.mxu0 0.0
    %646 = vmatmul.mubr.f32.gmra.mrb[0].mxu0 %v576
    %v647 = vpop.f32.mrb[0].mxu0
    %v648 = vadd.f32 0.0, %v647
    %v649 = vpop.f32.mrb[0].mxu0
    %650 = vmatprep.mubr.f32.mxu0 0.0
    %651 = vmatmul.mubr.f32.gmra.mrb[0].mxu0 %v579
    %v652 = vpop.f32.mrb[0].mxu0
    %v653 = vadd.f32 0.0, %v652
    %v654 = vpop.f32.mrb[0].mxu0
    %655 = vdwg.mxu0
    %v657 = vsel %vm257, %v648, 0
    %v660 = vsel %vm257, %v653, 0
    %662 = vmatprep.subr.mxu0 0.0
    %663 = vmatpush1.msra.mxu0 %v244
    %664 = vmatprep.subr.mxu0 0.0
    %665 = vmatpush1.msra.mxu0 %v245
    %666 = vmatprep.subr.mxu0 0.0
    %667 = vmatpush1.msra.mxu0 0.0
    %668 = vmatprep.subr.mxu0 0.0
    %669 = vmatpush1.msra.mxu0 0.0
    %670 = vmatprep.subr.mxu0 0.0
    %671 = vmatpush1.msra.mxu0 0.0
    %672 = vmatprep.subr.mxu0 0.0
    %673 = vmatpush1.msra.mxu0 0.0
    %674 = vmatprep.subr.mxu0 0.0
    %675 = vmatpush1.msra.mxu0 0.0
    %676 = vmatprep.subr.mxu0 0.0
    %677 = vmatpush1.msra.mxu0 0.0
    %678 = vmatprep.subr.mxu0 0.0
    %679 = vmatpush1.msra.mxu0 0.0
    %680 = vmatprep.subr.mxu0 0.0
    %681 = vmatpush1.msra.mxu0 0.0
    %682 = vmatprep.subr.mxu0 0.0
    %683 = vmatpush1.msra.mxu0 0.0
    %684 = vmatprep.subr.mxu0 0.0
    %685 = vmatpush1.msra.mxu0 0.0
    %686 = vmatprep.subr.mxu0 0.0
    %687 = vmatpush1.msra.mxu0 0.0
    %688 = vmatprep.subr.mxu0 0.0
    %689 = vmatpush1.msra.mxu0 0.0
    %690 = vmatprep.subr.mxu0 0.0
    %691 = vmatpush1.msra.mxu0 0.0
    %692 = vmatprep.subr.mxu0 0.0
    %693 = vmatpush1.msra.mxu0 0.0
    %694 = vmatprep.subr.mxu0 0.0
    %695 = vmatpush1.msra.mxu0 0.0
    %696 = vmatprep.subr.mxu0 0.0
    %697 = vmatpush1.msra.mxu0 0.0
    %698 = vmatprep.subr.mxu0 0.0
    %699 = vmatpush1.msra.mxu0 0.0
    %700 = vmatprep.subr.mxu0 0.0
    %701 = vmatpush1.msra.mxu0 0.0
    %702 = vmatprep.subr.mxu0 0.0
    %703 = vmatpush1.msra.mxu0 0.0
    %704 = vmatprep.subr.mxu0 0.0
    %705 = vmatpush1.msra.mxu0 0.0
    %706 = vmatprep.subr.mxu0 0.0
    %707 = vmatpush1.msra.mxu0 0.0
    %708 = vmatprep.subr.mxu0 0.0
    %709 = vmatpush1.msra.mxu0 0.0
    %710 = vmatprep.subr.mxu0 0.0
    %711 = vmatpush1.msra.mxu0 0.0
    %712 = vmatprep.subr.mxu0 0.0
    %713 = vmatpush1.msra.mxu0 0.0
    %714 = vmatprep.subr.mxu0 0.0
    %715 = vmatpush1.msra.mxu0 0.0
    %716 = vmatprep.subr.mxu0 0.0
    %717 = vmatpush1.msra.mxu0 0.0
    %718 = vmatprep.subr.mxu0 0.0
    %719 = vmatpush1.msra.mxu0 0.0
    %720 = vmatprep.subr.mxu0 0.0
    %721 = vmatpush1.msra.mxu0 0.0
    %722 = vmatprep.subr.mxu0 0.0
    %723 = vmatpush1.msra.mxu0 0.0
    %724 = vmatprep.subr.mxu0 0.0
    %725 = vmatpush1.msra.mxu0 0.0
    %726 = vmatprep.mubr.f32.mxu0 0.0
    %727 = vmatmul.mubr.f32.gmra.mrb[0].mxu0 %v657
    %v728 = vpop.f32.mrb[0].mxu0
    %v729 = vadd.f32 0.0, %v728
    %v730 = vpop.f32.mrb[0].mxu0
    %731 = vmatprep.mubr.f32.mxu0 0.0
    %732 = vmatmul.mubr.f32.gmra.mrb[0].mxu0 %v660
    %v733 = vpop.f32.mrb[0].mxu0
    %v734 = vadd.f32 0.0, %v733
    %v735 = vpop.f32.mrb[0].mxu0
    %736 = vdwg.mxu0
    %v738 = vsel %vm257, %v446, 0
    %v741 = vsel %vm257, %v451, 0
    %743 = vmatprep.subr.mxu0 0.0
    %744 = vmatpush1.msra.mxu0 %v242
    %745 = vmatprep.subr.mxu0 0.0
    %746 = vmatpush1.msra.mxu0 %v243
    %747 = vmatprep.subr.mxu0 0.0
    %748 = vmatpush1.msra.mxu0 0.0
    %749 = vmatprep.subr.mxu0 0.0
    %750 = vmatpush1.msra.mxu0 0.0
    %751 = vmatprep.subr.mxu0 0.0
    %752 = vmatpush1.msra.mxu0 0.0
    %753 = vmatprep.subr.mxu0 0.0
    %754 = vmatpush1.msra.mxu0 0.0
    %755 = vmatprep.subr.mxu0 0.0
    %756 = vmatpush1.msra.mxu0 0.0
    %757 = vmatprep.subr.mxu0 0.0
    %758 = vmatpush1.msra.mxu0 0.0
    %759 = vmatprep.subr.mxu0 0.0
    %760 = vmatpush1.msra.mxu0 0.0
    %761 = vmatprep.subr.mxu0 0.0
    %762 = vmatpush1.msra.mxu0 0.0
    %763 = vmatprep.subr.mxu0 0.0
    %764 = vmatpush1.msra.mxu0 0.0
    %765 = vmatprep.subr.mxu0 0.0
    %766 = vmatpush1.msra.mxu0 0.0
    %767 = vmatprep.subr.mxu0 0.0
    %768 = vmatpush1.msra.mxu0 0.0
    %769 = vmatprep.subr.mxu0 0.0
    %770 = vmatpush1.msra.mxu0 0.0
    %771 = vmatprep.subr.mxu0 0.0
    %772 = vmatpush1.msra.mxu0 0.0
    %773 = vmatprep.subr.mxu0 0.0
    %774 = vmatpush1.msra.mxu0 0.0
    %775 = vmatprep.subr.mxu0 0.0
    %776 = vmatpush1.msra.mxu0 0.0
    %777 = vmatprep.subr.mxu0 0.0
    %778 = vmatpush1.msra.mxu0 0.0
    %779 = vmatprep.subr.mxu0 0.0
    %780 = vmatpush1.msra.mxu0 0.0
    %781 = vmatprep.subr.mxu0 0.0
    %782 = vmatpush1.msra.mxu0 0.0
    %783 = vmatprep.subr.mxu0 0.0
    %784 = vmatpush1.msra.mxu0 0.0
    %785 = vmatprep.subr.mxu0 0.0
    %786 = vmatpush1.msra.mxu0 0.0
    %787 = vmatprep.subr.mxu0 0.0
    %788 = vmatpush1.msra.mxu0 0.0
    %789 = vmatprep.subr.mxu0 0.0
    %790 = vmatpush1.msra.mxu0 0.0
    %791 = vmatprep.subr.mxu0 0.0
    %792 = vmatpush1.msra.mxu0 0.0
    %793 = vmatprep.subr.mxu0 0.0
    %794 = vmatpush1.msra.mxu0 0.0
    %795 = vmatprep.subr.mxu0 0.0
    %796 = vmatpush1.msra.mxu0 0.0
    %797 = vmatprep.subr.mxu0 0.0
    %798 = vmatpush1.msra.mxu0 0.0
    %799 = vmatprep.subr.mxu0 0.0
    %800 = vmatpush1.msra.mxu0 0.0
    %801 = vmatprep.subr.mxu0 0.0
    %802 = vmatpush1.msra.mxu0 0.0
    %803 = vmatprep.subr.mxu0 0.0
    %804 = vmatpush1.msra.mxu0 0.0
    %805 = vmatprep.subr.mxu0 0.0
    %806 = vmatpush1.msra.mxu0 0.0
    %807 = vmatprep.mubr.f32.mxu0 0.0
    %808 = vmatmul.mubr.f32.gmra.mrb[0].mxu0 %v738
    %v809 = vpop.f32.mrb[0].mxu0
    %v810 = vadd.f32 %v729, %v809
    %v811 = vpop.f32.mrb[0].mxu0
    %812 = vmatprep.mubr.f32.mxu0 0.0
    %813 = vmatmul.mubr.f32.gmra.mrb[0].mxu0 %v741
    %v814 = vpop.f32.mrb[0].mxu0
    %v815 = vadd.f32 %v734, %v814
    %v816 = vpop.f32.mrb[0].mxu0
    %817 = vdwg.mxu0
    %s818 = sld [smem:[#allocation6 + $0x1]]
    %v819 = vstv %s818
    %vm820 = vcmp.ge.s32.totalorder %v247, %v819
    %823 = vrot.lane.b32.xlu0 %v230, 96
    %v824 = vpop.permute.xlu0 %823
    %825 = vrot.lane.b32.xlu0 %v235, 96
    %v826 = vpop.permute.xlu0 %825
    %v828 = vsel %vm257, %v240, 0
    %v831 = vsel %vm257, %v241, 0
    %v833 = vsel %vm257, %v824, 0
    %v835 = vsel %vm257, %v826, 0
    %837 = vmatprep.subr.mxu0 0.0
    %838 = vmatpush1.xpose.msra.mxu0 %v833
    %839 = vmatprep.subr.mxu0 0.0
    %840 = vmatpush1.xpose.msra.mxu0 %v835
    %841 = vmatprep.subr.mxu0 0.0
    %842 = vmatpush1.xpose.msra.mxu0 0.0
    %843 = vmatprep.subr.mxu0 0.0
    %844 = vmatpush1.xpose.msra.mxu0 0.0
    %845 = vmatprep.subr.mxu0 0.0
    %846 = vmatpush1.xpose.msra.mxu0 0.0
    %847 = vmatprep.subr.mxu0 0.0
    %848 = vmatpush1.xpose.msra.mxu0 0.0
    %849 = vmatprep.subr.mxu0 0.0
    %850 = vmatpush1.xpose.msra.mxu0 0.0
    %851 = vmatprep.subr.mxu0 0.0
    %852 = vmatpush1.xpose.msra.mxu0 0.0
    %853 = vmatprep.subr.mxu0 0.0
    %854 = vmatpush1.xpose.msra.mxu0 0.0
    %855 = vmatprep.subr.mxu0 0.0
    %856 = vmatpush1.xpose.msra.mxu0 0.0
    %857 = vmatprep.subr.mxu0 0.0
    %858 = vmatpush1.xpose.msra.mxu0 0.0
    %859 = vmatprep.subr.mxu0 0.0
    %860 = vmatpush1.xpose.msra.mxu0 0.0
    %861 = vmatprep.subr.mxu0 0.0
    %862 = vmatpush1.xpose.msra.mxu0 0.0
    %863 = vmatprep.subr.mxu0 0.0
    %864 = vmatpush1.xpose.msra.mxu0 0.0
    %865 = vmatprep.subr.mxu0 0.0
    %866 = vmatpush1.xpose.msra.mxu0 0.0
    %867 = vmatprep.subr.mxu0 0.0
    %868 = vmatpush1.xpose.msra.mxu0 0.0
    %869 = vmatprep.subr.mxu0 0.0
    %870 = vmatpush1.xpose.msra.mxu0 0.0
    %871 = vmatprep.subr.mxu0 0.0
    %872 = vmatpush1.xpose.msra.mxu0 0.0
    %873 = vmatprep.subr.mxu0 0.0
    %874 = vmatpush1.xpose.msra.mxu0 0.0
    %875 = vmatprep.subr.mxu0 0.0
    %876 = vmatpush1.xpose.msra.mxu0 0.0
    %877 = vmatprep.subr.mxu0 0.0
    %878 = vmatpush1.xpose.msra.mxu0 0.0
    %879 = vmatprep.subr.mxu0 0.0
    %880 = vmatpush1.xpose.msra.mxu0 0.0
    %881 = vmatprep.subr.mxu0 0.0
    %882 = vmatpush1.xpose.msra.mxu0 0.0
    %883 = vmatprep.subr.mxu0 0.0
    %884 = vmatpush1.xpose.msra.mxu0 0.0
    %885 = vmatprep.subr.mxu0 0.0
    %886 = vmatpush1.xpose.msra.mxu0 0.0
    %887 = vmatprep.subr.mxu0 0.0
    %888 = vmatpush1.xpose.msra.mxu0 0.0
    %889 = vmatprep.subr.mxu0 0.0
    %890 = vmatpush1.xpose.msra.mxu0 0.0
    %891 = vmatprep.subr.mxu0 0.0
    %892 = vmatpush1.xpose.msra.mxu0 0.0
    %893 = vmatprep.subr.mxu0 0.0
    %894 = vmatpush1.xpose.msra.mxu0 0.0
    %895 = vmatprep.subr.mxu0 0.0
    %896 = vmatpush1.xpose.msra.mxu0 0.0
    %897 = vmatprep.subr.mxu0 0.0
    %898 = vmatpush1.xpose.msra.mxu0 0.0
    %899 = vmatprep.subr.mxu0 0.0
    %900 = vmatpush1.xpose.msra.mxu0 0.0
    %901 = vmatprep.mubr.f32.mxu0 0.0
    %902 = vmatmul.mubr.f32.gmra.mrb[0].mxu0 %v828
    %v903 = vpop.f32.mrb[0].mxu0
    %v904 = vadd.f32 0.0, %v903
    %v905 = vpop.f32.mrb[0].mxu0
    %906 = vmatprep.mubr.f32.mxu0 0.0
    %907 = vmatmul.mubr.f32.gmra.mrb[0].mxu0 %v831
    %v908 = vpop.f32.mrb[0].mxu0
    %v909 = vadd.f32 0.0, %v908
    %v910 = vpop.f32.mrb[0].mxu0
    %911 = vdwg.mxu0
    %v912 = vsel %vm820, -1e+30, %v904
    %v913 = vsel %vm820, -1e+30, %v909
    %v914 = vsel %vm257, %v912, -inf
    %915 = vmax.xlane.f32.xlu0 %v914
    %v916 = vpop.xlane.xlu0 %915
    %v917 = vsel %vm257, %v913, -inf
    %918 = vmax.xlane.f32.xlu0 %v917
    %v919 = vpop.xlane.xlu0 %918
    %v920 = vsub.f32 %v912, %v916
    %v921 = vsub.f32 %v913, %v919
    %v922 = vmul.f32 %v920, 1.442695
    %v923 = vpow.pop %v922
    %v924 = vmul.f32 %v921, 1.442695
    %v925 = vpow.pop %v924
    %v926 = vsel %vm257, %v923, 0.0
    %927 = vadd.xlane.f32.xlu0 %v926
    %v928 = vpop.xlane.xlu0 %927
    %v929 = vsel %vm257, %v925, 0.0
    %930 = vadd.xlane.f32.xlu0 %v929
    %v931 = vpop.xlane.xlu0 %930
    %v932 = vrcp.pop %v928
    %v933 = vrcp.pop %v931
    %v934 = vmul.f32 %v923, %v932
    %v935 = vmul.f32 %v925, %v933
    %936 = vrot.lane.b32.xlu0 %v230, 64
    %v937 = vpop.permute.xlu0 %936
    %938 = vrot.lane.b32.xlu0 %v235, 64
    %v939 = vpop.permute.xlu0 %938
    %v943 = vsel %vm257, %v934, 0
    %v946 = vsel %vm257, %v935, 0
    %948 = vmatprep.subr.mxu0 0.0
    %949 = vmatpush1.msra.mxu0 %v937
    %950 = vmatprep.subr.mxu0 0.0
    %951 = vmatpush1.msra.mxu0 %v939
    %952 = vmatprep.subr.mxu0 0.0
    %953 = vmatpush1.msra.mxu0 0.0
    %954 = vmatprep.subr.mxu0 0.0
    %955 = vmatpush1.msra.mxu0 0.0
    %956 = vmatprep.subr.mxu0 0.0
    %957 = vmatpush1.msra.mxu0 0.0
    %958 = vmatprep.subr.mxu0 0.0
    %959 = vmatpush1.msra.mxu0 0.0
    %960 = vmatprep.subr.mxu0 0.0
    %961 = vmatpush1.msra.mxu0 0.0
    %962 = vmatprep.subr.mxu0 0.0
    %963 = vmatpush1.msra.mxu0 0.0
    %964 = vmatprep.subr.mxu0 0.0
    %965 = vmatpush1.msra.mxu0 0.0
    %966 = vmatprep.subr.mxu0 0.0
    %967 = vmatpush1.msra.mxu0 0.0
    %968 = vmatprep.subr.mxu0 0.0
    %969 = vmatpush1.msra.mxu0 0.0
    %970 = vmatprep.subr.mxu0 0.0
    %971 = vmatpush1.msra.mxu0 0.0
    %972 = vmatprep.subr.mxu0 0.0
    %973 = vmatpush1.msra.mxu0 0.0
    %974 = vmatprep.subr.mxu0 0.0
    %975 = vmatpush1.msra.mxu0 0.0
    %976 = vmatprep.subr.mxu0 0.0
    %977 = vmatpush1.msra.mxu0 0.0
    %978 = vmatprep.subr.mxu0 0.0
    %979 = vmatpush1.msra.mxu0 0.0
    %980 = vmatprep.subr.mxu0 0.0
    %981 = vmatpush1.msra.mxu0 0.0
    %982 = vmatprep.subr.mxu0 0.0
    %983 = vmatpush1.msra.mxu0 0.0
    %984 = vmatprep.subr.mxu0 0.0
    %985 = vmatpush1.msra.mxu0 0.0
    %986 = vmatprep.subr.mxu0 0.0
    %987 = vmatpush1.msra.mxu0 0.0
    %988 = vmatprep.subr.mxu0 0.0
    %989 = vmatpush1.msra.mxu0 0.0
    %990 = vmatprep.subr.mxu0 0.0
    %991 = vmatpush1.msra.mxu0 0.0
    %992 = vmatprep.subr.mxu0 0.0
    %993 = vmatpush1.msra.mxu0 0.0
    %994 = vmatprep.subr.mxu0 0.0
    %995 = vmatpush1.msra.mxu0 0.0
    %996 = vmatprep.subr.mxu0 0.0
    %997 = vmatpush1.msra.mxu0 0.0
    %998 = vmatprep.subr.mxu0 0.0
    %999 = vmatpush1.msra.mxu0 0.0
    %1000 = vmatprep.subr.mxu0 0.0
    %1001 = vmatpush1.msra.mxu0 0.0
    %1002 = vmatprep.subr.mxu0 0.0
    %1003 = vmatpush1.msra.mxu0 0.0
    %1004 = vmatprep.subr.mxu0 0.0
    %1005 = vmatpush1.msra.mxu0 0.0
    %1006 = vmatprep.subr.mxu0 0.0
    %1007 = vmatpush1.msra.mxu0 0.0
    %1008 = vmatprep.subr.mxu0 0.0
    %1009 = vmatpush1.msra.mxu0 0.0
    %1010 = vmatprep.subr.mxu0 0.0
    %1011 = vmatpush1.msra.mxu0 0.0
    %1012 = vmatprep.mubr.f32.mxu0 0.0
    %1013 = vmatmul.mubr.f32.gmra.mrb[0].mxu0 %v943
    %v1014 = vpop.f32.mrb[0].mxu0
    %v1015 = vadd.f32 0.0, %v1014
    %v1016 = vpop.f32.mrb[0].mxu0
    %1017 = vmatprep.mubr.f32.mxu0 0.0
    %1018 = vmatmul.mubr.f32.gmra.mrb[0].mxu0 %v946
    %v1019 = vpop.f32.mrb[0].mxu0
    %v1020 = vadd.f32 0.0, %v1019
    %v1021 = vpop.f32.mrb[0].mxu0
    %1022 = vdwg.mxu0
    %1023 = vrot.lane.b32.xlu0 %v240, 112
    %v1024 = vpop.permute.xlu0 %1023
    %1025 = vrot.lane.b32.xlu0 %v241, 112
    %v1026 = vpop.permute.xlu0 %1025
    %1027 = vrot.lane.b32.xlu0 %v230, 80
    %v1028 = vpop.permute.xlu0 %1027
    %1029 = vrot.lane.b32.xlu0 %v235, 80
    %v1030 = vpop.permute.xlu0 %1029
    %v1031 = vsel %vm257, %v1024, 0
    %v1033 = vsel %vm257, %v1026, 0
    %v1035 = vsel %vm257, %v1028, 0
    %v1037 = vsel %vm257, %v1030, 0
    %1039 = vmatprep.subr.mxu0 0.0
    %1040 = vmatpush1.xpose.msra.mxu0 %v1035
    %1041 = vmatprep.subr.mxu0 0.0
    %1042 = vmatpush1.xpose.msra.mxu0 %v1037
    %1043 = vmatprep.subr.mxu0 0.0
    %1044 = vmatpush1.xpose.msra.mxu0 0.0
    %1045 = vmatprep.subr.mxu0 0.0
    %1046 = vmatpush1.xpose.msra.mxu0 0.0
    %1047 = vmatprep.subr.mxu0 0.0
    %1048 = vmatpush1.xpose.msra.mxu0 0.0
    %1049 = vmatprep.subr.mxu0 0.0
    %1050 = vmatpush1.xpose.msra.mxu0 0.0
    %1051 = vmatprep.subr.mxu0 0.0
    %1052 = vmatpush1.xpose.msra.mxu0 0.0
    %1053 = vmatprep.subr.mxu0 0.0
    %1054 = vmatpush1.xpose.msra.mxu0 0.0
    %1055 = vmatprep.subr.mxu0 0.0
    %1056 = vmatpush1.xpose.msra.mxu0 0.0
    %1057 = vmatprep.subr.mxu0 0.0
    %1058 = vmatpush1.xpose.msra.mxu0 0.0
    %1059 = vmatprep.subr.mxu0 0.0
    %1060 = vmatpush1.xpose.msra.mxu0 0.0
    %1061 = vmatprep.subr.mxu0 0.0
    %1062 = vmatpush1.xpose.msra.mxu0 0.0
    %1063 = vmatprep.subr.mxu0 0.0
    %1064 = vmatpush1.xpose.msra.mxu0 0.0
    %1065 = vmatprep.subr.mxu0 0.0
    %1066 = vmatpush1.xpose.msra.mxu0 0.0
    %1067 = vmatprep.subr.mxu0 0.0
    %1068 = vmatpush1.xpose.msra.mxu0 0.0
    %1069 = vmatprep.subr.mxu0 0.0
    %1070 = vmatpush1.xpose.msra.mxu0 0.0
    %1071 = vmatprep.subr.mxu0 0.0
    %1072 = vmatpush1.xpose.msra.mxu0 0.0
    %1073 = vmatprep.subr.mxu0 0.0
    %1074 = vmatpush1.xpose.msra.mxu0 0.0
    %1075 = vmatprep.subr.mxu0 0.0
    %1076 = vmatpush1.xpose.msra.mxu0 0.0
    %1077 = vmatprep.subr.mxu0 0.0
    %1078 = vmatpush1.xpose.msra.mxu0 0.0
    %1079 = vmatprep.subr.mxu0 0.0
    %1080 = vmatpush1.xpose.msra.mxu0 0.0
    %1081 = vmatprep.subr.mxu0 0.0
    %1082 = vmatpush1.xpose.msra.mxu0 0.0
    %1083 = vmatprep.subr.mxu0 0.0
    %1084 = vmatpush1.xpose.msra.mxu0 0.0
    %1085 = vmatprep.subr.mxu0 0.0
    %1086 = vmatpush1.xpose.msra.mxu0 0.0
    %1087 = vmatprep.subr.mxu0 0.0
    %1088 = vmatpush1.xpose.msra.mxu0 0.0
    %1089 = vmatprep.subr.mxu0 0.0
    %1090 = vmatpush1.xpose.msra.mxu0 0.0
    %1091 = vmatprep.subr.mxu0 0.0
    %1092 = vmatpush1.xpose.msra.mxu0 0.0
    %1093 = vmatprep.subr.mxu0 0.0
    %1094 = vmatpush1.xpose.msra.mxu0 0.0
    %1095 = vmatprep.subr.mxu0 0.0
    %1096 = vmatpush1.xpose.msra.mxu0 0.0
    %1097 = vmatprep.subr.mxu0 0.0
    %1098 = vmatpush1.xpose.msra.mxu0 0.0
    %1099 = vmatprep.subr.mxu0 0.0
    %1100 = vmatpush1.xpose.msra.mxu0 0.0
    %1101 = vmatprep.subr.mxu0 0.0
    %1102 = vmatpush1.xpose.msra.mxu0 0.0
    %1103 = vmatprep.mubr.f32.mxu0 0.0
    %1104 = vmatmul.mubr.f32.gmra.mrb[0].mxu0 %v1031
    %v1105 = vpop.f32.mrb[0].mxu0
    %v1106 = vadd.f32 0.0, %v1105
    %v1107 = vpop.f32.mrb[0].mxu0
    %1108 = vmatprep.mubr.f32.mxu0 0.0
    %1109 = vmatmul.mubr.f32.gmra.mrb[0].mxu0 %v1033
    %v1110 = vpop.f32.mrb[0].mxu0
    %v1111 = vadd.f32 0.0, %v1110
    %v1112 = vpop.f32.mrb[0].mxu0
    %1113 = vdwg.mxu0
    %v1114 = vsel %vm820, -1e+30, %v1106
    %v1115 = vsel %vm820, -1e+30, %v1111
    %v1116 = vsel %vm257, %v1114, -inf
    %1117 = vmax.xlane.f32.xlu0 %v1116
    %v1118 = vpop.xlane.xlu0 %1117
    %v1119 = vsel %vm257, %v1115, -inf
    %1120 = vmax.xlane.f32.xlu0 %v1119
    %v1121 = vpop.xlane.xlu0 %1120
    %v1122 = vsub.f32 %v1114, %v1118
    %v1123 = vsub.f32 %v1115, %v1121
    %v1124 = vmul.f32 %v1122, 1.442695
    %v1125 = vpow.pop %v1124
    %v1126 = vmul.f32 %v1123, 1.442695
    %v1127 = vpow.pop %v1126
    %v1128 = vsel %vm257, %v1125, 0.0
    %1129 = vadd.xlane.f32.xlu0 %v1128
    %v1130 = vpop.xlane.xlu0 %1129
    %v1131 = vsel %vm257, %v1127, 0.0
    %1132 = vadd.xlane.f32.xlu0 %v1131
    %v1133 = vpop.xlane.xlu0 %1132
    %v1134 = vrcp.pop %v1130
    %v1135 = vrcp.pop %v1133
    %v1136 = vmul.f32 %v1125, %v1134
    %v1137 = vmul.f32 %v1127, %v1135
    %1138 = vrot.lane.b32.xlu0 %v230, 48
    %v1139 = vpop.permute.xlu0 %1138
    %1140 = vrot.lane.b32.xlu0 %v235, 48
    %v1141 = vpop.permute.xlu0 %1140
    %v1145 = vsel %vm257, %v1136, 0
    %v1148 = vsel %vm257, %v1137, 0
    %1150 = vmatprep.subr.mxu0 0.0
    %1151 = vmatpush1.msra.mxu0 %v1139
    %1152 = vmatprep.subr.mxu0 0.0
    %1153 = vmatpush1.msra.mxu0 %v1141
    %1154 = vmatprep.subr.mxu0 0.0
    %1155 = vmatpush1.msra.mxu0 0.0
    %1156 = vmatprep.subr.mxu0 0.0
    %1157 = vmatpush1.msra.mxu0 0.0
    %1158 = vmatprep.subr.mxu0 0.0
    %1159 = vmatpush1.msra.mxu0 0.0
    %1160 = vmatprep.subr.mxu0 0.0
    %1161 = vmatpush1.msra.mxu0 0.0
    %1162 = vmatprep.subr.mxu0 0.0
    %1163 = vmatpush1.msra.mxu0 0.0
    %1164 = vmatprep.subr.mxu0 0.0
    %1165 = vmatpush1.msra.mxu0 0.0
    %1166 = vmatprep.subr.mxu0 0.0
    %1167 = vmatpush1.msra.mxu0 0.0
    %1168 = vmatprep.subr.mxu0 0.0
    %1169 = vmatpush1.msra.mxu0 0.0
    %1170 = vmatprep.subr.mxu0 0.0
    %1171 = vmatpush1.msra.mxu0 0.0
    %1172 = vmatprep.subr.mxu0 0.0
    %1173 = vmatpush1.msra.mxu0 0.0
    %1174 = vmatprep.subr.mxu0 0.0
    %1175 = vmatpush1.msra.mxu0 0.0
    %1176 = vmatprep.subr.mxu0 0.0
    %1177 = vmatpush1.msra.mxu0 0.0
    %1178 = vmatprep.subr.mxu0 0.0
    %1179 = vmatpush1.msra.mxu0 0.0
    %1180 = vmatprep.subr.mxu0 0.0
    %1181 = vmatpush1.msra.mxu0 0.0
    %1182 = vmatprep.subr.mxu0 0.0
    %1183 = vmatpush1.msra.mxu0 0.0
    %1184 = vmatprep.subr.mxu0 0.0
    %1185 = vmatpush1.msra.mxu0 0.0
    %1186 = vmatprep.subr.mxu0 0.0
    %1187 = vmatpush1.msra.mxu0 0.0
    %1188 = vmatprep.subr.mxu0 0.0
    %1189 = vmatpush1.msra.mxu0 0.0
    %1190 = vmatprep.subr.mxu0 0.0
    %1191 = vmatpush1.msra.mxu0 0.0
    %1192 = vmatprep.subr.mxu0 0.0
    %1193 = vmatpush1.msra.mxu0 0.0
    %1194 = vmatprep.subr.mxu0 0.0
    %1195 = vmatpush1.msra.mxu0 0.0
    %1196 = vmatprep.subr.mxu0 0.0
    %1197 = vmatpush1.msra.mxu0 0.0
    %1198 = vmatprep.subr.mxu0 0.0
    %1199 = vmatpush1.msra.mxu0 0.0
    %1200 = vmatprep.subr.mxu0 0.0
    %1201 = vmatpush1.msra.mxu0 0.0
    %1202 = vmatprep.subr.mxu0 0.0
    %1203 = vmatpush1.msra.mxu0 0.0
    %1204 = vmatprep.subr.mxu0 0.0
    %1205 = vmatpush1.msra.mxu0 0.0
    %1206 = vmatprep.subr.mxu0 0.0
    %1207 = vmatpush1.msra.mxu0 0.0
    %1208 = vmatprep.subr.mxu0 0.0
    %1209 = vmatpush1.msra.mxu0 0.0
    %1210 = vmatprep.subr.mxu0 0.0
    %1211 = vmatpush1.msra.mxu0 0.0
    %1212 = vmatprep.subr.mxu0 0.0
    %1213 = vmatpush1.msra.mxu0 0.0
    %1214 = vmatprep.mubr.f32.mxu0 0.0
    %1215 = vmatmul.mubr.f32.gmra.mrb[0].mxu0 %v1145
    %v1216 = vpop.f32.mrb[0].mxu0
    %v1217 = vadd.f32 0.0, %v1216
    %v1218 = vpop.f32.mrb[0].mxu0
    %1219 = vmatprep.mubr.f32.mxu0 0.0
    %1220 = vmatmul.mubr.f32.gmra.mrb[0].mxu0 %v1148
    %v1221 = vpop.f32.mrb[0].mxu0
    %v1222 = vadd.f32 0.0, %v1221
    %v1223 = vpop.f32.mrb[0].mxu0
    %1224 = vdwg.mxu0
    %v1226 = vsel %vm257, %v1217, 0
    %v1229 = vsel %vm257, %v1222, 0
    %1231 = vmatprep.subr.mxu0 0.0
    %1232 = vmatpush1.msra.mxu0 %v244
    %1233 = vmatprep.subr.mxu0 0.0
    %1234 = vmatpush1.msra.mxu0 %v245
    %1235 = vmatprep.subr.mxu0 0.0
    %1236 = vmatpush1.msra.mxu0 0.0
    %1237 = vmatprep.subr.mxu0 0.0
    %1238 = vmatpush1.msra.mxu0 0.0
    %1239 = vmatprep.subr.mxu0 0.0
    %1240 = vmatpush1.msra.mxu0 0.0
    %1241 = vmatprep.subr.mxu0 0.0
    %1242 = vmatpush1.msra.mxu0 0.0
    %1243 = vmatprep.subr.mxu0 0.0
    %1244 = vmatpush1.msra.mxu0 0.0
    %1245 = vmatprep.subr.mxu0 0.0
    %1246 = vmatpush1.msra.mxu0 0.0
    %1247 = vmatprep.subr.mxu0 0.0
    %1248 = vmatpush1.msra.mxu0 0.0
    %1249 = vmatprep.subr.mxu0 0.0
    %1250 = vmatpush1.msra.mxu0 0.0
    %1251 = vmatprep.subr.mxu0 0.0
    %1252 = vmatpush1.msra.mxu0 0.0
    %1253 = vmatprep.subr.mxu0 0.0
    %1254 = vmatpush1.msra.mxu0 0.0
    %1255 = vmatprep.subr.mxu0 0.0
    %1256 = vmatpush1.msra.mxu0 0.0
    %1257 = vmatprep.subr.mxu0 0.0
    %1258 = vmatpush1.msra.mxu0 0.0
    %1259 = vmatprep.subr.mxu0 0.0
    %1260 = vmatpush1.msra.mxu0 0.0
    %1261 = vmatprep.subr.mxu0 0.0
    %1262 = vmatpush1.msra.mxu0 0.0
    %1263 = vmatprep.subr.mxu0 0.0
    %1264 = vmatpush1.msra.mxu0 0.0
    %1265 = vmatprep.subr.mxu0 0.0
    %1266 = vmatpush1.msra.mxu0 0.0
    %1267 = vmatprep.subr.mxu0 0.0
    %1268 = vmatpush1.msra.mxu0 0.0
    %1269 = vmatprep.subr.mxu0 0.0
    %1270 = vmatpush1.msra.mxu0 0.0
    %1271 = vmatprep.subr.mxu0 0.0
    %1272 = vmatpush1.msra.mxu0 0.0
    %1273 = vmatprep.subr.mxu0 0.0
    %1274 = vmatpush1.msra.mxu0 0.0
    %1275 = vmatprep.subr.mxu0 0.0
    %1276 = vmatpush1.msra.mxu0 0.0
    %1277 = vmatprep.subr.mxu0 0.0
    %1278 = vmatpush1.msra.mxu0 0.0
    %1279 = vmatprep.subr.mxu0 0.0
    %1280 = vmatpush1.msra.mxu0 0.0
    %1281 = vmatprep.subr.mxu0 0.0
    %1282 = vmatpush1.msra.mxu0 0.0
    %1283 = vmatprep.subr.mxu0 0.0
    %1284 = vmatpush1.msra.mxu0 0.0
    %1285 = vmatprep.subr.mxu0 0.0
    %1286 = vmatpush1.msra.mxu0 0.0
    %1287 = vmatprep.subr.mxu0 0.0
    %1288 = vmatpush1.msra.mxu0 0.0
    %1289 = vmatprep.subr.mxu0 0.0
    %1290 = vmatpush1.msra.mxu0 0.0
    %1291 = vmatprep.subr.mxu0 0.0
    %1292 = vmatpush1.msra.mxu0 0.0
    %1293 = vmatprep.subr.mxu0 0.0
    %1294 = vmatpush1.msra.mxu0 0.0
    %1295 = vmatprep.mubr.f32.mxu0 0.0
    %1296 = vmatmul.mubr.f32.gmra.mrb[0].mxu0 %v1226
    %v1297 = vpop.f32.mrb[0].mxu0
    %v1298 = vadd.f32 0.0, %v1297
    %v1299 = vpop.f32.mrb[0].mxu0
    %1300 = vmatprep.mubr.f32.mxu0 0.0
    %1301 = vmatmul.mubr.f32.gmra.mrb[0].mxu0 %v1229
    %v1302 = vpop.f32.mrb[0].mxu0
    %v1303 = vadd.f32 0.0, %v1302
    %v1304 = vpop.f32.mrb[0].mxu0
    %1305 = vdwg.mxu0
    %v1307 = vsel %vm257, %v1015, 0
    %v1310 = vsel %vm257, %v1020, 0
    %1312 = vmatprep.subr.mxu0 0.0
    %1313 = vmatpush1.msra.mxu0 %v242
    %1314 = vmatprep.subr.mxu0 0.0
    %1315 = vmatpush1.msra.mxu0 %v243
    %1316 = vmatprep.subr.mxu0 0.0
    %1317 = vmatpush1.msra.mxu0 0.0
    %1318 = vmatprep.subr.mxu0 0.0
    %1319 = vmatpush1.msra.mxu0 0.0
    %1320 = vmatprep.subr.mxu0 0.0
    %1321 = vmatpush1.msra.mxu0 0.0
    %1322 = vmatprep.subr.mxu0 0.0
    %1323 = vmatpush1.msra.mxu0 0.0
    %1324 = vmatprep.subr.mxu0 0.0
    %1325 = vmatpush1.msra.mxu0 0.0
    %1326 = vmatprep.subr.mxu0 0.0
    %1327 = vmatpush1.msra.mxu0 0.0
    %1328 = vmatprep.subr.mxu0 0.0
    %1329 = vmatpush1.msra.mxu0 0.0
    %1330 = vmatprep.subr.mxu0 0.0
    %1331 = vmatpush1.msra.mxu0 0.0
    %1332 = vmatprep.subr.mxu0 0.0
    %1333 = vmatpush1.msra.mxu0 0.0
    %1334 = vmatprep.subr.mxu0 0.0
    %1335 = vmatpush1.msra.mxu0 0.0
    %1336 = vmatprep.subr.mxu0 0.0
    %1337 = vmatpush1.msra.mxu0 0.0
    %1338 = vmatprep.subr.mxu0 0.0
    %1339 = vmatpush1.msra.mxu0 0.0
    %1340 = vmatprep.subr.mxu0 0.0
    %1341 = vmatpush1.msra.mxu0 0.0
    %1342 = vmatprep.subr.mxu0 0.0
    %1343 = vmatpush1.msra.mxu0 0.0
    %1344 = vmatprep.subr.mxu0 0.0
    %1345 = vmatpush1.msra.mxu0 0.0
    %1346 = vmatprep.subr.mxu0 0.0
    %1347 = vmatpush1.msra.mxu0 0.0
    %1348 = vmatprep.subr.mxu0 0.0
    %1349 = vmatpush1.msra.mxu0 0.0
    %1350 = vmatprep.subr.mxu0 0.0
    %1351 = vmatpush1.msra.mxu0 0.0
    %1352 = vmatprep.subr.mxu0 0.0
    %1353 = vmatpush1.msra.mxu0 0.0
    %1354 = vmatprep.subr.mxu0 0.0
    %1355 = vmatpush1.msra.mxu0 0.0
    %1356 = vmatprep.subr.mxu0 0.0
    %1357 = vmatpush1.msra.mxu0 0.0
    %1358 = vmatprep.subr.mxu0 0.0
    %1359 = vmatpush1.msra.mxu0 0.0
    %1360 = vmatprep.subr.mxu0 0.0
    %1361 = vmatpush1.msra.mxu0 0.0
    %1362 = vmatprep.subr.mxu0 0.0
    %1363 = vmatpush1.msra.mxu0 0.0
    %1364 = vmatprep.subr.mxu0 0.0
    %1365 = vmatpush1.msra.mxu0 0.0
    %1366 = vmatprep.subr.mxu0 0.0
    %1367 = vmatpush1.msra.mxu0 0.0
    %1368 = vmatprep.subr.mxu0 0.0
    %1369 = vmatpush1.msra.mxu0 0.0
    %1370 = vmatprep.subr.mxu0 0.0
    %1371 = vmatpush1.msra.mxu0 0.0
    %1372 = vmatprep.subr.mxu0 0.0
    %1373 = vmatpush1.msra.mxu0 0.0
    %1374 = vmatprep.subr.mxu0 0.0
    %1375 = vmatpush1.msra.mxu0 0.0
    %1376 = vmatprep.mubr.f32.mxu0 0.0
    %1377 = vmatmul.mubr.f32.gmra.mrb[0].mxu0 %v1307
    %v1378 = vpop.f32.mrb[0].mxu0
    %v1379 = vadd.f32 %v1298, %v1378
    %v1380 = vpop.f32.mrb[0].mxu0
    %1381 = vmatprep.mubr.f32.mxu0 0.0
    %1382 = vmatmul.mubr.f32.gmra.mrb[0].mxu0 %v1310
    %v1383 = vpop.f32.mrb[0].mxu0
    %v1384 = vadd.f32 %v1303, %v1383
    %v1385 = vpop.f32.mrb[0].mxu0
    %1386 = vdwg.mxu0
    %v1387 = vadd.f32 %v116, %v810
    %v1388 = vadd.f32 %v117, %v815
    %v1389 = vadd.f32 %v127, %v1379
    %v1390 = vadd.f32 %v128, %v1384
    %v1391 = vld [vmem:[%s8] sm:$0x1]
    %v1393 = vlaneseq
    %v1394 = vshrl.u32 %v1393, 7
    %v1395 = vsub.s32 0, %v1394
    %v1396 = vrot.slane %v1391, %v1395
    %v1398 = vadd.f32 %v1387, %v1396
    %v1399 = vadd.f32 %v1388, %v1396
    %v1400 = vadd.f32 %v1389, %v1396
    %v1401 = vadd.f32 %v1390, %v1396
    %v1402 = vld [vmem:[%s13] sm:$0x1]
    %v1403 = vld [vmem:[%s14] sm:$0x1]
    %v1404 = vsel %vm140, %v1398, 0.0
    %1405 = vadd.xlane.f32.xlu0 %v1404
    %v1406 = vpop.xlane.xlu0 %1405
    %v1407 = vsel %vm140, %v1399, 0.0
    %1408 = vadd.xlane.f32.xlu0 %v1407
    %v1409 = vpop.xlane.xlu0 %1408
    %v1410 = vsel %vm140, %v1400, 0.0
    %1411 = vadd.xlane.f32.xlu0 %v1410
    %v1412 = vpop.xlane.xlu0 %1411
    %v1413 = vsel %vm140, %v1401, 0.0
    %1414 = vadd.xlane.f32.xlu0 %v1413
    %v1415 = vpop.xlane.xlu0 %1414
    %v1416 = vrcp.pop 32.0
    %v1417 = vmul.f32 %v1406, %v1416
    %v1418 = vmul.f32 %v1409, %v1416
    %v1419 = vmul.f32 %v1412, %v1416
    %v1420 = vmul.f32 %v1415, %v1416
    %v1421 = vsub.f32 %v1398, %v1417
    %v1422 = vsub.f32 %v1399, %v1418
    %v1423 = vsub.f32 %v1400, %v1419
    %v1424 = vsub.f32 %v1401, %v1420
    %v1425 = vmul.f32 %v1421, %v1421
    %v1426 = vmul.f32 %v1422, %v1422
    %v1427 = vmul.f32 %v1423, %v1423
    %v1428 = vmul.f32 %v1424, %v1424
    %v1429 = vsel %vm140, %v1425, 0.0
    %1430 = vadd.xlane.f32.xlu0 %v1429
    %v1431 = vpop.xlane.xlu0 %1430
    %v1432 = vsel %vm140, %v1426, 0.0
    %1433 = vadd.xlane.f32.xlu0 %v1432
    %v1434 = vpop.xlane.xlu0 %1433
    %v1435 = vsel %vm140, %v1427, 0.0
    %1436 = vadd.xlane.f32.xlu0 %v1435
    %v1437 = vpop.xlane.xlu0 %1436
    %v1438 = vsel %vm140, %v1428, 0.0
    %1439 = vadd.xlane.f32.xlu0 %v1438
    %v1440 = vpop.xlane.xlu0 %1439
    %v1441 = vmul.f32 %v1431, %v1416
    %v1442 = vmul.f32 %v1434, %v1416
    %v1443 = vmul.f32 %v1437, %v1416
    %v1444 = vmul.f32 %v1440, %v1416
    %v1445 = vadd.f32 %v1441, 1e-05
    %v1446 = vadd.f32 %v1442, 1e-05
    %v1447 = vadd.f32 %v1443, 1e-05
    %v1448 = vadd.f32 %v1444, 1e-05
    %v1449 = vrsqrt.pop %v1445
    %v1450 = vrsqrt.pop %v1446
    %v1451 = vrsqrt.pop %v1447
    %v1452 = vrsqrt.pop %v1448
    %v1453 = vmul.f32 %v1421, %v1449
    %v1454 = vmul.f32 %v1422, %v1450
    %v1455 = vmul.f32 %v1423, %v1451
    %v1456 = vmul.f32 %v1424, %v1452
    %v1458 = vlaneseq
    %v1459 = vshrl.u32 %v1458, 7
    %v1460 = vsub.s32 0, %v1459
    %v1461 = vrot.slane %v1402, %v1460
    %v1463 = vmul.f32 %v1453, %v1461
    %v1464 = vmul.f32 %v1454, %v1461
    %v1465 = vmul.f32 %v1455, %v1461
    %v1466 = vmul.f32 %v1456, %v1461
    %v1468 = vlaneseq
    %v1469 = vshrl.u32 %v1468, 7
    %v1470 = vsub.s32 0, %v1469
    %v1471 = vrot.slane %v1403, %v1470
    %v1473 = vadd.f32 %v1463, %v1471
    %v1474 = vadd.f32 %v1464, %v1471
    %v1475 = vadd.f32 %v1465, %v1471
    %v1476 = vadd.f32 %v1466, %v1471
    %v1477 = vpack.c.bf16 %v1474, %v1473
    %v1478 = vpack.c.bf16 %v1476, %v1475
    %v1479 = vld [vmem:[%s9] sm:$0xff]
    %v1480 = vld [vmem:[%s9 + $0x8] sm:$0xff]
    %v1481 = vld [vmem:[%s9 + $0x10] sm:$0xff]
    %v1482 = vld [vmem:[%s9 + $0x18] sm:$0xff]
    %v1483 = vld [vmem:[%s9 + $0x20] sm:$0xff]
    %v1484 = vld [vmem:[%s9 + $0x28] sm:$0xff]
    %v1485 = vld [vmem:[%s9 + $0x30] sm:$0xff]
    %v1486 = vld [vmem:[%s9 + $0x38] sm:$0xff]
    %v1487 = vld [vmem:[%s9 + $0x40] sm:$0xff]
    %v1488 = vld [vmem:[%s9 + $0x48] sm:$0xff]
    %v1489 = vld [vmem:[%s9 + $0x50] sm:$0xff]
    %v1490 = vld [vmem:[%s9 + $0x58] sm:$0xff]
    %v1491 = vld [vmem:[%s9 + $0x60] sm:$0xff]
    %v1492 = vld [vmem:[%s9 + $0x68] sm:$0xff]
    %v1493 = vld [vmem:[%s9 + $0x70] sm:$0xff]
    %v1494 = vld [vmem:[%s9 + $0x78] sm:$0xff]
    %v1495 = vld [vmem:[%s9 + $0x80] sm:$0xff]
    %v1496 = vld [vmem:[%s9 + $0x88] sm:$0xff]
    %v1497 = vld [vmem:[%s9 + $0x90] sm:$0xff]
    %v1498 = vld [vmem:[%s9 + $0x98] sm:$0xff]
    %v1499 = vld [vmem:[%s9 + $0xa0] sm:$0xff]
    %v1500 = vld [vmem:[%s9 + $0xa8] sm:$0xff]
    %v1501 = vld [vmem:[%s9 + $0xb0] sm:$0xff]
    %v1502 = vld [vmem:[%s9 + $0xb8] sm:$0xff]
    %v1503 = vld [vmem:[%s9 + $0xc0] sm:$0xff]
    %v1504 = vld [vmem:[%s9 + $0xc8] sm:$0xff]
    %v1505 = vld [vmem:[%s9 + $0xd0] sm:$0xff]
    %v1506 = vld [vmem:[%s9 + $0xd8] sm:$0xff]
    %v1507 = vld [vmem:[%s9 + $0xe0] sm:$0xff]
    %v1508 = vld [vmem:[%s9 + $0xe8] sm:$0xff]
    %v1509 = vld [vmem:[%s9 + $0xf0] sm:$0xff]
    %v1510 = vld [vmem:[%s9 + $0xf8] sm:$0xff]
    %v1511 = vld [vmem:[%s10] sm:$0xff]
    %v1512 = vld [vmem:[%s10 + $0x8] sm:$0xff]
    %v1515 = vlaneseq
    %v1516 = vshrl.u32 %v1515, 7
    %v1517 = vsub.s32 0, %v1516
    %v1518 = vrot.slane %v1511, %v1517
    %v1519 = vlaneseq
    %v1520 = vshrl.u32 %v1519, 7
    %v1521 = vsub.s32 1, %v1520
    %v1522 = vrot.slane %v1511, %v1521
    %v1523 = vlaneseq
    %v1524 = vshrl.u32 %v1523, 7
    %v1525 = vsub.s32 2, %v1524
    %v1526 = vrot.slane %v1511, %v1525
    %v1527 = vlaneseq
    %v1528 = vshrl.u32 %v1527, 7
    %v1529 = vsub.s32 3, %v1528
    %v1530 = vrot.slane %v1511, %v1529
    %v1531 = vlaneseq
    %v1532 = vshrl.u32 %v1531, 7
    %v1533 = vsub.s32 4, %v1532
    %v1534 = vrot.slane %v1511, %v1533
    %v1535 = vlaneseq
    %v1536 = vshrl.u32 %v1535, 7
    %v1537 = vsub.s32 5, %v1536
    %v1538 = vrot.slane %v1511, %v1537
    %v1539 = vlaneseq
    %v1540 = vshrl.u32 %v1539, 7
    %v1541 = vsub.s32 6, %v1540
    %v1542 = vrot.slane %v1511, %v1541
    %v1543 = vlaneseq
    %v1544 = vshrl.u32 %v1543, 7
    %v1545 = vsub.s32 7, %v1544
    %v1546 = vrot.slane %v1511, %v1545
    %v1547 = vlaneseq
    %v1548 = vshrl.u32 %v1547, 7
    %v1549 = vsub.s32 0, %v1548
    %v1550 = vrot.slane %v1512, %v1549
    %v1551 = vlaneseq
    %v1552 = vshrl.u32 %v1551, 7
    %v1553 = vsub.s32 1, %v1552
    %v1554 = vrot.slane %v1512, %v1553
    %v1555 = vlaneseq
    %v1556 = vshrl.u32 %v1555, 7
    %v1557 = vsub.s32 2, %v1556
    %v1558 = vrot.slane %v1512, %v1557
    %v1559 = vlaneseq
    %v1560 = vshrl.u32 %v1559, 7
    %v1561 = vsub.s32 3, %v1560
    %v1562 = vrot.slane %v1512, %v1561
    %v1563 = vlaneseq
    %v1564 = vshrl.u32 %v1563, 7
    %v1565 = vsub.s32 4, %v1564
    %v1566 = vrot.slane %v1512, %v1565
    %v1567 = vlaneseq
    %v1568 = vshrl.u32 %v1567, 7
    %v1569 = vsub.s32 5, %v1568
    %v1570 = vrot.slane %v1512, %v1569
    %v1571 = vlaneseq
    %v1572 = vshrl.u32 %v1571, 7
    %v1573 = vsub.s32 6, %v1572
    %v1574 = vrot.slane %v1512, %v1573
    %v1575 = vlaneseq
    %v1576 = vshrl.u32 %v1575, 7
    %v1577 = vsub.s32 7, %v1576
    %v1578 = vrot.slane %v1512, %v1577
    %v1627 = vunpack.c.l.b16 %v1479
    %v1628 = vunpack.c.h.b16 %v1479
    %v1629 = vunpack.c.l.b16 %v1480
    %v1630 = vunpack.c.h.b16 %v1480
    %v1631 = vunpack.c.l.b16 %v1481
    %v1632 = vunpack.c.h.b16 %v1481
    %v1633 = vunpack.c.l.b16 %v1482
    %v1634 = vunpack.c.h.b16 %v1482
    %v1635 = vunpack.c.l.b16 %v1483
    %v1636 = vunpack.c.h.b16 %v1483
    %v1637 = vunpack.c.l.b16 %v1484
    %v1638 = vunpack.c.h.b16 %v1484
    %v1639 = vunpack.c.l.b16 %v1485
    %v1640 = vunpack.c.h.b16 %v1485
    %v1641 = vunpack.c.l.b16 %v1486
    %v1642 = vunpack.c.h.b16 %v1486
    %v1643 = vunpack.c.l.b16 %v1487
    %v1644 = vunpack.c.h.b16 %v1487
    %v1645 = vunpack.c.l.b16 %v1488
    %v1646 = vunpack.c.h.b16 %v1488
    %v1647 = vunpack.c.l.b16 %v1489
    %v1648 = vunpack.c.h.b16 %v1489
    %v1649 = vunpack.c.l.b16 %v1490
    %v1650 = vunpack.c.h.b16 %v1490
    %v1651 = vunpack.c.l.b16 %v1491
    %v1652 = vunpack.c.h.b16 %v1491
    %v1653 = vunpack.c.l.b16 %v1492
    %v1654 = vunpack.c.h.b16 %v1492
    %v1655 = vunpack.c.l.b16 %v1493
    %v1656 = vunpack.c.h.b16 %v1493
    %v1657 = vunpack.c.l.b16 %v1494
    %v1658 = vunpack.c.h.b16 %v1494
    %v1659 = vunpack.c.l.b16 %v1495
    %v1660 = vunpack.c.h.b16 %v1495
    %v1661 = vunpack.c.l.b16 %v1496
    %v1662 = vunpack.c.h.b16 %v1496
    %v1663 = vunpack.c.l.b16 %v1497
    %v1664 = vunpack.c.h.b16 %v1497
    %v1665 = vunpack.c.l.b16 %v1498
    %v1666 = vunpack.c.h.b16 %v1498
    %v1667 = vunpack.c.l.b16 %v1499
    %v1668 = vunpack.c.h.b16 %v1499
    %v1669 = vunpack.c.l.b16 %v1500
    %v1670 = vunpack.c.h.b16 %v1500
    %v1671 = vunpack.c.l.b16 %v1501
    %v1672 = vunpack.c.h.b16 %v1501
    %v1673 = vunpack.c.l.b16 %v1502
    %v1674 = vunpack.c.h.b16 %v1502
    %v1675 = vunpack.c.l.b16 %v1503
    %v1676 = vunpack.c.h.b16 %v1503
    %v1677 = vunpack.c.l.b16 %v1504
    %v1678 = vunpack.c.h.b16 %v1504
    %v1679 = vunpack.c.l.b16 %v1505
    %v1680 = vunpack.c.h.b16 %v1505
    %v1681 = vunpack.c.l.b16 %v1506
    %v1682 = vunpack.c.h.b16 %v1506
    %v1683 = vunpack.c.l.b16 %v1507
    %v1684 = vunpack.c.h.b16 %v1507
    %v1685 = vunpack.c.l.b16 %v1508
    %v1686 = vunpack.c.h.b16 %v1508
    %v1687 = vunpack.c.l.b16 %v1509
    %v1688 = vunpack.c.h.b16 %v1509
    %v1689 = vunpack.c.l.b16 %v1510
    %v1690 = vunpack.c.h.b16 %v1510
    %v1691 = vpack.c.b16 %v1643, %v1627
    %v1692 = vpack.c.b16 %v1644, %v1628
    %v1693 = vpack.c.b16 %v1645, %v1629
    %v1694 = vpack.c.b16 %v1646, %v1630
    %v1695 = vpack.c.b16 %v1647, %v1631
    %v1696 = vpack.c.b16 %v1648, %v1632
    %v1697 = vpack.c.b16 %v1649, %v1633
    %v1698 = vpack.c.b16 %v1650, %v1634
    %v1699 = vpack.c.b16 %v1651, %v1635
    %v1700 = vpack.c.b16 %v1652, %v1636
    %v1701 = vpack.c.b16 %v1653, %v1637
    %v1702 = vpack.c.b16 %v1654, %v1638
    %v1703 = vpack.c.b16 %v1655, %v1639
    %v1704 = vpack.c.b16 %v1656, %v1640
    %v1705 = vpack.c.b16 %v1657, %v1641
    %v1706 = vpack.c.b16 %v1658, %v1642
    %v1707 = vpack.c.b16 %v1675, %v1659
    %v1708 = vpack.c.b16 %v1676, %v1660
    %v1709 = vpack.c.b16 %v1677, %v1661
    %v1710 = vpack.c.b16 %v1678, %v1662
    %v1711 = vpack.c.b16 %v1679, %v1663
    %v1712 = vpack.c.b16 %v1680, %v1664
    %v1713 = vpack.c.b16 %v1681, %v1665
    %v1714 = vpack.c.b16 %v1682, %v1666
    %v1715 = vpack.c.b16 %v1683, %v1667
    %v1716 = vpack.c.b16 %v1684, %v1668
    %v1717 = vpack.c.b16 %v1685, %v1669
    %v1718 = vpack.c.b16 %v1686, %v1670
    %v1719 = vpack.c.b16 %v1687, %v1671
    %v1720 = vpack.c.b16 %v1688, %v1672
    %v1721 = vpack.c.b16 %v1689, %v1673
    %v1722 = vpack.c.b16 %v1690, %v1674
    %v1756 = vsel %vm140, %v1477, 0
    %v1759 = vsel %vm140, %v1478, 0
    %1761 = vmatprep.subr.bf16.mxu0 %v1692
    %1762 = vmatpush1.bf16.msra.mxu0 %v1691
    %1763 = vmatprep.subr.bf16.mxu0 %v1708
    %1764 = vmatpush1.bf16.msra.mxu0 %v1707
    %1765 = vmatprep.subr.bf16.mxu0 0
    %1766 = vmatpush1.bf16.msra.mxu0 0
    %1767 = vmatprep.subr.bf16.mxu0 0
    %1768 = vmatpush1.bf16.msra.mxu0 0
    %1769 = vmatprep.subr.bf16.mxu0 0
    %1770 = vmatpush1.bf16.msra.mxu0 0
    %1771 = vmatprep.subr.bf16.mxu0 0
    %1772 = vmatpush1.bf16.msra.mxu0 0
    %1773 = vmatprep.subr.bf16.mxu0 0
    %1774 = vmatpush1.bf16.msra.mxu0 0
    %1775 = vmatprep.subr.bf16.mxu0 0
    %1776 = vmatpush1.bf16.msra.mxu0 0
    %1777 = vmatprep.subr.bf16.mxu0 0
    %1778 = vmatpush1.bf16.msra.mxu0 0
    %1779 = vmatprep.subr.bf16.mxu0 0
    %1780 = vmatpush1.bf16.msra.mxu0 0
    %1781 = vmatprep.subr.bf16.mxu0 0
    %1782 = vmatpush1.bf16.msra.mxu0 0
    %1783 = vmatprep.subr.bf16.mxu0 0
    %1784 = vmatpush1.bf16.msra.mxu0 0
    %1785 = vmatprep.subr.bf16.mxu0 0
    %1786 = vmatpush1.bf16.msra.mxu0 0
    %1787 = vmatprep.subr.bf16.mxu0 0
    %1788 = vmatpush1.bf16.msra.mxu0 0
    %1789 = vmatprep.subr.bf16.mxu0 0
    %1790 = vmatpush1.bf16.msra.mxu0 0
    %1791 = vmatprep.subr.bf16.mxu0 0
    %1792 = vmatpush1.bf16.msra.mxu0 0
    %1793 = vmatprep.mubr.bf16.mxu0 0
    %1794 = vmatmul.mubr.bf16.gmra.mrb[0].mxu0 %v1756
    %v1795 = vpop.f32.mrb[0].mxu0
    %v1796 = vadd.f32 %v1518, %v1795
    %v1797 = vpop.f32.mrb[0].mxu0
    %v1798 = vadd.f32 %v1522, %v1797
    %v1799 = vpop.f32.mrb[0].mxu0
    %v1800 = vadd.f32 %v1518, %v1799
    %v1801 = vpop.f32.mrb[0].mxu0
    %v1802 = vadd.f32 %v1522, %v1801
    %1803 = vmatprep.mubr.bf16.mxu0 0
    %1804 = vmatmul.mubr.bf16.gmra.mrb[0].mxu0 %v1759
    %v1805 = vpop.f32.mrb[0].mxu0
    %v1806 = vadd.f32 %v1518, %v1805
    %v1807 = vpop.f32.mrb[0].mxu0
    %v1808 = vadd.f32 %v1522, %v1807
    %v1809 = vpop.f32.mrb[0].mxu0
    %v1810 = vadd.f32 %v1518, %v1809
    %v1811 = vpop.f32.mrb[0].mxu0
    %v1812 = vadd.f32 %v1522, %v1811
    %1813 = vdwg.mxu0
    %1814 = vmatprep.subr.bf16.mxu0 %v1694
    %1815 = vmatpush1.bf16.msra.mxu0 %v1693
    %1816 = vmatprep.subr.bf16.mxu0 %v1710
    %1817 = vmatpush1.bf16.msra.mxu0 %v1709
    %1818 = vmatprep.subr.bf16.mxu0 0
    %1819 = vmatpush1.bf16.msra.mxu0 0
    %1820 = vmatprep.subr.bf16.mxu0 0
    %1821 = vmatpush1.bf16.msra.mxu0 0
    %1822 = vmatprep.subr.bf16.mxu0 0
    %1823 = vmatpush1.bf16.msra.mxu0 0
    %1824 = vmatprep.subr.bf16.mxu0 0
    %1825 = vmatpush1.bf16.msra.mxu0 0
    %1826 = vmatprep.subr.bf16.mxu0 0
    %1827 = vmatpush1.bf16.msra.mxu0 0
    %1828 = vmatprep.subr.bf16.mxu0 0
    %1829 = vmatpush1.bf16.msra.mxu0 0
    %1830 = vmatprep.subr.bf16.mxu0 0
    %1831 = vmatpush1.bf16.msra.mxu0 0
    %1832 = vmatprep.subr.bf16.mxu0 0
    %1833 = vmatpush1.bf16.msra.mxu0 0
    %1834 = vmatprep.subr.bf16.mxu0 0
    %1835 = vmatpush1.bf16.msra.mxu0 0
    %1836 = vmatprep.subr.bf16.mxu0 0
    %1837 = vmatpush1.bf16.msra.mxu0 0
    %1838 = vmatprep.subr.bf16.mxu0 0
    %1839 = vmatpush1.bf16.msra.mxu0 0
    %1840 = vmatprep.subr.bf16.mxu0 0
    %1841 = vmatpush1.bf16.msra.mxu0 0
    %1842 = vmatprep.subr.bf16.mxu0 0
    %1843 = vmatpush1.bf16.msra.mxu0 0
    %1844 = vmatprep.subr.bf16.mxu0 0
    %1845 = vmatpush1.bf16.msra.mxu0 0
    %1846 = vmatprep.mubr.bf16.mxu0 0
    %1847 = vmatmul.mubr.bf16.gmra.mrb[0].mxu0 %v1756
    %v1848 = vpop.f32.mrb[0].mxu0
    %v1849 = vadd.f32 %v1526, %v1848
    %v1850 = vpop.f32.mrb[0].mxu0
    %v1851 = vadd.f32 %v1530, %v1850
    %v1852 = vpop.f32.mrb[0].mxu0
    %v1853 = vadd.f32 %v1526, %v1852
    %v1854 = vpop.f32.mrb[0].mxu0
    %v1855 = vadd.f32 %v1530, %v1854
    %1856 = vmatprep.mubr.bf16.mxu0 0
    %1857 = vmatmul.mubr.bf16.gmra.mrb[0].mxu0 %v1759
    %v1858 = vpop.f32.mrb[0].mxu0
    %v1859 = vadd.f32 %v1526, %v1858
    %v1860 = vpop.f32.mrb[0].mxu0
    %v1861 = vadd.f32 %v1530, %v1860
    %v1862 = vpop.f32.mrb[0].mxu0
    %v1863 = vadd.f32 %v1526, %v1862
    %v1864 = vpop.f32.mrb[0].mxu0
    %v1865 = vadd.f32 %v1530, %v1864
    %1866 = vdwg.mxu0
    %1867 = vmatprep.subr.bf16.mxu0 %v1696
    %1868 = vmatpush1.bf16.msra.mxu0 %v1695
    %1869 = vmatprep.subr.bf16.mxu0 %v1712
    %1870 = vmatpush1.bf16.msra.mxu0 %v1711
    %1871 = vmatprep.subr.bf16.mxu0 0
    %1872 = vmatpush1.bf16.msra.mxu0 0
    %1873 = vmatprep.subr.bf16.mxu0 0
    %1874 = vmatpush1.bf16.msra.mxu0 0
    %1875 = vmatprep.subr.bf16.mxu0 0
    %1876 = vmatpush1.bf16.msra.mxu0 0
    %1877 = vmatprep.subr.bf16.mxu0 0
    %1878 = vmatpush1.bf16.msra.mxu0 0
    %1879 = vmatprep.subr.bf16.mxu0 0
    %1880 = vmatpush1.bf16.msra.mxu0 0
    %1881 = vmatprep.subr.bf16.mxu0 0
    %1882 = vmatpush1.bf16.msra.mxu0 0
    %1883 = vmatprep.subr.bf16.mxu0 0
    %1884 = vmatpush1.bf16.msra.mxu0 0
    %1885 = vmatprep.subr.bf16.mxu0 0
    %1886 = vmatpush1.bf16.msra.mxu0 0
    %1887 = vmatprep.subr.bf16.mxu0 0
    %1888 = vmatpush1.bf16.msra.mxu0 0
    %1889 = vmatprep.subr.bf16.mxu0 0
    %1890 = vmatpush1.bf16.msra.mxu0 0
    %1891 = vmatprep.subr.bf16.mxu0 0
    %1892 = vmatpush1.bf16.msra.mxu0 0
    %1893 = vmatprep.subr.bf16.mxu0 0
    %1894 = vmatpush1.bf16.msra.mxu0 0
    %1895 = vmatprep.subr.bf16.mxu0 0
    %1896 = vmatpush1.bf16.msra.mxu0 0
    %1897 = vmatprep.subr.bf16.mxu0 0
    %1898 = vmatpush1.bf16.msra.mxu0 0
    %1899 = vmatprep.mubr.bf16.mxu0 0
    %1900 = vmatmul.mubr.bf16.gmra.mrb[0].mxu0 %v1756
    %v1901 = vpop.f32.mrb[0].mxu0
    %v1902 = vadd.f32 %v1534, %v1901
    %v1903 = vpop.f32.mrb[0].mxu0
    %v1904 = vadd.f32 %v1538, %v1903
    %v1905 = vpop.f32.mrb[0].mxu0
    %v1906 = vadd.f32 %v1534, %v1905
    %v1907 = vpop.f32.mrb[0].mxu0
    %v1908 = vadd.f32 %v1538, %v1907
    %1909 = vmatprep.mubr.bf16.mxu0 0
    %1910 = vmatmul.mubr.bf16.gmra.mrb[0].mxu0 %v1759
    %v1911 = vpop.f32.mrb[0].mxu0
    %v1912 = vadd.f32 %v1534, %v1911
    %v1913 = vpop.f32.mrb[0].mxu0
    %v1914 = vadd.f32 %v1538, %v1913
    %v1915 = vpop.f32.mrb[0].mxu0
    %v1916 = vadd.f32 %v1534, %v1915
    %v1917 = vpop.f32.mrb[0].mxu0
    %v1918 = vadd.f32 %v1538, %v1917
    %1919 = vdwg.mxu0
    %1920 = vmatprep.subr.bf16.mxu0 %v1698
    %1921 = vmatpush1.bf16.msra.mxu0 %v1697
    %1922 = vmatprep.subr.bf16.mxu0 %v1714
    %1923 = vmatpush1.bf16.msra.mxu0 %v1713
    %1924 = vmatprep.subr.bf16.mxu0 0
    %1925 = vmatpush1.bf16.msra.mxu0 0
    %1926 = vmatprep.subr.bf16.mxu0 0
    %1927 = vmatpush1.bf16.msra.mxu0 0
    %1928 = vmatprep.subr.bf16.mxu0 0
    %1929 = vmatpush1.bf16.msra.mxu0 0
    %1930 = vmatprep.subr.bf16.mxu0 0
    %1931 = vmatpush1.bf16.msra.mxu0 0
    %1932 = vmatprep.subr.bf16.mxu0 0
    %1933 = vmatpush1.bf16.msra.mxu0 0
    %1934 = vmatprep.subr.bf16.mxu0 0
    %1935 = vmatpush1.bf16.msra.mxu0 0
    %1936 = vmatprep.subr.bf16.mxu0 0
    %1937 = vmatpush1.bf16.msra.mxu0 0
    %1938 = vmatprep.subr.bf16.mxu0 0
    %1939 = vmatpush1.bf16.msra.mxu0 0
    %1940 = vmatprep.subr.bf16.mxu0 0
    %1941 = vmatpush1.bf16.msra.mxu0 0
    %1942 = vmatprep.subr.bf16.mxu0 0
    %1943 = vmatpush1.bf16.msra.mxu0 0
    %1944 = vmatprep.subr.bf16.mxu0 0
    %1945 = vmatpush1.bf16.msra.mxu0 0
    %1946 = vmatprep.subr.bf16.mxu0 0
    %1947 = vmatpush1.bf16.msra.mxu0 0
    %1948 = vmatprep.subr.bf16.mxu0 0
    %1949 = vmatpush1.bf16.msra.mxu0 0
    %1950 = vmatprep.subr.bf16.mxu0 0
    %1951 = vmatpush1.bf16.msra.mxu0 0
    %1952 = vmatprep.mubr.bf16.mxu0 0
    %1953 = vmatmul.mubr.bf16.gmra.mrb[0].mxu0 %v1756
    %v1954 = vpop.f32.mrb[0].mxu0
    %v1955 = vadd.f32 %v1542, %v1954
    %v1956 = vpop.f32.mrb[0].mxu0
    %v1957 = vadd.f32 %v1546, %v1956
    %v1958 = vpop.f32.mrb[0].mxu0
    %v1959 = vadd.f32 %v1542, %v1958
    %v1960 = vpop.f32.mrb[0].mxu0
    %v1961 = vadd.f32 %v1546, %v1960
    %1962 = vmatprep.mubr.bf16.mxu0 0
    %1963 = vmatmul.mubr.bf16.gmra.mrb[0].mxu0 %v1759
    %v1964 = vpop.f32.mrb[0].mxu0
    %v1965 = vadd.f32 %v1542, %v1964
    %v1966 = vpop.f32.mrb[0].mxu0
    %v1967 = vadd.f32 %v1546, %v1966
    %v1968 = vpop.f32.mrb[0].mxu0
    %v1969 = vadd.f32 %v1542, %v1968
    %v1970 = vpop.f32.mrb[0].mxu0
    %v1971 = vadd.f32 %v1546, %v1970
    %1972 = vdwg.mxu0
    %1973 = vmatprep.subr.bf16.mxu0 %v1700
    %1974 = vmatpush1.bf16.msra.mxu0 %v1699
    %1975 = vmatprep.subr.bf16.mxu0 %v1716
    %1976 = vmatpush1.bf16.msra.mxu0 %v1715
    %1977 = vmatprep.subr.bf16.mxu0 0
    %1978 = vmatpush1.bf16.msra.mxu0 0
    %1979 = vmatprep.subr.bf16.mxu0 0
    %1980 = vmatpush1.bf16.msra.mxu0 0
    %1981 = vmatprep.subr.bf16.mxu0 0
    %1982 = vmatpush1.bf16.msra.mxu0 0
    %1983 = vmatprep.subr.bf16.mxu0 0
    %1984 = vmatpush1.bf16.msra.mxu0 0
    %1985 = vmatprep.subr.bf16.mxu0 0
    %1986 = vmatpush1.bf16.msra.mxu0 0
    %1987 = vmatprep.subr.bf16.mxu0 0
    %1988 = vmatpush1.bf16.msra.mxu0 0
    %1989 = vmatprep.subr.bf16.mxu0 0
    %1990 = vmatpush1.bf16.msra.mxu0 0
    %1991 = vmatprep.subr.bf16.mxu0 0
    %1992 = vmatpush1.bf16.msra.mxu0 0
    %1993 = vmatprep.subr.bf16.mxu0 0
    %1994 = vmatpush1.bf16.msra.mxu0 0
    %1995 = vmatprep.subr.bf16.mxu0 0
    %1996 = vmatpush1.bf16.msra.mxu0 0
    %1997 = vmatprep.subr.bf16.mxu0 0
    %1998 = vmatpush1.bf16.msra.mxu0 0
    %1999 = vmatprep.subr.bf16.mxu0 0
    %2000 = vmatpush1.bf16.msra.mxu0 0
    %2001 = vmatprep.subr.bf16.mxu0 0
    %2002 = vmatpush1.bf16.msra.mxu0 0
    %2003 = vmatprep.subr.bf16.mxu0 0
    %2004 = vmatpush1.bf16.msra.mxu0 0
    %2005 = vmatprep.mubr.bf16.mxu0 0
    %2006 = vmatmul.mubr.bf16.gmra.mrb[0].mxu0 %v1756
    %v2007 = vpop.f32.mrb[0].mxu0
    %v2008 = vadd.f32 %v1550, %v2007
    %v2009 = vpop.f32.mrb[0].mxu0
    %v2010 = vadd.f32 %v1554, %v2009
    %v2011 = vpop.f32.mrb[0].mxu0
    %v2012 = vadd.f32 %v1550, %v2011
    %v2013 = vpop.f32.mrb[0].mxu0
    %v2014 = vadd.f32 %v1554, %v2013
    %2015 = vmatprep.mubr.bf16.mxu0 0
    %2016 = vmatmul.mubr.bf16.gmra.mrb[0].mxu0 %v1759
    %v2017 = vpop.f32.mrb[0].mxu0
    %v2018 = vadd.f32 %v1550, %v2017
    %v2019 = vpop.f32.mrb[0].mxu0
    %v2020 = vadd.f32 %v1554, %v2019
    %v2021 = vpop.f32.mrb[0].mxu0
    %v2022 = vadd.f32 %v1550, %v2021
    %v2023 = vpop.f32.mrb[0].mxu0
    %v2024 = vadd.f32 %v1554, %v2023
    %2025 = vdwg.mxu0
    %2026 = vmatprep.subr.bf16.mxu0 %v1702
    %2027 = vmatpush1.bf16.msra.mxu0 %v1701
    %2028 = vmatprep.subr.bf16.mxu0 %v1718
    %2029 = vmatpush1.bf16.msra.mxu0 %v1717
    %2030 = vmatprep.subr.bf16.mxu0 0
    %2031 = vmatpush1.bf16.msra.mxu0 0
    %2032 = vmatprep.subr.bf16.mxu0 0
    %2033 = vmatpush1.bf16.msra.mxu0 0
    %2034 = vmatprep.subr.bf16.mxu0 0
    %2035 = vmatpush1.bf16.msra.mxu0 0
    %2036 = vmatprep.subr.bf16.mxu0 0
    %2037 = vmatpush1.bf16.msra.mxu0 0
    %2038 = vmatprep.subr.bf16.mxu0 0
    %2039 = vmatpush1.bf16.msra.mxu0 0
    %2040 = vmatprep.subr.bf16.mxu0 0
    %2041 = vmatpush1.bf16.msra.mxu0 0
    %2042 = vmatprep.subr.bf16.mxu0 0
    %2043 = vmatpush1.bf16.msra.mxu0 0
    %2044 = vmatprep.subr.bf16.mxu0 0
    %2045 = vmatpush1.bf16.msra.mxu0 0
    %2046 = vmatprep.subr.bf16.mxu0 0
    %2047 = vmatpush1.bf16.msra.mxu0 0
    %2048 = vmatprep.subr.bf16.mxu0 0
    %2049 = vmatpush1.bf16.msra.mxu0 0
    %2050 = vmatprep.subr.bf16.mxu0 0
    %2051 = vmatpush1.bf16.msra.mxu0 0
    %2052 = vmatprep.subr.bf16.mxu0 0
    %2053 = vmatpush1.bf16.msra.mxu0 0
    %2054 = vmatprep.subr.bf16.mxu0 0
    %2055 = vmatpush1.bf16.msra.mxu0 0
    %2056 = vmatprep.subr.bf16.mxu0 0
    %2057 = vmatpush1.bf16.msra.mxu0 0
    %2058 = vmatprep.mubr.bf16.mxu0 0
    %2059 = vmatmul.mubr.bf16.gmra.mrb[0].mxu0 %v1756
    %v2060 = vpop.f32.mrb[0].mxu0
    %v2061 = vadd.f32 %v1558, %v2060
    %v2062 = vpop.f32.mrb[0].mxu0
    %v2063 = vadd.f32 %v1562, %v2062
    %v2064 = vpop.f32.mrb[0].mxu0
    %v2065 = vadd.f32 %v1558, %v2064
    %v2066 = vpop.f32.mrb[0].mxu0
    %v2067 = vadd.f32 %v1562, %v2066
    %2068 = vmatprep.mubr.bf16.mxu0 0
    %2069 = vmatmul.mubr.bf16.gmra.mrb[0].mxu0 %v1759
    %v2070 = vpop.f32.mrb[0].mxu0
    %v2071 = vadd.f32 %v1558, %v2070
    %v2072 = vpop.f32.mrb[0].mxu0
    %v2073 = vadd.f32 %v1562, %v2072
    %v2074 = vpop.f32.mrb[0].mxu0
    %v2075 = vadd.f32 %v1558, %v2074
    %v2076 = vpop.f32.mrb[0].mxu0
    %v2077 = vadd.f32 %v1562, %v2076
    %2078 = vdwg.mxu0
    %2079 = vmatprep.subr.bf16.mxu0 %v1704
    %2080 = vmatpush1.bf16.msra.mxu0 %v1703
    %2081 = vmatprep.subr.bf16.mxu0 %v1720
    %2082 = vmatpush1.bf16.msra.mxu0 %v1719
    %2083 = vmatprep.subr.bf16.mxu0 0
    %2084 = vmatpush1.bf16.msra.mxu0 0
    %2085 = vmatprep.subr.bf16.mxu0 0
    %2086 = vmatpush1.bf16.msra.mxu0 0
    %2087 = vmatprep.subr.bf16.mxu0 0
    %2088 = vmatpush1.bf16.msra.mxu0 0
    %2089 = vmatprep.subr.bf16.mxu0 0
    %2090 = vmatpush1.bf16.msra.mxu0 0
    %2091 = vmatprep.subr.bf16.mxu0 0
    %2092 = vmatpush1.bf16.msra.mxu0 0
    %2093 = vmatprep.subr.bf16.mxu0 0
    %2094 = vmatpush1.bf16.msra.mxu0 0
    %2095 = vmatprep.subr.bf16.mxu0 0
    %2096 = vmatpush1.bf16.msra.mxu0 0
    %2097 = vmatprep.subr.bf16.mxu0 0
    %2098 = vmatpush1.bf16.msra.mxu0 0
    %2099 = vmatprep.subr.bf16.mxu0 0
    %2100 = vmatpush1.bf16.msra.mxu0 0
    %2101 = vmatprep.subr.bf16.mxu0 0
    %2102 = vmatpush1.bf16.msra.mxu0 0
    %2103 = vmatprep.subr.bf16.mxu0 0
    %2104 = vmatpush1.bf16.msra.mxu0 0
    %2105 = vmatprep.subr.bf16.mxu0 0
    %2106 = vmatpush1.bf16.msra.mxu0 0
    %2107 = vmatprep.subr.bf16.mxu0 0
    %2108 = vmatpush1.bf16.msra.mxu0 0
    %2109 = vmatprep.subr.bf16.mxu0 0
    %2110 = vmatpush1.bf16.msra.mxu0 0
    %2111 = vmatprep.mubr.bf16.mxu0 0
    %2112 = vmatmul.mubr.bf16.gmra.mrb[0].mxu0 %v1756
    %v2113 = vpop.f32.mrb[0].mxu0
    %v2114 = vadd.f32 %v1566, %v2113
    %v2115 = vpop.f32.mrb[0].mxu0
    %v2116 = vadd.f32 %v1570, %v2115
    %v2117 = vpop.f32.mrb[0].mxu0
    %v2118 = vadd.f32 %v1566, %v2117
    %v2119 = vpop.f32.mrb[0].mxu0
    %v2120 = vadd.f32 %v1570, %v2119
    %2121 = vmatprep.mubr.bf16.mxu0 0
    %2122 = vmatmul.mubr.bf16.gmra.mrb[0].mxu0 %v1759
    %v2123 = vpop.f32.mrb[0].mxu0
    %v2124 = vadd.f32 %v1566, %v2123
    %v2125 = vpop.f32.mrb[0].mxu0
    %v2126 = vadd.f32 %v1570, %v2125
    %v2127 = vpop.f32.mrb[0].mxu0
    %v2128 = vadd.f32 %v1566, %v2127
    %v2129 = vpop.f32.mrb[0].mxu0
    %v2130 = vadd.f32 %v1570, %v2129
    %2131 = vdwg.mxu0
    %2132 = vmatprep.subr.bf16.mxu0 %v1706
    %2133 = vmatpush1.bf16.msra.mxu0 %v1705
    %2134 = vmatprep.subr.bf16.mxu0 %v1722
    %2135 = vmatpush1.bf16.msra.mxu0 %v1721
    %2136 = vmatprep.subr.bf16.mxu0 0
    %2137 = vmatpush1.bf16.msra.mxu0 0
    %2138 = vmatprep.subr.bf16.mxu0 0
    %2139 = vmatpush1.bf16.msra.mxu0 0
    %2140 = vmatprep.subr.bf16.mxu0 0
    %2141 = vmatpush1.bf16.msra.mxu0 0
    %2142 = vmatprep.subr.bf16.mxu0 0
    %2143 = vmatpush1.bf16.msra.mxu0 0
    %2144 = vmatprep.subr.bf16.mxu0 0
    %2145 = vmatpush1.bf16.msra.mxu0 0
    %2146 = vmatprep.subr.bf16.mxu0 0
    %2147 = vmatpush1.bf16.msra.mxu0 0
    %2148 = vmatprep.subr.bf16.mxu0 0
    %2149 = vmatpush1.bf16.msra.mxu0 0
    %2150 = vmatprep.subr.bf16.mxu0 0
    %2151 = vmatpush1.bf16.msra.mxu0 0
    %2152 = vmatprep.subr.bf16.mxu0 0
    %2153 = vmatpush1.bf16.msra.mxu0 0
    %2154 = vmatprep.subr.bf16.mxu0 0
    %2155 = vmatpush1.bf16.msra.mxu0 0
    %2156 = vmatprep.subr.bf16.mxu0 0
    %2157 = vmatpush1.bf16.msra.mxu0 0
    %2158 = vmatprep.subr.bf16.mxu0 0
    %2159 = vmatpush1.bf16.msra.mxu0 0
    %2160 = vmatprep.subr.bf16.mxu0 0
    %2161 = vmatpush1.bf16.msra.mxu0 0
    %2162 = vmatprep.subr.bf16.mxu0 0
    %2163 = vmatpush1.bf16.msra.mxu0 0
    %2164 = vmatprep.mubr.bf16.mxu0 0
    %2165 = vmatmul.mubr.bf16.gmra.mrb[0].mxu0 %v1756
    %v2166 = vpop.f32.mrb[0].mxu0
    %v2167 = vadd.f32 %v1574, %v2166
    %v2168 = vpop.f32.mrb[0].mxu0
    %v2169 = vadd.f32 %v1578, %v2168
    %v2170 = vpop.f32.mrb[0].mxu0
    %v2171 = vadd.f32 %v1574, %v2170
    %v2172 = vpop.f32.mrb[0].mxu0
    %v2173 = vadd.f32 %v1578, %v2172
    %2174 = vmatprep.mubr.bf16.mxu0 0
    %2175 = vmatmul.mubr.bf16.gmra.mrb[0].mxu0 %v1759
    %v2176 = vpop.f32.mrb[0].mxu0
    %v2177 = vadd.f32 %v1574, %v2176
    %v2178 = vpop.f32.mrb[0].mxu0
    %v2179 = vadd.f32 %v1578, %v2178
    %v2180 = vpop.f32.mrb[0].mxu0
    %v2181 = vadd.f32 %v1574, %v2180
    %v2182 = vpop.f32.mrb[0].mxu0
    %v2183 = vadd.f32 %v1578, %v2182
    %2184 = vdwg.mxu0
    %v2185 = vmax.f32 %v1796, 0.0
    %v2186 = vmax.f32 %v1798, 0.0
    %v2187 = vmax.f32 %v1849, 0.0
    %v2188 = vmax.f32 %v1851, 0.0
    %v2189 = vmax.f32 %v1902, 0.0
    %v2190 = vmax.f32 %v1904, 0.0
    %v2191 = vmax.f32 %v1955, 0.0
    %v2192 = vmax.f32 %v1957, 0.0
    %v2193 = vmax.f32 %v2008, 0.0
    %v2194 = vmax.f32 %v2010, 0.0
    %v2195 = vmax.f32 %v2061, 0.0
    %v2196 = vmax.f32 %v2063, 0.0
    %v2197 = vmax.f32 %v2114, 0.0
    %v2198 = vmax.f32 %v2116, 0.0
    %v2199 = vmax.f32 %v2167, 0.0
    %v2200 = vmax.f32 %v2169, 0.0
    %v2201 = vmax.f32 %v1800, 0.0
    %v2202 = vmax.f32 %v1802, 0.0
    %v2203 = vmax.f32 %v1853, 0.0
    %v2204 = vmax.f32 %v1855, 0.0
    %v2205 = vmax.f32 %v1906, 0.0
    %v2206 = vmax.f32 %v1908, 0.0
    %v2207 = vmax.f32 %v1959, 0.0
    %v2208 = vmax.f32 %v1961, 0.0
    %v2209 = vmax.f32 %v2012, 0.0
    %v2210 = vmax.f32 %v2014, 0.0
    %v2211 = vmax.f32 %v2065, 0.0
    %v2212 = vmax.f32 %v2067, 0.0
    %v2213 = vmax.f32 %v2118, 0.0
    %v2214 = vmax.f32 %v2120, 0.0
    %v2215 = vmax.f32 %v2171, 0.0
    %v2216 = vmax.f32 %v2173, 0.0
    %v2217 = vmax.f32 %v1806, 0.0
    %v2218 = vmax.f32 %v1808, 0.0
    %v2219 = vmax.f32 %v1859, 0.0
    %v2220 = vmax.f32 %v1861, 0.0
    %v2221 = vmax.f32 %v1912, 0.0
    %v2222 = vmax.f32 %v1914, 0.0
    %v2223 = vmax.f32 %v1965, 0.0
    %v2224 = vmax.f32 %v1967, 0.0
    %v2225 = vmax.f32 %v2018, 0.0
    %v2226 = vmax.f32 %v2020, 0.0
    %v2227 = vmax.f32 %v2071, 0.0
    %v2228 = vmax.f32 %v2073, 0.0
    %v2229 = vmax.f32 %v2124, 0.0
    %v2230 = vmax.f32 %v2126, 0.0
    %v2231 = vmax.f32 %v2177, 0.0
    %v2232 = vmax.f32 %v2179, 0.0
    %v2233 = vmax.f32 %v1810, 0.0
    %v2234 = vmax.f32 %v1812, 0.0
    %v2235 = vmax.f32 %v1863, 0.0
    %v2236 = vmax.f32 %v1865, 0.0
    %v2237 = vmax.f32 %v1916, 0.0
    %v2238 = vmax.f32 %v1918, 0.0
    %v2239 = vmax.f32 %v1969, 0.0
    %v2240 = vmax.f32 %v1971, 0.0
    %v2241 = vmax.f32 %v2022, 0.0
    %v2242 = vmax.f32 %v2024, 0.0
    %v2243 = vmax.f32 %v2075, 0.0
    %v2244 = vmax.f32 %v2077, 0.0
    %v2245 = vmax.f32 %v2128, 0.0
    %v2246 = vmax.f32 %v2130, 0.0
    %v2247 = vmax.f32 %v2181, 0.0
    %v2248 = vmax.f32 %v2183, 0.0
    %v2249 = vpack.c.bf16 %v2201, %v2185
    %v2250 = vpack.c.bf16 %v2202, %v2186
    %v2251 = vpack.c.bf16 %v2203, %v2187
    %v2252 = vpack.c.bf16 %v2204, %v2188
    %v2253 = vpack.c.bf16 %v2205, %v2189
    %v2254 = vpack.c.bf16 %v2206, %v2190
    %v2255 = vpack.c.bf16 %v2207, %v2191
    %v2256 = vpack.c.bf16 %v2208, %v2192
    %v2257 = vpack.c.bf16 %v2209, %v2193
    %v2258 = vpack.c.bf16 %v2210, %v2194
    %v2259 = vpack.c.bf16 %v2211, %v2195
    %v2260 = vpack.c.bf16 %v2212, %v2196
    %v2261 = vpack.c.bf16 %v2213, %v2197
    %v2262 = vpack.c.bf16 %v2214, %v2198
    %v2263 = vpack.c.bf16 %v2215, %v2199
    %v2264 = vpack.c.bf16 %v2216, %v2200
    %v2265 = vpack.c.bf16 %v2233, %v2217
    %v2266 = vpack.c.bf16 %v2234, %v2218
    %v2267 = vpack.c.bf16 %v2235, %v2219
    %v2268 = vpack.c.bf16 %v2236, %v2220
    %v2269 = vpack.c.bf16 %v2237, %v2221
    %v2270 = vpack.c.bf16 %v2238, %v2222
    %v2271 = vpack.c.bf16 %v2239, %v2223
    %v2272 = vpack.c.bf16 %v2240, %v2224
    %v2273 = vpack.c.bf16 %v2241, %v2225
    %v2274 = vpack.c.bf16 %v2242, %v2226
    %v2275 = vpack.c.bf16 %v2243, %v2227
    %v2276 = vpack.c.bf16 %v2244, %v2228
    %v2277 = vpack.c.bf16 %v2245, %v2229
    %v2278 = vpack.c.bf16 %v2246, %v2230
    %v2279 = vpack.c.bf16 %v2247, %v2231
    %v2280 = vpack.c.bf16 %v2248, %v2232
    %v2281 = vld [vmem:[#allocation8] sm:$0xf]
    %v2282 = vld [vmem:[#allocation8 + $0x4] sm:$0xf]
    %v2283 = vld [vmem:[#allocation8 + $0x8] sm:$0xf]
    %v2284 = vld [vmem:[#allocation8 + $0xc] sm:$0xf]
    %v2285 = vld [vmem:[#allocation8 + $0x10] sm:$0xf]
    %v2286 = vld [vmem:[#allocation8 + $0x14] sm:$0xf]
    %v2287 = vld [vmem:[#allocation8 + $0x18] sm:$0xf]
    %v2288 = vld [vmem:[#allocation8 + $0x1c] sm:$0xf]
    %v2289 = vld [vmem:[#allocation8 + $0x20] sm:$0xf]
    %v2290 = vld [vmem:[#allocation8 + $0x24] sm:$0xf]
    %v2291 = vld [vmem:[#allocation8 + $0x28] sm:$0xf]
    %v2292 = vld [vmem:[#allocation8 + $0x2c] sm:$0xf]
    %v2293 = vld [vmem:[#allocation8 + $0x30] sm:$0xf]
    %v2294 = vld [vmem:[#allocation8 + $0x34] sm:$0xf]
    %v2295 = vld [vmem:[#allocation8 + $0x38] sm:$0xf]
    %v2296 = vld [vmem:[#allocation8 + $0x3c] sm:$0xf]
    %v2297 = vld [vmem:[#allocation8 + $0x40] sm:$0xf]
    %v2298 = vld [vmem:[#allocation8 + $0x44] sm:$0xf]
    %v2299 = vld [vmem:[#allocation8 + $0x48] sm:$0xf]
    %v2300 = vld [vmem:[#allocation8 + $0x4c] sm:$0xf]
    %v2301 = vld [vmem:[#allocation8 + $0x50] sm:$0xf]
    %v2302 = vld [vmem:[#allocation8 + $0x54] sm:$0xf]
    %v2303 = vld [vmem:[#allocation8 + $0x58] sm:$0xf]
    %v2304 = vld [vmem:[#allocation8 + $0x5c] sm:$0xf]
    %v2305 = vld [vmem:[#allocation8 + $0x60] sm:$0xf]
    %v2306 = vld [vmem:[#allocation8 + $0x64] sm:$0xf]
    %v2307 = vld [vmem:[#allocation8 + $0x68] sm:$0xf]
    %v2308 = vld [vmem:[#allocation8 + $0x6c] sm:$0xf]
    %v2309 = vld [vmem:[#allocation8 + $0x70] sm:$0xf]
    %v2310 = vld [vmem:[#allocation8 + $0x74] sm:$0xf]
    %v2311 = vld [vmem:[#allocation8 + $0x78] sm:$0xf]
    %v2312 = vld [vmem:[#allocation8 + $0x7c] sm:$0xf]
    %v2313 = vld [vmem:[#allocation8 + $0x80] sm:$0xf]
    %v2314 = vld [vmem:[#allocation8 + $0x84] sm:$0xf]
    %v2315 = vld [vmem:[#allocation8 + $0x88] sm:$0xf]
    %v2316 = vld [vmem:[#allocation8 + $0x8c] sm:$0xf]
    %v2317 = vld [vmem:[#allocation8 + $0x90] sm:$0xf]
    %v2318 = vld [vmem:[#allocation8 + $0x94] sm:$0xf]
    %v2319 = vld [vmem:[#allocation8 + $0x98] sm:$0xf]
    %v2320 = vld [vmem:[#allocation8 + $0x9c] sm:$0xf]
    %v2321 = vld [vmem:[#allocation8 + $0xa0] sm:$0xf]
    %v2322 = vld [vmem:[#allocation8 + $0xa4] sm:$0xf]
    %v2323 = vld [vmem:[#allocation8 + $0xa8] sm:$0xf]
    %v2324 = vld [vmem:[#allocation8 + $0xac] sm:$0xf]
    %v2325 = vld [vmem:[#allocation8 + $0xb0] sm:$0xf]
    %v2326 = vld [vmem:[#allocation8 + $0xb4] sm:$0xf]
    %v2327 = vld [vmem:[#allocation8 + $0xb8] sm:$0xf]
    %v2328 = vld [vmem:[#allocation8 + $0xbc] sm:$0xf]
    %v2329 = vld [vmem:[#allocation8 + $0xc0] sm:$0xf]
    %v2330 = vld [vmem:[#allocation8 + $0xc4] sm:$0xf]
    %v2331 = vld [vmem:[#allocation8 + $0xc8] sm:$0xf]
    %v2332 = vld [vmem:[#allocation8 + $0xcc] sm:$0xf]
    %v2333 = vld [vmem:[#allocation8 + $0xd0] sm:$0xf]
    %v2334 = vld [vmem:[#allocation8 + $0xd4] sm:$0xf]
    %v2335 = vld [vmem:[#allocation8 + $0xd8] sm:$0xf]
    %v2336 = vld [vmem:[#allocation8 + $0xdc] sm:$0xf]
    %v2337 = vld [vmem:[#allocation8 + $0xe0] sm:$0xf]
    %v2338 = vld [vmem:[#allocation8 + $0xe4] sm:$0xf]
    %v2339 = vld [vmem:[#allocation8 + $0xe8] sm:$0xf]
    %v2340 = vld [vmem:[#allocation8 + $0xec] sm:$0xf]
    %v2341 = vld [vmem:[#allocation8 + $0xf0] sm:$0xf]
    %v2342 = vld [vmem:[#allocation8 + $0xf4] sm:$0xf]
    %v2343 = vld [vmem:[#allocation8 + $0xf8] sm:$0xf]
    %v2344 = vld [vmem:[#allocation8 + $0xfc] sm:$0xf]
    %v2345 = vld [vmem:[#allocation8 + $0x100] sm:$0xf]
    %v2346 = vld [vmem:[#allocation8 + $0x104] sm:$0xf]
    %v2347 = vld [vmem:[#allocation8 + $0x108] sm:$0xf]
    %v2348 = vld [vmem:[#allocation8 + $0x10c] sm:$0xf]
    %v2349 = vld [vmem:[#allocation8 + $0x110] sm:$0xf]
    %v2350 = vld [vmem:[#allocation8 + $0x114] sm:$0xf]
    %v2351 = vld [vmem:[#allocation8 + $0x118] sm:$0xf]
    %v2352 = vld [vmem:[#allocation8 + $0x11c] sm:$0xf]
    %v2353 = vld [vmem:[#allocation8 + $0x120] sm:$0xf]
    %v2354 = vld [vmem:[#allocation8 + $0x124] sm:$0xf]
    %v2355 = vld [vmem:[#allocation8 + $0x128] sm:$0xf]
    %v2356 = vld [vmem:[#allocation8 + $0x12c] sm:$0xf]
    %v2357 = vld [vmem:[#allocation8 + $0x130] sm:$0xf]
    %v2358 = vld [vmem:[#allocation8 + $0x134] sm:$0xf]
    %v2359 = vld [vmem:[#allocation8 + $0x138] sm:$0xf]
    %v2360 = vld [vmem:[#allocation8 + $0x13c] sm:$0xf]
    %v2361 = vld [vmem:[#allocation8 + $0x140] sm:$0xf]
    %v2362 = vld [vmem:[#allocation8 + $0x144] sm:$0xf]
    %v2363 = vld [vmem:[#allocation8 + $0x148] sm:$0xf]
    %v2364 = vld [vmem:[#allocation8 + $0x14c] sm:$0xf]
    %v2365 = vld [vmem:[#allocation8 + $0x150] sm:$0xf]
    %v2366 = vld [vmem:[#allocation8 + $0x154] sm:$0xf]
    %v2367 = vld [vmem:[#allocation8 + $0x158] sm:$0xf]
    %v2368 = vld [vmem:[#allocation8 + $0x15c] sm:$0xf]
    %v2369 = vld [vmem:[#allocation8 + $0x160] sm:$0xf]
    %v2370 = vld [vmem:[#allocation8 + $0x164] sm:$0xf]
    %v2371 = vld [vmem:[#allocation8 + $0x168] sm:$0xf]
    %v2372 = vld [vmem:[#allocation8 + $0x16c] sm:$0xf]
    %v2373 = vld [vmem:[#allocation8 + $0x170] sm:$0xf]
    %v2374 = vld [vmem:[#allocation8 + $0x174] sm:$0xf]
    %v2375 = vld [vmem:[#allocation8 + $0x178] sm:$0xf]
    %v2376 = vld [vmem:[#allocation8 + $0x17c] sm:$0xf]
    %v2377 = vld [vmem:[#allocation8 + $0x180] sm:$0xf]
    %v2378 = vld [vmem:[#allocation8 + $0x184] sm:$0xf]
    %v2379 = vld [vmem:[#allocation8 + $0x188] sm:$0xf]
    %v2380 = vld [vmem:[#allocation8 + $0x18c] sm:$0xf]
    %v2381 = vld [vmem:[#allocation8 + $0x190] sm:$0xf]
    %v2382 = vld [vmem:[#allocation8 + $0x194] sm:$0xf]
    %v2383 = vld [vmem:[#allocation8 + $0x198] sm:$0xf]
    %v2384 = vld [vmem:[#allocation8 + $0x19c] sm:$0xf]
    %v2385 = vld [vmem:[#allocation8 + $0x1a0] sm:$0xf]
    %v2386 = vld [vmem:[#allocation8 + $0x1a4] sm:$0xf]
    %v2387 = vld [vmem:[#allocation8 + $0x1a8] sm:$0xf]
    %v2388 = vld [vmem:[#allocation8 + $0x1ac] sm:$0xf]
    %v2389 = vld [vmem:[#allocation8 + $0x1b0] sm:$0xf]
    %v2390 = vld [vmem:[#allocation8 + $0x1b4] sm:$0xf]
    %v2391 = vld [vmem:[#allocation8 + $0x1b8] sm:$0xf]
    %v2392 = vld [vmem:[#allocation8 + $0x1bc] sm:$0xf]
    %v2393 = vld [vmem:[#allocation8 + $0x1c0] sm:$0xf]
    %v2394 = vld [vmem:[#allocation8 + $0x1c4] sm:$0xf]
    %v2395 = vld [vmem:[#allocation8 + $0x1c8] sm:$0xf]
    %v2396 = vld [vmem:[#allocation8 + $0x1cc] sm:$0xf]
    %v2397 = vld [vmem:[#allocation8 + $0x1d0] sm:$0xf]
    %v2398 = vld [vmem:[#allocation8 + $0x1d4] sm:$0xf]
    %v2399 = vld [vmem:[#allocation8 + $0x1d8] sm:$0xf]
    %v2400 = vld [vmem:[#allocation8 + $0x1dc] sm:$0xf]
    %v2401 = vld [vmem:[#allocation8 + $0x1e0] sm:$0xf]
    %v2402 = vld [vmem:[#allocation8 + $0x1e4] sm:$0xf]
    %v2403 = vld [vmem:[#allocation8 + $0x1e8] sm:$0xf]
    %v2404 = vld [vmem:[#allocation8 + $0x1ec] sm:$0xf]
    %v2405 = vld [vmem:[#allocation8 + $0x1f0] sm:$0xf]
    %v2406 = vld [vmem:[#allocation8 + $0x1f4] sm:$0xf]
    %v2407 = vld [vmem:[#allocation8 + $0x1f8] sm:$0xf]
    %v2408 = vld [vmem:[#allocation8 + $0x1fc] sm:$0xf]
    %v2409 = vld [vmem:[#allocation8 + $0x200] sm:$0xf]
    %v2410 = vld [vmem:[#allocation8 + $0x204] sm:$0xf]
    %v2411 = vld [vmem:[#allocation8 + $0x208] sm:$0xf]
    %v2412 = vld [vmem:[#allocation8 + $0x20c] sm:$0xf]
    %v2413 = vld [vmem:[#allocation8 + $0x210] sm:$0xf]
    %v2414 = vld [vmem:[#allocation8 + $0x214] sm:$0xf]
    %v2415 = vld [vmem:[#allocation8 + $0x218] sm:$0xf]
    %v2416 = vld [vmem:[#allocation8 + $0x21c] sm:$0xf]
    %v2417 = vld [vmem:[#allocation8 + $0x220] sm:$0xf]
    %v2418 = vld [vmem:[#allocation8 + $0x224] sm:$0xf]
    %v2419 = vld [vmem:[#allocation8 + $0x228] sm:$0xf]
    %v2420 = vld [vmem:[#allocation8 + $0x22c] sm:$0xf]
    %v2421 = vld [vmem:[#allocation8 + $0x230] sm:$0xf]
    %v2422 = vld [vmem:[#allocation8 + $0x234] sm:$0xf]
    %v2423 = vld [vmem:[#allocation8 + $0x238] sm:$0xf]
    %v2424 = vld [vmem:[#allocation8 + $0x23c] sm:$0xf]
    %v2425 = vld [vmem:[#allocation8 + $0x240] sm:$0xf]
    %v2426 = vld [vmem:[#allocation8 + $0x244] sm:$0xf]
    %v2427 = vld [vmem:[#allocation8 + $0x248] sm:$0xf]
    %v2428 = vld [vmem:[#allocation8 + $0x24c] sm:$0xf]
    %v2429 = vld [vmem:[#allocation8 + $0x250] sm:$0xf]
    %v2430 = vld [vmem:[#allocation8 + $0x254] sm:$0xf]
    %v2431 = vld [vmem:[#allocation8 + $0x258] sm:$0xf]
    %v2432 = vld [vmem:[#allocation8 + $0x25c] sm:$0xf]
    %v2433 = vld [vmem:[#allocation8 + $0x260] sm:$0xf]
    %v2434 = vld [vmem:[#allocation8 + $0x264] sm:$0xf]
    %v2435 = vld [vmem:[#allocation8 + $0x268] sm:$0xf]
    %v2436 = vld [vmem:[#allocation8 + $0x26c] sm:$0xf]
    %v2437 = vld [vmem:[#allocation8 + $0x270] sm:$0xf]
    %v2438 = vld [vmem:[#allocation8 + $0x274] sm:$0xf]
    %v2439 = vld [vmem:[#allocation8 + $0x278] sm:$0xf]
    %v2440 = vld [vmem:[#allocation8 + $0x27c] sm:$0xf]
    %v2441 = vld [vmem:[#allocation8 + $0x280] sm:$0xf]
    %v2442 = vld [vmem:[#allocation8 + $0x284] sm:$0xf]
    %v2443 = vld [vmem:[#allocation8 + $0x288] sm:$0xf]
    %v2444 = vld [vmem:[#allocation8 + $0x28c] sm:$0xf]
    %v2445 = vld [vmem:[#allocation8 + $0x290] sm:$0xf]
    %v2446 = vld [vmem:[#allocation8 + $0x294] sm:$0xf]
    %v2447 = vld [vmem:[#allocation8 + $0x298] sm:$0xf]
    %v2448 = vld [vmem:[#allocation8 + $0x29c] sm:$0xf]
    %v2449 = vld [vmem:[#allocation8 + $0x2a0] sm:$0xf]
    %v2450 = vld [vmem:[#allocation8 + $0x2a4] sm:$0xf]
    %v2451 = vld [vmem:[#allocation8 + $0x2a8] sm:$0xf]
    %v2452 = vld [vmem:[#allocation8 + $0x2ac] sm:$0xf]
    %v2453 = vld [vmem:[#allocation8 + $0x2b0] sm:$0xf]
    %v2454 = vld [vmem:[#allocation8 + $0x2b4] sm:$0xf]
    %v2455 = vld [vmem:[#allocation8 + $0x2b8] sm:$0xf]
    %v2456 = vld [vmem:[#allocation8 + $0x2bc] sm:$0xf]
    %v2457 = vld [vmem:[#allocation8 + $0x2c0] sm:$0xf]
    %v2458 = vld [vmem:[#allocation8 + $0x2c4] sm:$0xf]
    %v2459 = vld [vmem:[#allocation8 + $0x2c8] sm:$0xf]
    %v2460 = vld [vmem:[#allocation8 + $0x2cc] sm:$0xf]
    %v2461 = vld [vmem:[#allocation8 + $0x2d0] sm:$0xf]
    %v2462 = vld [vmem:[#allocation8 + $0x2d4] sm:$0xf]
    %v2463 = vld [vmem:[#allocation8 + $0x2d8] sm:$0xf]
    %v2464 = vld [vmem:[#allocation8 + $0x2dc] sm:$0xf]
    %v2465 = vld [vmem:[#allocation8 + $0x2e0] sm:$0xf]
    %v2466 = vld [vmem:[#allocation8 + $0x2e4] sm:$0xf]
    %v2467 = vld [vmem:[#allocation8 + $0x2e8] sm:$0xf]
    %v2468 = vld [vmem:[#allocation8 + $0x2ec] sm:$0xf]
    %v2469 = vld [vmem:[#allocation8 + $0x2f0] sm:$0xf]
    %v2470 = vld [vmem:[#allocation8 + $0x2f4] sm:$0xf]
    %v2471 = vld [vmem:[#allocation8 + $0x2f8] sm:$0xf]
    %v2472 = vld [vmem:[#allocation8 + $0x2fc] sm:$0xf]
    %v2473 = vld [vmem:[#allocation8 + $0x300] sm:$0xf]
    %v2474 = vld [vmem:[#allocation8 + $0x304] sm:$0xf]
    %v2475 = vld [vmem:[#allocation8 + $0x308] sm:$0xf]
    %v2476 = vld [vmem:[#allocation8 + $0x30c] sm:$0xf]
    %v2477 = vld [vmem:[#allocation8 + $0x310] sm:$0xf]
    %v2478 = vld [vmem:[#allocation8 + $0x314] sm:$0xf]
    %v2479 = vld [vmem:[#allocation8 + $0x318] sm:$0xf]
    %v2480 = vld [vmem:[#allocation8 + $0x31c] sm:$0xf]
    %v2481 = vld [vmem:[#allocation8 + $0x320] sm:$0xf]
    %v2482 = vld [vmem:[#allocation8 + $0x324] sm:$0xf]
    %v2483 = vld [vmem:[#allocation8 + $0x328] sm:$0xf]
    %v2484 = vld [vmem:[#allocation8 + $0x32c] sm:$0xf]
    %v2485 = vld [vmem:[#allocation8 + $0x330] sm:$0xf]
    %v2486 = vld [vmem:[#allocation8 + $0x334] sm:$0xf]
    %v2487 = vld [vmem:[#allocation8 + $0x338] sm:$0xf]
    %v2488 = vld [vmem:[#allocation8 + $0x33c] sm:$0xf]
    %v2489 = vld [vmem:[#allocation8 + $0x340] sm:$0xf]
    %v2490 = vld [vmem:[#allocation8 + $0x344] sm:$0xf]
    %v2491 = vld [vmem:[#allocation8 + $0x348] sm:$0xf]
    %v2492 = vld [vmem:[#allocation8 + $0x34c] sm:$0xf]
    %v2493 = vld [vmem:[#allocation8 + $0x350] sm:$0xf]
    %v2494 = vld [vmem:[#allocation8 + $0x354] sm:$0xf]
    %v2495 = vld [vmem:[#allocation8 + $0x358] sm:$0xf]
    %v2496 = vld [vmem:[#allocation8 + $0x35c] sm:$0xf]
    %v2497 = vld [vmem:[#allocation8 + $0x360] sm:$0xf]
    %v2498 = vld [vmem:[#allocation8 + $0x364] sm:$0xf]
    %v2499 = vld [vmem:[#allocation8 + $0x368] sm:$0xf]
    %v2500 = vld [vmem:[#allocation8 + $0x36c] sm:$0xf]
    %v2501 = vld [vmem:[#allocation8 + $0x370] sm:$0xf]
    %v2502 = vld [vmem:[#allocation8 + $0x374] sm:$0xf]
    %v2503 = vld [vmem:[#allocation8 + $0x378] sm:$0xf]
    %v2504 = vld [vmem:[#allocation8 + $0x37c] sm:$0xf]
    %v2505 = vld [vmem:[#allocation8 + $0x380] sm:$0xf]
    %v2506 = vld [vmem:[#allocation8 + $0x384] sm:$0xf]
    %v2507 = vld [vmem:[#allocation8 + $0x388] sm:$0xf]
    %v2508 = vld [vmem:[#allocation8 + $0x38c] sm:$0xf]
    %v2509 = vld [vmem:[#allocation8 + $0x390] sm:$0xf]
    %v2510 = vld [vmem:[#allocation8 + $0x394] sm:$0xf]
    %v2511 = vld [vmem:[#allocation8 + $0x398] sm:$0xf]
    %v2512 = vld [vmem:[#allocation8 + $0x39c] sm:$0xf]
    %v2513 = vld [vmem:[#allocation8 + $0x3a0] sm:$0xf]
    %v2514 = vld [vmem:[#allocation8 + $0x3a4] sm:$0xf]
    %v2515 = vld [vmem:[#allocation8 + $0x3a8] sm:$0xf]
    %v2516 = vld [vmem:[#allocation8 + $0x3ac] sm:$0xf]
    %v2517 = vld [vmem:[#allocation8 + $0x3b0] sm:$0xf]
    %v2518 = vld [vmem:[#allocation8 + $0x3b4] sm:$0xf]
    %v2519 = vld [vmem:[#allocation8 + $0x3b8] sm:$0xf]
    %v2520 = vld [vmem:[#allocation8 + $0x3bc] sm:$0xf]
    %v2521 = vld [vmem:[#allocation8 + $0x3c0] sm:$0xf]
    %v2522 = vld [vmem:[#allocation8 + $0x3c4] sm:$0xf]
    %v2523 = vld [vmem:[#allocation8 + $0x3c8] sm:$0xf]
    %v2524 = vld [vmem:[#allocation8 + $0x3cc] sm:$0xf]
    %v2525 = vld [vmem:[#allocation8 + $0x3d0] sm:$0xf]
    %v2526 = vld [vmem:[#allocation8 + $0x3d4] sm:$0xf]
    %v2527 = vld [vmem:[#allocation8 + $0x3d8] sm:$0xf]
    %v2528 = vld [vmem:[#allocation8 + $0x3dc] sm:$0xf]
    %v2529 = vld [vmem:[#allocation8 + $0x3e0] sm:$0xf]
    %v2530 = vld [vmem:[#allocation8 + $0x3e4] sm:$0xf]
    %v2531 = vld [vmem:[#allocation8 + $0x3e8] sm:$0xf]
    %v2532 = vld [vmem:[#allocation8 + $0x3ec] sm:$0xf]
    %v2533 = vld [vmem:[#allocation8 + $0x3f0] sm:$0xf]
    %v2534 = vld [vmem:[#allocation8 + $0x3f4] sm:$0xf]
    %v2535 = vld [vmem:[#allocation8 + $0x3f8] sm:$0xf]
    %v2536 = vld [vmem:[#allocation8 + $0x3fc] sm:$0xf]
    %v2537 = vld [vmem:[%s12] sm:$0x1]
    %v2539 = vlaneseq
    %v2540 = vshrl.u32 %v2539, 7
    %v2541 = vsub.s32 0, %v2540
    %v2542 = vrot.slane %v2537, %v2541
    %v2800 = vunpack.c.l.b16 %v2281
    %v2801 = vunpack.c.l.b16 %v2282
    %v2802 = vunpack.c.l.b16 %v2283
    %v2803 = vunpack.c.l.b16 %v2284
    %v2804 = vunpack.c.l.b16 %v2285
    %v2805 = vunpack.c.l.b16 %v2286
    %v2806 = vunpack.c.l.b16 %v2287
    %v2807 = vunpack.c.l.b16 %v2288
    %v2808 = vunpack.c.l.b16 %v2289
    %v2809 = vunpack.c.l.b16 %v2290
    %v2810 = vunpack.c.l.b16 %v2291
    %v2811 = vunpack.c.l.b16 %v2292
    %v2812 = vunpack.c.l.b16 %v2293
    %v2813 = vunpack.c.l.b16 %v2294
    %v2814 = vunpack.c.l.b16 %v2295
    %v2815 = vunpack.c.l.b16 %v2296
    %v2816 = vunpack.c.l.b16 %v2297
    %v2817 = vunpack.c.l.b16 %v2298
    %v2818 = vunpack.c.l.b16 %v2299
    %v2819 = vunpack.c.l.b16 %v2300
    %v2820 = vunpack.c.l.b16 %v2301
    %v2821 = vunpack.c.l.b16 %v2302
    %v2822 = vunpack.c.l.b16 %v2303
    %v2823 = vunpack.c.l.b16 %v2304
    %v2824 = vunpack.c.l.b16 %v2305
    %v2825 = vunpack.c.l.b16 %v2306
    %v2826 = vunpack.c.l.b16 %v2307
    %v2827 = vunpack.c.l.b16 %v2308
    %v2828 = vunpack.c.l.b16 %v2309
    %v2829 = vunpack.c.l.b16 %v2310
    %v2830 = vunpack.c.l.b16 %v2311
    %v2831 = vunpack.c.l.b16 %v2312
    %v2832 = vunpack.c.l.b16 %v2313
    %v2833 = vunpack.c.l.b16 %v2314
    %v2834 = vunpack.c.l.b16 %v2315
    %v2835 = vunpack.c.l.b16 %v2316
    %v2836 = vunpack.c.l.b16 %v2317
    %v2837 = vunpack.c.l.b16 %v2318
    %v2838 = vunpack.c.l.b16 %v2319
    %v2839 = vunpack.c.l.b16 %v2320
    %v2840 = vunpack.c.l.b16 %v2321
    %v2841 = vunpack.c.l.b16 %v2322
    %v2842 = vunpack.c.l.b16 %v2323
    %v2843 = vunpack.c.l.b16 %v2324
    %v2844 = vunpack.c.l.b16 %v2325
    %v2845 = vunpack.c.l.b16 %v2326
    %v2846 = vunpack.c.l.b16 %v2327
    %v2847 = vunpack.c.l.b16 %v2328
    %v2848 = vunpack.c.l.b16 %v2329
    %v2849 = vunpack.c.l.b16 %v2330
    %v2850 = vunpack.c.l.b16 %v2331
    %v2851 = vunpack.c.l.b16 %v2332
    %v2852 = vunpack.c.l.b16 %v2333
    %v2853 = vunpack.c.l.b16 %v2334
    %v2854 = vunpack.c.l.b16 %v2335
    %v2855 = vunpack.c.l.b16 %v2336
    %v2856 = vunpack.c.l.b16 %v2337
    %v2857 = vunpack.c.l.b16 %v2338
    %v2858 = vunpack.c.l.b16 %v2339
    %v2859 = vunpack.c.l.b16 %v2340
    %v2860 = vunpack.c.l.b16 %v2341
    %v2861 = vunpack.c.l.b16 %v2342
    %v2862 = vunpack.c.l.b16 %v2343
    %v2863 = vunpack.c.l.b16 %v2344
    %v2864 = vunpack.c.l.b16 %v2345
    %v2865 = vunpack.c.l.b16 %v2346
    %v2866 = vunpack.c.l.b16 %v2347
    %v2867 = vunpack.c.l.b16 %v2348
    %v2868 = vunpack.c.l.b16 %v2349
    %v2869 = vunpack.c.l.b16 %v2350
    %v2870 = vunpack.c.l.b16 %v2351
    %v2871 = vunpack.c.l.b16 %v2352
    %v2872 = vunpack.c.l.b16 %v2353
    %v2873 = vunpack.c.l.b16 %v2354
    %v2874 = vunpack.c.l.b16 %v2355
    %v2875 = vunpack.c.l.b16 %v2356
    %v2876 = vunpack.c.l.b16 %v2357
    %v2877 = vunpack.c.l.b16 %v2358
    %v2878 = vunpack.c.l.b16 %v2359
    %v2879 = vunpack.c.l.b16 %v2360
    %v2880 = vunpack.c.l.b16 %v2361
    %v2881 = vunpack.c.l.b16 %v2362
    %v2882 = vunpack.c.l.b16 %v2363
    %v2883 = vunpack.c.l.b16 %v2364
    %v2884 = vunpack.c.l.b16 %v2365
    %v2885 = vunpack.c.l.b16 %v2366
    %v2886 = vunpack.c.l.b16 %v2367
    %v2887 = vunpack.c.l.b16 %v2368
    %v2888 = vunpack.c.l.b16 %v2369
    %v2889 = vunpack.c.l.b16 %v2370
    %v2890 = vunpack.c.l.b16 %v2371
    %v2891 = vunpack.c.l.b16 %v2372
    %v2892 = vunpack.c.l.b16 %v2373
    %v2893 = vunpack.c.l.b16 %v2374
    %v2894 = vunpack.c.l.b16 %v2375
    %v2895 = vunpack.c.l.b16 %v2376
    %v2896 = vunpack.c.l.b16 %v2377
    %v2897 = vunpack.c.l.b16 %v2378
    %v2898 = vunpack.c.l.b16 %v2379
    %v2899 = vunpack.c.l.b16 %v2380
    %v2900 = vunpack.c.l.b16 %v2381
    %v2901 = vunpack.c.l.b16 %v2382
    %v2902 = vunpack.c.l.b16 %v2383
    %v2903 = vunpack.c.l.b16 %v2384
    %v2904 = vunpack.c.l.b16 %v2385
    %v2905 = vunpack.c.l.b16 %v2386
    %v2906 = vunpack.c.l.b16 %v2387
    %v2907 = vunpack.c.l.b16 %v2388
    %v2908 = vunpack.c.l.b16 %v2389
    %v2909 = vunpack.c.l.b16 %v2390
    %v2910 = vunpack.c.l.b16 %v2391
    %v2911 = vunpack.c.l.b16 %v2392
    %v2912 = vunpack.c.l.b16 %v2393
    %v2913 = vunpack.c.l.b16 %v2394
    %v2914 = vunpack.c.l.b16 %v2395
    %v2915 = vunpack.c.l.b16 %v2396
    %v2916 = vunpack.c.l.b16 %v2397
    %v2917 = vunpack.c.l.b16 %v2398
    %v2918 = vunpack.c.l.b16 %v2399
    %v2919 = vunpack.c.l.b16 %v2400
    %v2920 = vunpack.c.l.b16 %v2401
    %v2921 = vunpack.c.l.b16 %v2402
    %v2922 = vunpack.c.l.b16 %v2403
    %v2923 = vunpack.c.l.b16 %v2404
    %v2924 = vunpack.c.l.b16 %v2405
    %v2925 = vunpack.c.l.b16 %v2406
    %v2926 = vunpack.c.l.b16 %v2407
    %v2927 = vunpack.c.l.b16 %v2408
    %v2928 = vunpack.c.l.b16 %v2409
    %v2929 = vunpack.c.l.b16 %v2410
    %v2930 = vunpack.c.l.b16 %v2411
    %v2931 = vunpack.c.l.b16 %v2412
    %v2932 = vunpack.c.l.b16 %v2413
    %v2933 = vunpack.c.l.b16 %v2414
    %v2934 = vunpack.c.l.b16 %v2415
    %v2935 = vunpack.c.l.b16 %v2416
    %v2936 = vunpack.c.l.b16 %v2417
    %v2937 = vunpack.c.l.b16 %v2418
    %v2938 = vunpack.c.l.b16 %v2419
    %v2939 = vunpack.c.l.b16 %v2420
    %v2940 = vunpack.c.l.b16 %v2421
    %v2941 = vunpack.c.l.b16 %v2422
    %v2942 = vunpack.c.l.b16 %v2423
    %v2943 = vunpack.c.l.b16 %v2424
    %v2944 = vunpack.c.l.b16 %v2425
    %v2945 = vunpack.c.l.b16 %v2426
    %v2946 = vunpack.c.l.b16 %v2427
    %v2947 = vunpack.c.l.b16 %v2428
    %v2948 = vunpack.c.l.b16 %v2429
    %v2949 = vunpack.c.l.b16 %v2430
    %v2950 = vunpack.c.l.b16 %v2431
    %v2951 = vunpack.c.l.b16 %v2432
    %v2952 = vunpack.c.l.b16 %v2433
    %v2953 = vunpack.c.l.b16 %v2434
    %v2954 = vunpack.c.l.b16 %v2435
    %v2955 = vunpack.c.l.b16 %v2436
    %v2956 = vunpack.c.l.b16 %v2437
    %v2957 = vunpack.c.l.b16 %v2438
    %v2958 = vunpack.c.l.b16 %v2439
    %v2959 = vunpack.c.l.b16 %v2440
    %v2960 = vunpack.c.l.b16 %v2441
    %v2961 = vunpack.c.l.b16 %v2442
    %v2962 = vunpack.c.l.b16 %v2443
    %v2963 = vunpack.c.l.b16 %v2444
    %v2964 = vunpack.c.l.b16 %v2445
    %v2965 = vunpack.c.l.b16 %v2446
    %v2966 = vunpack.c.l.b16 %v2447
    %v2967 = vunpack.c.l.b16 %v2448
    %v2968 = vunpack.c.l.b16 %v2449
    %v2969 = vunpack.c.l.b16 %v2450
    %v2970 = vunpack.c.l.b16 %v2451
    %v2971 = vunpack.c.l.b16 %v2452
    %v2972 = vunpack.c.l.b16 %v2453
    %v2973 = vunpack.c.l.b16 %v2454
    %v2974 = vunpack.c.l.b16 %v2455
    %v2975 = vunpack.c.l.b16 %v2456
    %v2976 = vunpack.c.l.b16 %v2457
    %v2977 = vunpack.c.l.b16 %v2458
    %v2978 = vunpack.c.l.b16 %v2459
    %v2979 = vunpack.c.l.b16 %v2460
    %v2980 = vunpack.c.l.b16 %v2461
    %v2981 = vunpack.c.l.b16 %v2462
    %v2982 = vunpack.c.l.b16 %v2463
    %v2983 = vunpack.c.l.b16 %v2464
    %v2984 = vunpack.c.l.b16 %v2465
    %v2985 = vunpack.c.l.b16 %v2466
    %v2986 = vunpack.c.l.b16 %v2467
    %v2987 = vunpack.c.l.b16 %v2468
    %v2988 = vunpack.c.l.b16 %v2469
    %v2989 = vunpack.c.l.b16 %v2470
    %v2990 = vunpack.c.l.b16 %v2471
    %v2991 = vunpack.c.l.b16 %v2472
    %v2992 = vunpack.c.l.b16 %v2473
    %v2993 = vunpack.c.l.b16 %v2474
    %v2994 = vunpack.c.l.b16 %v2475
    %v2995 = vunpack.c.l.b16 %v2476
    %v2996 = vunpack.c.l.b16 %v2477
    %v2997 = vunpack.c.l.b16 %v2478
    %v2998 = vunpack.c.l.b16 %v2479
    %v2999 = vunpack.c.l.b16 %v2480
    %v3000 = vunpack.c.l.b16 %v2481
    %v3001 = vunpack.c.l.b16 %v2482
    %v3002 = vunpack.c.l.b16 %v2483
    %v3003 = vunpack.c.l.b16 %v2484
    %v3004 = vunpack.c.l.b16 %v2485
    %v3005 = vunpack.c.l.b16 %v2486
    %v3006 = vunpack.c.l.b16 %v2487
    %v3007 = vunpack.c.l.b16 %v2488
    %v3008 = vunpack.c.l.b16 %v2489
    %v3009 = vunpack.c.l.b16 %v2490
    %v3010 = vunpack.c.l.b16 %v2491
    %v3011 = vunpack.c.l.b16 %v2492
    %v3012 = vunpack.c.l.b16 %v2493
    %v3013 = vunpack.c.l.b16 %v2494
    %v3014 = vunpack.c.l.b16 %v2495
    %v3015 = vunpack.c.l.b16 %v2496
    %v3016 = vunpack.c.l.b16 %v2497
    %v3017 = vunpack.c.l.b16 %v2498
    %v3018 = vunpack.c.l.b16 %v2499
    %v3019 = vunpack.c.l.b16 %v2500
    %v3020 = vunpack.c.l.b16 %v2501
    %v3021 = vunpack.c.l.b16 %v2502
    %v3022 = vunpack.c.l.b16 %v2503
    %v3023 = vunpack.c.l.b16 %v2504
    %v3024 = vunpack.c.l.b16 %v2505
    %v3025 = vunpack.c.l.b16 %v2506
    %v3026 = vunpack.c.l.b16 %v2507
    %v3027 = vunpack.c.l.b16 %v2508
    %v3028 = vunpack.c.l.b16 %v2509
    %v3029 = vunpack.c.l.b16 %v2510
    %v3030 = vunpack.c.l.b16 %v2511
    %v3031 = vunpack.c.l.b16 %v2512
    %v3032 = vunpack.c.l.b16 %v2513
    %v3033 = vunpack.c.l.b16 %v2514
    %v3034 = vunpack.c.l.b16 %v2515
    %v3035 = vunpack.c.l.b16 %v2516
    %v3036 = vunpack.c.l.b16 %v2517
    %v3037 = vunpack.c.l.b16 %v2518
    %v3038 = vunpack.c.l.b16 %v2519
    %v3039 = vunpack.c.l.b16 %v2520
    %v3040 = vunpack.c.l.b16 %v2521
    %v3041 = vunpack.c.l.b16 %v2522
    %v3042 = vunpack.c.l.b16 %v2523
    %v3043 = vunpack.c.l.b16 %v2524
    %v3044 = vunpack.c.l.b16 %v2525
    %v3045 = vunpack.c.l.b16 %v2526
    %v3046 = vunpack.c.l.b16 %v2527
    %v3047 = vunpack.c.l.b16 %v2528
    %v3048 = vunpack.c.l.b16 %v2529
    %v3049 = vunpack.c.l.b16 %v2530
    %v3050 = vunpack.c.l.b16 %v2531
    %v3051 = vunpack.c.l.b16 %v2532
    %v3052 = vunpack.c.l.b16 %v2533
    %v3053 = vunpack.c.l.b16 %v2534
    %v3054 = vunpack.c.l.b16 %v2535
    %v3055 = vunpack.c.l.b16 %v2536
    %v3056 = vpack.c.b16 %v2801, %v2800
    %v3057 = vpack.c.b16 %v2803, %v2802
    %v3058 = vpack.c.b16 %v2805, %v2804
    %v3059 = vpack.c.b16 %v2807, %v2806
    %v3060 = vpack.c.b16 %v2809, %v2808
    %v3061 = vpack.c.b16 %v2811, %v2810
    %v3062 = vpack.c.b16 %v2813, %v2812
    %v3063 = vpack.c.b16 %v2815, %v2814
    %v3064 = vpack.c.b16 %v2817, %v2816
    %v3065 = vpack.c.b16 %v2819, %v2818
    %v3066 = vpack.c.b16 %v2821, %v2820
    %v3067 = vpack.c.b16 %v2823, %v2822
    %v3068 = vpack.c.b16 %v2825, %v2824
    %v3069 = vpack.c.b16 %v2827, %v2826
    %v3070 = vpack.c.b16 %v2829, %v2828
    %v3071 = vpack.c.b16 %v2831, %v2830
    %v3072 = vpack.c.b16 %v2833, %v2832
    %v3073 = vpack.c.b16 %v2835, %v2834
    %v3074 = vpack.c.b16 %v2837, %v2836
    %v3075 = vpack.c.b16 %v2839, %v2838
    %v3076 = vpack.c.b16 %v2841, %v2840
    %v3077 = vpack.c.b16 %v2843, %v2842
    %v3078 = vpack.c.b16 %v2845, %v2844
    %v3079 = vpack.c.b16 %v2847, %v2846
    %v3080 = vpack.c.b16 %v2849, %v2848
    %v3081 = vpack.c.b16 %v2851, %v2850
    %v3082 = vpack.c.b16 %v2853, %v2852
    %v3083 = vpack.c.b16 %v2855, %v2854
    %v3084 = vpack.c.b16 %v2857, %v2856
    %v3085 = vpack.c.b16 %v2859, %v2858
    %v3086 = vpack.c.b16 %v2861, %v2860
    %v3087 = vpack.c.b16 %v2863, %v2862
    %v3088 = vpack.c.b16 %v2865, %v2864
    %v3089 = vpack.c.b16 %v2867, %v2866
    %v3090 = vpack.c.b16 %v2869, %v2868
    %v3091 = vpack.c.b16 %v2871, %v2870
    %v3092 = vpack.c.b16 %v2873, %v2872
    %v3093 = vpack.c.b16 %v2875, %v2874
    %v3094 = vpack.c.b16 %v2877, %v2876
    %v3095 = vpack.c.b16 %v2879, %v2878
    %v3096 = vpack.c.b16 %v2881, %v2880
    %v3097 = vpack.c.b16 %v2883, %v2882
    %v3098 = vpack.c.b16 %v2885, %v2884
    %v3099 = vpack.c.b16 %v2887, %v2886
    %v3100 = vpack.c.b16 %v2889, %v2888
    %v3101 = vpack.c.b16 %v2891, %v2890
    %v3102 = vpack.c.b16 %v2893, %v2892
    %v3103 = vpack.c.b16 %v2895, %v2894
    %v3104 = vpack.c.b16 %v2897, %v2896
    %v3105 = vpack.c.b16 %v2899, %v2898
    %v3106 = vpack.c.b16 %v2901, %v2900
    %v3107 = vpack.c.b16 %v2903, %v2902
    %v3108 = vpack.c.b16 %v2905, %v2904
    %v3109 = vpack.c.b16 %v2907, %v2906
    %v3110 = vpack.c.b16 %v2909, %v2908
    %v3111 = vpack.c.b16 %v2911, %v2910
    %v3112 = vpack.c.b16 %v2913, %v2912
    %v3113 = vpack.c.b16 %v2915, %v2914
    %v3114 = vpack.c.b16 %v2917, %v2916
    %v3115 = vpack.c.b16 %v2919, %v2918
    %v3116 = vpack.c.b16 %v2921, %v2920
    %v3117 = vpack.c.b16 %v2923, %v2922
    %v3118 = vpack.c.b16 %v2925, %v2924
    %v3119 = vpack.c.b16 %v2927, %v2926
    %v3120 = vpack.c.b16 %v2929, %v2928
    %v3121 = vpack.c.b16 %v2931, %v2930
    %v3122 = vpack.c.b16 %v2933, %v2932
    %v3123 = vpack.c.b16 %v2935, %v2934
    %v3124 = vpack.c.b16 %v2937, %v2936
    %v3125 = vpack.c.b16 %v2939, %v2938
    %v3126 = vpack.c.b16 %v2941, %v2940
    %v3127 = vpack.c.b16 %v2943, %v2942
    %v3128 = vpack.c.b16 %v2945, %v2944
    %v3129 = vpack.c.b16 %v2947, %v2946
    %v3130 = vpack.c.b16 %v2949, %v2948
    %v3131 = vpack.c.b16 %v2951, %v2950
    %v3132 = vpack.c.b16 %v2953, %v2952
    %v3133 = vpack.c.b16 %v2955, %v2954
    %v3134 = vpack.c.b16 %v2957, %v2956
    %v3135 = vpack.c.b16 %v2959, %v2958
    %v3136 = vpack.c.b16 %v2961, %v2960
    %v3137 = vpack.c.b16 %v2963, %v2962
    %v3138 = vpack.c.b16 %v2965, %v2964
    %v3139 = vpack.c.b16 %v2967, %v2966
    %v3140 = vpack.c.b16 %v2969, %v2968
    %v3141 = vpack.c.b16 %v2971, %v2970
    %v3142 = vpack.c.b16 %v2973, %v2972
    %v3143 = vpack.c.b16 %v2975, %v2974
    %v3144 = vpack.c.b16 %v2977, %v2976
    %v3145 = vpack.c.b16 %v2979, %v2978
    %v3146 = vpack.c.b16 %v2981, %v2980
    %v3147 = vpack.c.b16 %v2983, %v2982
    %v3148 = vpack.c.b16 %v2985, %v2984
    %v3149 = vpack.c.b16 %v2987, %v2986
    %v3150 = vpack.c.b16 %v2989, %v2988
    %v3151 = vpack.c.b16 %v2991, %v2990
    %v3152 = vpack.c.b16 %v2993, %v2992
    %v3153 = vpack.c.b16 %v2995, %v2994
    %v3154 = vpack.c.b16 %v2997, %v2996
    %v3155 = vpack.c.b16 %v2999, %v2998
    %v3156 = vpack.c.b16 %v3001, %v3000
    %v3157 = vpack.c.b16 %v3003, %v3002
    %v3158 = vpack.c.b16 %v3005, %v3004
    %v3159 = vpack.c.b16 %v3007, %v3006
    %v3160 = vpack.c.b16 %v3009, %v3008
    %v3161 = vpack.c.b16 %v3011, %v3010
    %v3162 = vpack.c.b16 %v3013, %v3012
    %v3163 = vpack.c.b16 %v3015, %v3014
    %v3164 = vpack.c.b16 %v3017, %v3016
    %v3165 = vpack.c.b16 %v3019, %v3018
    %v3166 = vpack.c.b16 %v3021, %v3020
    %v3167 = vpack.c.b16 %v3023, %v3022
    %v3168 = vpack.c.b16 %v3025, %v3024
    %v3169 = vpack.c.b16 %v3027, %v3026
    %v3170 = vpack.c.b16 %v3029, %v3028
    %v3171 = vpack.c.b16 %v3031, %v3030
    %v3172 = vpack.c.b16 %v3033, %v3032
    %v3173 = vpack.c.b16 %v3035, %v3034
    %v3174 = vpack.c.b16 %v3037, %v3036
    %v3175 = vpack.c.b16 %v3039, %v3038
    %v3176 = vpack.c.b16 %v3041, %v3040
    %v3177 = vpack.c.b16 %v3043, %v3042
    %v3178 = vpack.c.b16 %v3045, %v3044
    %v3179 = vpack.c.b16 %v3047, %v3046
    %v3180 = vpack.c.b16 %v3049, %v3048
    %v3181 = vpack.c.b16 %v3051, %v3050
    %v3182 = vpack.c.b16 %v3053, %v3052
    %v3183 = vpack.c.b16 %v3055, %v3054
    %3312 = vmatprep.subr.bf16.mxu0 0
    %3313 = vmatpush1.bf16.msra.mxu0 %v3056
    %3314 = vmatprep.subr.bf16.mxu0 0
    %3315 = vmatpush1.bf16.msra.mxu0 %v3057
    %3316 = vmatprep.subr.bf16.mxu0 0
    %3317 = vmatpush1.bf16.msra.mxu0 %v3058
    %3318 = vmatprep.subr.bf16.mxu0 0
    %3319 = vmatpush1.bf16.msra.mxu0 %v3059
    %3320 = vmatprep.subr.bf16.mxu0 0
    %3321 = vmatpush1.bf16.msra.mxu0 %v3060
    %3322 = vmatprep.subr.bf16.mxu0 0
    %3323 = vmatpush1.bf16.msra.mxu0 %v3061
    %3324 = vmatprep.subr.bf16.mxu0 0
    %3325 = vmatpush1.bf16.msra.mxu0 %v3062
    %3326 = vmatprep.subr.bf16.mxu0 0
    %3327 = vmatpush1.bf16.msra.mxu0 %v3063
    %3328 = vmatprep.subr.bf16.mxu0 0
    %3329 = vmatpush1.bf16.msra.mxu0 %v3064
    %3330 = vmatprep.subr.bf16.mxu0 0
    %3331 = vmatpush1.bf16.msra.mxu0 %v3065
    %3332 = vmatprep.subr.bf16.mxu0 0
    %3333 = vmatpush1.bf16.msra.mxu0 %v3066
    %3334 = vmatprep.subr.bf16.mxu0 0
    %3335 = vmatpush1.bf16.msra.mxu0 %v3067
    %3336 = vmatprep.subr.bf16.mxu0 0
    %3337 = vmatpush1.bf16.msra.mxu0 %v3068
    %3338 = vmatprep.subr.bf16.mxu0 0
    %3339 = vmatpush1.bf16.msra.mxu0 %v3069
    %3340 = vmatprep.subr.bf16.mxu0 0
    %3341 = vmatpush1.bf16.msra.mxu0 %v3070
    %3342 = vmatprep.subr.bf16.mxu0 0
    %3343 = vmatpush1.bf16.msra.mxu0 %v3071
    %3344 = vmatprep.mubr.bf16.mxu0 %v2250
    %3345 = vmatmul.mubr.bf16.gmra.mrb[0].mxu0 %v2249
    %v3346 = vpop.f32.mrb[0].mxu0
    %v3347 = vadd.f32 %v2542, %v3346
    %v3348 = vpop.f32.mrb[0].mxu0
    %v3349 = vpop.f32.mrb[0].mxu0
    %v3350 = vadd.f32 %v2542, %v3349
    %v3351 = vpop.f32.mrb[0].mxu0
    %3352 = vmatprep.mubr.bf16.mxu0 %v2266
    %3353 = vmatmul.mubr.bf16.gmra.mrb[0].mxu0 %v2265
    %v3354 = vpop.f32.mrb[0].mxu0
    %v3355 = vadd.f32 %v2542, %v3354
    %v3356 = vpop.f32.mrb[0].mxu0
    %v3357 = vpop.f32.mrb[0].mxu0
    %v3358 = vadd.f32 %v2542, %v3357
    %v3359 = vpop.f32.mrb[0].mxu0
    %3360 = vdwg.mxu0
    %3361 = vmatprep.subr.bf16.mxu0 0
    %3362 = vmatpush1.bf16.msra.mxu0 %v3072
    %3363 = vmatprep.subr.bf16.mxu0 0
    %3364 = vmatpush1.bf16.msra.mxu0 %v3073
    %3365 = vmatprep.subr.bf16.mxu0 0
    %3366 = vmatpush1.bf16.msra.mxu0 %v3074
    %3367 = vmatprep.subr.bf16.mxu0 0
    %3368 = vmatpush1.bf16.msra.mxu0 %v3075
    %3369 = vmatprep.subr.bf16.mxu0 0
    %3370 = vmatpush1.bf16.msra.mxu0 %v3076
    %3371 = vmatprep.subr.bf16.mxu0 0
    %3372 = vmatpush1.bf16.msra.mxu0 %v3077
    %3373 = vmatprep.subr.bf16.mxu0 0
    %3374 = vmatpush1.bf16.msra.mxu0 %v3078
    %3375 = vmatprep.subr.bf16.mxu0 0
    %3376 = vmatpush1.bf16.msra.mxu0 %v3079
    %3377 = vmatprep.subr.bf16.mxu0 0
    %3378 = vmatpush1.bf16.msra.mxu0 %v3080
    %3379 = vmatprep.subr.bf16.mxu0 0
    %3380 = vmatpush1.bf16.msra.mxu0 %v3081
    %3381 = vmatprep.subr.bf16.mxu0 0
    %3382 = vmatpush1.bf16.msra.mxu0 %v3082
    %3383 = vmatprep.subr.bf16.mxu0 0
    %3384 = vmatpush1.bf16.msra.mxu0 %v3083
    %3385 = vmatprep.subr.bf16.mxu0 0
    %3386 = vmatpush1.bf16.msra.mxu0 %v3084
    %3387 = vmatprep.subr.bf16.mxu0 0
    %3388 = vmatpush1.bf16.msra.mxu0 %v3085
    %3389 = vmatprep.subr.bf16.mxu0 0
    %3390 = vmatpush1.bf16.msra.mxu0 %v3086
    %3391 = vmatprep.subr.bf16.mxu0 0
    %3392 = vmatpush1.bf16.msra.mxu0 %v3087
    %3393 = vmatprep.mubr.bf16.mxu0 %v2252
    %3394 = vmatmul.mubr.bf16.gmra.mrb[0].mxu0 %v2251
    %v3395 = vpop.f32.mrb[0].mxu0
    %v3396 = vadd.f32 %v3347, %v3395
    %v3397 = vpop.f32.mrb[0].mxu0
    %v3398 = vpop.f32.mrb[0].mxu0
    %v3399 = vadd.f32 %v3350, %v3398
    %v3400 = vpop.f32.mrb[0].mxu0
    %3401 = vmatprep.mubr.bf16.mxu0 %v2268
    %3402 = vmatmul.mubr.bf16.gmra.mrb[0].mxu0 %v2267
    %v3403 = vpop.f32.mrb[0].mxu0
    %v3404 = vadd.f32 %v3355, %v3403
    %v3405 = vpop.f32.mrb[0].mxu0
    %v3406 = vpop.f32.mrb[0].mxu0
    %v3407 = vadd.f32 %v3358, %v3406
    %v3408 = vpop.f32.mrb[0].mxu0
    %3409 = vdwg.mxu0
    %3410 = vmatprep.subr.bf16.mxu0 0
    %3411 = vmatpush1.bf16.msra.mxu0 %v3088
    %3412 = vmatprep.subr.bf16.mxu0 0
    %3413 = vmatpush1.bf16.msra.mxu0 %v3089
    %3414 = vmatprep.subr.bf16.mxu0 0
    %3415 = vmatpush1.bf16.msra.mxu0 %v3090
    %3416 = vmatprep.subr.bf16.mxu0 0
    %3417 = vmatpush1.bf16.msra.mxu0 %v3091
    %3418 = vmatprep.subr.bf16.mxu0 0
    %3419 = vmatpush1.bf16.msra.mxu0 %v3092
    %3420 = vmatprep.subr.bf16.mxu0 0
    %3421 = vmatpush1.bf16.msra.mxu0 %v3093
    %3422 = vmatprep.subr.bf16.mxu0 0
    %3423 = vmatpush1.bf16.msra.mxu0 %v3094
    %3424 = vmatprep.subr.bf16.mxu0 0
    %3425 = vmatpush1.bf16.msra.mxu0 %v3095
    %3426 = vmatprep.subr.bf16.mxu0 0
    %3427 = vmatpush1.bf16.msra.mxu0 %v3096
    %3428 = vmatprep.subr.bf16.mxu0 0
    %3429 = vmatpush1.bf16.msra.mxu0 %v3097
    %3430 = vmatprep.subr.bf16.mxu0 0
    %3431 = vmatpush1.bf16.msra.mxu0 %v3098
    %3432 = vmatprep.subr.bf16.mxu0 0
    %3433 = vmatpush1.bf16.msra.mxu0 %v3099
    %3434 = vmatprep.subr.bf16.mxu0 0
    %3435 = vmatpush1.bf16.msra.mxu0 %v3100
    %3436 = vmatprep.subr.bf16.mxu0 0
    %3437 = vmatpush1.bf16.msra.mxu0 %v3101
    %3438 = vmatprep.subr.bf16.mxu0 0
    %3439 = vmatpush1.bf16.msra.mxu0 %v3102
    %3440 = vmatprep.subr.bf16.mxu0 0
    %3441 = vmatpush1.bf16.msra.mxu0 %v3103
    %3442 = vmatprep.mubr.bf16.mxu0 %v2254
    %3443 = vmatmul.mubr.bf16.gmra.mrb[0].mxu0 %v2253
    %v3444 = vpop.f32.mrb[0].mxu0
    %v3445 = vadd.f32 %v3396, %v3444
    %v3446 = vpop.f32.mrb[0].mxu0
    %v3447 = vpop.f32.mrb[0].mxu0
    %v3448 = vadd.f32 %v3399, %v3447
    %v3449 = vpop.f32.mrb[0].mxu0
    %3450 = vmatprep.mubr.bf16.mxu0 %v2270
    %3451 = vmatmul.mubr.bf16.gmra.mrb[0].mxu0 %v2269
    %v3452 = vpop.f32.mrb[0].mxu0
    %v3453 = vadd.f32 %v3404, %v3452
    %v3454 = vpop.f32.mrb[0].mxu0
    %v3455 = vpop.f32.mrb[0].mxu0
    %v3456 = vadd.f32 %v3407, %v3455
    %v3457 = vpop.f32.mrb[0].mxu0
    %3458 = vdwg.mxu0
    %3459 = vmatprep.subr.bf16.mxu0 0
    %3460 = vmatpush1.bf16.msra.mxu0 %v3104
    %3461 = vmatprep.subr.bf16.mxu0 0
    %3462 = vmatpush1.bf16.msra.mxu0 %v3105
    %3463 = vmatprep.subr.bf16.mxu0 0
    %3464 = vmatpush1.bf16.msra.mxu0 %v3106
    %3465 = vmatprep.subr.bf16.mxu0 0
    %3466 = vmatpush1.bf16.msra.mxu0 %v3107
    %3467 = vmatprep.subr.bf16.mxu0 0
    %3468 = vmatpush1.bf16.msra.mxu0 %v3108
    %3469 = vmatprep.subr.bf16.mxu0 0
    %3470 = vmatpush1.bf16.msra.mxu0 %v3109
    %3471 = vmatprep.subr.bf16.mxu0 0
    %3472 = vmatpush1.bf16.msra.mxu0 %v3110
    %3473 = vmatprep.subr.bf16.mxu0 0
    %3474 = vmatpush1.bf16.msra.mxu0 %v3111
    %3475 = vmatprep.subr.bf16.mxu0 0
    %3476 = vmatpush1.bf16.msra.mxu0 %v3112
    %3477 = vmatprep.subr.bf16.mxu0 0
    %3478 = vmatpush1.bf16.msra.mxu0 %v3113
    %3479 = vmatprep.subr.bf16.mxu0 0
    %3480 = vmatpush1.bf16.msra.mxu0 %v3114
    %3481 = vmatprep.subr.bf16.mxu0 0
    %3482 = vmatpush1.bf16.msra.mxu0 %v3115
    %3483 = vmatprep.subr.bf16.mxu0 0
    %3484 = vmatpush1.bf16.msra.mxu0 %v3116
    %3485 = vmatprep.subr.bf16.mxu0 0
    %3486 = vmatpush1.bf16.msra.mxu0 %v3117
    %3487 = vmatprep.subr.bf16.mxu0 0
    %3488 = vmatpush1.bf16.msra.mxu0 %v3118
    %3489 = vmatprep.subr.bf16.mxu0 0
    %3490 = vmatpush1.bf16.msra.mxu0 %v3119
    %3491 = vmatprep.mubr.bf16.mxu0 %v2256
    %3492 = vmatmul.mubr.bf16.gmra.mrb[0].mxu0 %v2255
    %v3493 = vpop.f32.mrb[0].mxu0
    %v3494 = vadd.f32 %v3445, %v3493
    %v3495 = vpop.f32.mrb[0].mxu0
    %v3496 = vpop.f32.mrb[0].mxu0
    %v3497 = vadd.f32 %v3448, %v3496
    %v3498 = vpop.f32.mrb[0].mxu0
    %3499 = vmatprep.mubr.bf16.mxu0 %v2272
    %3500 = vmatmul.mubr.bf16.gmra.mrb[0].mxu0 %v2271
    %v3501 = vpop.f32.mrb[0].mxu0
    %v3502 = vadd.f32 %v3453, %v3501
    %v3503 = vpop.f32.mrb[0].mxu0
    %v3504 = vpop.f32.mrb[0].mxu0
    %v3505 = vadd.f32 %v3456, %v3504
    %v3506 = vpop.f32.mrb[0].mxu0
    %3507 = vdwg.mxu0
    %3508 = vmatprep.subr.bf16.mxu0 0
    %3509 = vmatpush1.bf16.msra.mxu0 %v3120
    %3510 = vmatprep.subr.bf16.mxu0 0
    %3511 = vmatpush1.bf16.msra.mxu0 %v3121
    %3512 = vmatprep.subr.bf16.mxu0 0
    %3513 = vmatpush1.bf16.msra.mxu0 %v3122
    %3514 = vmatprep.subr.bf16.mxu0 0
    %3515 = vmatpush1.bf16.msra.mxu0 %v3123
    %3516 = vmatprep.subr.bf16.mxu0 0
    %3517 = vmatpush1.bf16.msra.mxu0 %v3124
    %3518 = vmatprep.subr.bf16.mxu0 0
    %3519 = vmatpush1.bf16.msra.mxu0 %v3125
    %3520 = vmatprep.subr.bf16.mxu0 0
    %3521 = vmatpush1.bf16.msra.mxu0 %v3126
    %3522 = vmatprep.subr.bf16.mxu0 0
    %3523 = vmatpush1.bf16.msra.mxu0 %v3127
    %3524 = vmatprep.subr.bf16.mxu0 0
    %3525 = vmatpush1.bf16.msra.mxu0 %v3128
    %3526 = vmatprep.subr.bf16.mxu0 0
    %3527 = vmatpush1.bf16.msra.mxu0 %v3129
    %3528 = vmatprep.subr.bf16.mxu0 0
    %3529 = vmatpush1.bf16.msra.mxu0 %v3130
    %3530 = vmatprep.subr.bf16.mxu0 0
    %3531 = vmatpush1.bf16.msra.mxu0 %v3131
    %3532 = vmatprep.subr.bf16.mxu0 0
    %3533 = vmatpush1.bf16.msra.mxu0 %v3132
    %3534 = vmatprep.subr.bf16.mxu0 0
    %3535 = vmatpush1.bf16.msra.mxu0 %v3133
    %3536 = vmatprep.subr.bf16.mxu0 0
    %3537 = vmatpush1.bf16.msra.mxu0 %v3134
    %3538 = vmatprep.subr.bf16.mxu0 0
    %3539 = vmatpush1.bf16.msra.mxu0 %v3135
    %3540 = vmatprep.mubr.bf16.mxu0 %v2258
    %3541 = vmatmul.mubr.bf16.gmra.mrb[0].mxu0 %v2257
    %v3542 = vpop.f32.mrb[0].mxu0
    %v3543 = vadd.f32 %v3494, %v3542
    %v3544 = vpop.f32.mrb[0].mxu0
    %v3545 = vpop.f32.mrb[0].mxu0
    %v3546 = vadd.f32 %v3497, %v3545
    %v3547 = vpop.f32.mrb[0].mxu0
    %3548 = vmatprep.mubr.bf16.mxu0 %v2274
    %3549 = vmatmul.mubr.bf16.gmra.mrb[0].mxu0 %v2273
    %v3550 = vpop.f32.mrb[0].mxu0
    %v3551 = vadd.f32 %v3502, %v3550
    %v3552 = vpop.f32.mrb[0].mxu0
    %v3553 = vpop.f32.mrb[0].mxu0
    %v3554 = vadd.f32 %v3505, %v3553
    %v3555 = vpop.f32.mrb[0].mxu0
    %3556 = vdwg.mxu0
    %3557 = vmatprep.subr.bf16.mxu0 0
    %3558 = vmatpush1.bf16.msra.mxu0 %v3136
    %3559 = vmatprep.subr.bf16.mxu0 0
    %3560 = vmatpush1.bf16.msra.mxu0 %v3137
    %3561 = vmatprep.subr.bf16.mxu0 0
    %3562 = vmatpush1.bf16.msra.mxu0 %v3138
    %3563 = vmatprep.subr.bf16.mxu0 0
    %3564 = vmatpush1.bf16.msra.mxu0 %v3139
    %3565 = vmatprep.subr.bf16.mxu0 0
    %3566 = vmatpush1.bf16.msra.mxu0 %v3140
    %3567 = vmatprep.subr.bf16.mxu0 0
    %3568 = vmatpush1.bf16.msra.mxu0 %v3141
    %3569 = vmatprep.subr.bf16.mxu0 0
    %3570 = vmatpush1.bf16.msra.mxu0 %v3142
    %3571 = vmatprep.subr.bf16.mxu0 0
    %3572 = vmatpush1.bf16.msra.mxu0 %v3143
    %3573 = vmatprep.subr.bf16.mxu0 0
    %3574 = vmatpush1.bf16.msra.mxu0 %v3144
    %3575 = vmatprep.subr.bf16.mxu0 0
    %3576 = vmatpush1.bf16.msra.mxu0 %v3145
    %3577 = vmatprep.subr.bf16.mxu0 0
    %3578 = vmatpush1.bf16.msra.mxu0 %v3146
    %3579 = vmatprep.subr.bf16.mxu0 0
    %3580 = vmatpush1.bf16.msra.mxu0 %v3147
    %3581 = vmatprep.subr.bf16.mxu0 0
    %3582 = vmatpush1.bf16.msra.mxu0 %v3148
    %3583 = vmatprep.subr.bf16.mxu0 0
    %3584 = vmatpush1.bf16.msra.mxu0 %v3149
    %3585 = vmatprep.subr.bf16.mxu0 0
    %3586 = vmatpush1.bf16.msra.mxu0 %v3150
    %3587 = vmatprep.subr.bf16.mxu0 0
    %3588 = vmatpush1.bf16.msra.mxu0 %v3151
    %3589 = vmatprep.mubr.bf16.mxu0 %v2260
    %3590 = vmatmul.mubr.bf16.gmra.mrb[0].mxu0 %v2259
    %v3591 = vpop.f32.mrb[0].mxu0
    %v3592 = vadd.f32 %v3543, %v3591
    %v3593 = vpop.f32.mrb[0].mxu0
    %v3594 = vpop.f32.mrb[0].mxu0
    %v3595 = vadd.f32 %v3546, %v3594
    %v3596 = vpop.f32.mrb[0].mxu0
    %3597 = vmatprep.mubr.bf16.mxu0 %v2276
    %3598 = vmatmul.mubr.bf16.gmra.mrb[0].mxu0 %v2275
    %v3599 = vpop.f32.mrb[0].mxu0
    %v3600 = vadd.f32 %v3551, %v3599
    %v3601 = vpop.f32.mrb[0].mxu0
    %v3602 = vpop.f32.mrb[0].mxu0
    %v3603 = vadd.f32 %v3554, %v3602
    %v3604 = vpop.f32.mrb[0].mxu0
    %3605 = vdwg.mxu0
    %3606 = vmatprep.subr.bf16.mxu0 0
    %3607 = vmatpush1.bf16.msra.mxu0 %v3152
    %3608 = vmatprep.subr.bf16.mxu0 0
    %3609 = vmatpush1.bf16.msra.mxu0 %v3153
    %3610 = vmatprep.subr.bf16.mxu0 0
    %3611 = vmatpush1.bf16.msra.mxu0 %v3154
    %3612 = vmatprep.subr.bf16.mxu0 0
    %3613 = vmatpush1.bf16.msra.mxu0 %v3155
    %3614 = vmatprep.subr.bf16.mxu0 0
    %3615 = vmatpush1.bf16.msra.mxu0 %v3156
    %3616 = vmatprep.subr.bf16.mxu0 0
    %3617 = vmatpush1.bf16.msra.mxu0 %v3157
    %3618 = vmatprep.subr.bf16.mxu0 0
    %3619 = vmatpush1.bf16.msra.mxu0 %v3158
    %3620 = vmatprep.subr.bf16.mxu0 0
    %3621 = vmatpush1.bf16.msra.mxu0 %v3159
    %3622 = vmatprep.subr.bf16.mxu0 0
    %3623 = vmatpush1.bf16.msra.mxu0 %v3160
    %3624 = vmatprep.subr.bf16.mxu0 0
    %3625 = vmatpush1.bf16.msra.mxu0 %v3161
    %3626 = vmatprep.subr.bf16.mxu0 0
    %3627 = vmatpush1.bf16.msra.mxu0 %v3162
    %3628 = vmatprep.subr.bf16.mxu0 0
    %3629 = vmatpush1.bf16.msra.mxu0 %v3163
    %3630 = vmatprep.subr.bf16.mxu0 0
    %3631 = vmatpush1.bf16.msra.mxu0 %v3164
    %3632 = vmatprep.subr.bf16.mxu0 0
    %3633 = vmatpush1.bf16.msra.mxu0 %v3165
    %3634 = vmatprep.subr.bf16.mxu0 0
    %3635 = vmatpush1.bf16.msra.mxu0 %v3166
    %3636 = vmatprep.subr.bf16.mxu0 0
    %3637 = vmatpush1.bf16.msra.mxu0 %v3167
    %3638 = vmatprep.mubr.bf16.mxu0 %v2262
    %3639 = vmatmul.mubr.bf16.gmra.mrb[0].mxu0 %v2261
    %v3640 = vpop.f32.mrb[0].mxu0
    %v3641 = vadd.f32 %v3592, %v3640
    %v3642 = vpop.f32.mrb[0].mxu0
    %v3643 = vpop.f32.mrb[0].mxu0
    %v3644 = vadd.f32 %v3595, %v3643
    %v3645 = vpop.f32.mrb[0].mxu0
    %3646 = vmatprep.mubr.bf16.mxu0 %v2278
    %3647 = vmatmul.mubr.bf16.gmra.mrb[0].mxu0 %v2277
    %v3648 = vpop.f32.mrb[0].mxu0
    %v3649 = vadd.f32 %v3600, %v3648
    %v3650 = vpop.f32.mrb[0].mxu0
    %v3651 = vpop.f32.mrb[0].mxu0
    %v3652 = vadd.f32 %v3603, %v3651
    %v3653 = vpop.f32.mrb[0].mxu0
    %3654 = vdwg.mxu0
    %3655 = vmatprep.subr.bf16.mxu0 0
    %3656 = vmatpush1.bf16.msra.mxu0 %v3168
    %3657 = vmatprep.subr.bf16.mxu0 0
    %3658 = vmatpush1.bf16.msra.mxu0 %v3169
    %3659 = vmatprep.subr.bf16.mxu0 0
    %3660 = vmatpush1.bf16.msra.mxu0 %v3170
    %3661 = vmatprep.subr.bf16.mxu0 0
    %3662 = vmatpush1.bf16.msra.mxu0 %v3171
    %3663 = vmatprep.subr.bf16.mxu0 0
    %3664 = vmatpush1.bf16.msra.mxu0 %v3172
    %3665 = vmatprep.subr.bf16.mxu0 0
    %3666 = vmatpush1.bf16.msra.mxu0 %v3173
    %3667 = vmatprep.subr.bf16.mxu0 0
    %3668 = vmatpush1.bf16.msra.mxu0 %v3174
    %3669 = vmatprep.subr.bf16.mxu0 0
    %3670 = vmatpush1.bf16.msra.mxu0 %v3175
    %3671 = vmatprep.subr.bf16.mxu0 0
    %3672 = vmatpush1.bf16.msra.mxu0 %v3176
    %3673 = vmatprep.subr.bf16.mxu0 0
    %3674 = vmatpush1.bf16.msra.mxu0 %v3177
    %3675 = vmatprep.subr.bf16.mxu0 0
    %3676 = vmatpush1.bf16.msra.mxu0 %v3178
    %3677 = vmatprep.subr.bf16.mxu0 0
    %3678 = vmatpush1.bf16.msra.mxu0 %v3179
    %3679 = vmatprep.subr.bf16.mxu0 0
    %3680 = vmatpush1.bf16.msra.mxu0 %v3180
    %3681 = vmatprep.subr.bf16.mxu0 0
    %3682 = vmatpush1.bf16.msra.mxu0 %v3181
    %3683 = vmatprep.subr.bf16.mxu0 0
    %3684 = vmatpush1.bf16.msra.mxu0 %v3182
    %3685 = vmatprep.subr.bf16.mxu0 0
    %3686 = vmatpush1.bf16.msra.mxu0 %v3183
    %3687 = vmatprep.mubr.bf16.mxu0 %v2264
    %3688 = vmatmul.mubr.bf16.gmra.mrb[0].mxu0 %v2263
    %v3689 = vpop.f32.mrb[0].mxu0
    %v3690 = vadd.f32 %v3641, %v3689
    %v3691 = vpop.f32.mrb[0].mxu0
    %v3692 = vpop.f32.mrb[0].mxu0
    %v3693 = vadd.f32 %v3644, %v3692
    %v3694 = vpop.f32.mrb[0].mxu0
    %3695 = vmatprep.mubr.bf16.mxu0 %v2280
    %3696 = vmatmul.mubr.bf16.gmra.mrb[0].mxu0 %v2279
    %v3697 = vpop.f32.mrb[0].mxu0
    %v3698 = vadd.f32 %v3649, %v3697
    %v3699 = vpop.f32.mrb[0].mxu0
    %v3700 = vpop.f32.mrb[0].mxu0
    %v3701 = vadd.f32 %v3652, %v3700
    %v3702 = vpop.f32.mrb[0].mxu0
    %3703 = vdwg.mxu0
    %v3704 = vadd.f32 %v1473, %v3690
    %v3705 = vadd.f32 %v1474, %v3693
    %v3706 = vadd.f32 %v1475, %v3698
    %v3707 = vadd.f32 %v1476, %v3701
    %v3708 = vld [vmem:[%s15] sm:$0x1]
    %v3709 = vld [vmem:[%s16] sm:$0x1]
    %v3710 = vsel %vm140, %v3704, 0.0
    %3711 = vadd.xlane.f32.xlu0 %v3710
    %v3712 = vpop.xlane.xlu0 %3711
    %v3713 = vsel %vm140, %v3705, 0.0
    %3714 = vadd.xlane.f32.xlu0 %v3713
    %v3715 = vpop.xlane.xlu0 %3714
    %v3716 = vsel %vm140, %v3706, 0.0
    %3717 = vadd.xlane.f32.xlu0 %v3716
    %v3718 = vpop.xlane.xlu0 %3717
    %v3719 = vsel %vm140, %v3707, 0.0
    %3720 = vadd.xlane.f32.xlu0 %v3719
    %v3721 = vpop.xlane.xlu0 %3720
    %v3722 = vmul.f32 %v3712, %v1416
    %v3723 = vmul.f32 %v3715, %v1416
    %v3724 = vmul.f32 %v3718, %v1416
    %v3725 = vmul.f32 %v3721, %v1416
    %v3726 = vsub.f32 %v3704, %v3722
    %v3727 = vsub.f32 %v3705, %v3723
    %v3728 = vsub.f32 %v3706, %v3724
    %v3729 = vsub.f32 %v3707, %v3725
    %v3730 = vmul.f32 %v3726, %v3726
    %v3731 = vmul.f32 %v3727, %v3727
    %v3732 = vmul.f32 %v3728, %v3728
    %v3733 = vmul.f32 %v3729, %v3729
    %v3734 = vsel %vm140, %v3730, 0.0
    %3735 = vadd.xlane.f32.xlu0 %v3734
    %v3736 = vpop.xlane.xlu0 %3735
    %v3737 = vsel %vm140, %v3731, 0.0
    %3738 = vadd.xlane.f32.xlu0 %v3737
    %v3739 = vpop.xlane.xlu0 %3738
    %v3740 = vsel %vm140, %v3732, 0.0
    %3741 = vadd.xlane.f32.xlu0 %v3740
    %v3742 = vpop.xlane.xlu0 %3741
    %v3743 = vsel %vm140, %v3733, 0.0
    %3744 = vadd.xlane.f32.xlu0 %v3743
    %v3745 = vpop.xlane.xlu0 %3744
    %v3746 = vmul.f32 %v3736, %v1416
    %v3747 = vmul.f32 %v3739, %v1416
    %v3748 = vmul.f32 %v3742, %v1416
    %v3749 = vmul.f32 %v3745, %v1416
    %v3750 = vadd.f32 %v3746, 1e-05
    %v3751 = vadd.f32 %v3747, 1e-05
    %v3752 = vadd.f32 %v3748, 1e-05
    %v3753 = vadd.f32 %v3749, 1e-05
    %v3754 = vrsqrt.pop %v3750
    %v3755 = vrsqrt.pop %v3751
    %v3756 = vrsqrt.pop %v3752
    %v3757 = vrsqrt.pop %v3753
    %v3758 = vmul.f32 %v3726, %v3754
    %v3759 = vmul.f32 %v3727, %v3755
    %v3760 = vmul.f32 %v3728, %v3756
    %v3761 = vmul.f32 %v3729, %v3757
    %v3763 = vlaneseq
    %v3764 = vshrl.u32 %v3763, 7
    %v3765 = vsub.s32 0, %v3764
    %v3766 = vrot.slane %v3708, %v3765
    %v3768 = vmul.f32 %v3758, %v3766
    %v3769 = vmul.f32 %v3759, %v3766
    %v3770 = vmul.f32 %v3760, %v3766
    %v3771 = vmul.f32 %v3761, %v3766
    %v3773 = vlaneseq
    %v3774 = vshrl.u32 %v3773, 7
    %v3775 = vsub.s32 0, %v3774
    %v3776 = vrot.slane %v3709, %v3775
    %v3778 = vadd.f32 %v3768, %v3776
    %v3779 = vadd.f32 %v3769, %v3776
    %v3780 = vadd.f32 %v3770, %v3776
    %v3781 = vadd.f32 %v3771, %v3776
    %3782 = vst.msk [vmem:[%s19] sm:$0xff] %vm140, %v3778
    %3783 = vst.msk [vmem:[%s19 + $0x8] sm:$0xff] %vm140, %v3779
    %3784 = vst.msk [vmem:[%s19 + $0x10] sm:$0xff] %vm140, %v3780
    %3785 = vst.msk [vmem:[%s19 + $0x18] sm:$0xff] %vm140, %v3781
    %v3787 = vrot.slane %v3780, 7
    %v3789 = vsel %vm115, %v3778, %v3787
    %v3790 = vld [vmem:[%s17] sm:$0x1]
    %v3792 = vlaneseq
    %v3793 = vshrl.u32 %v3792, 7
    %v3794 = vsub.s32 0, %v3793
    %v3795 = vrot.slane %v3790, %v3794
    %v3797 = vmul.f32 %v3789, %v3795
    %vm3798 = vcmask 254976
    %v3799 = vsel %vm3798, %v3797, 0.0
    %3800 = vadd.xlane.f32.xlu0 %v3799
    %v3801 = vpop.xlane.xlu0 %3800
    %v3802 = vld [vmem:[#allocation2] sm:$0x1]
    %v3804 = vlaneseq
    %v3805 = vshrl.u32 %v3804, 7
    %v3806 = vsub.s32 0, %v3805
    %v3807 = vrot.slane %v3802, %v3806
    %v3809 = vadd.f32 %v3801, %v3807
    %vm3810 = vcmask 1024
    %3811 = vst.msk [vmem:[%s20] sm:$0x3] %vm3810, %v3809
    // Predicated region
    $region90: #{sentence_based_model_g.1} parent=1 // pred_check
      _
    $region91: #{sentence_based_model_g.1} parent=1 // pred_check_branch
      %3813 = sbr.rel (0) target = $region93
    $region92: #{sentence_based_model_g.1} parent=1 // pred_region
      _
    $region93: #{sentence_based_model_g.1} parent=1 // pred_fallthru
      _
    // Predicated region
    $region94: #{sentence_based_model_g.1} parent=1 // pred_check
      _
    $region95: #{sentence_based_model_g.1} parent=1 // pred_check_branch
      %3815 = sbr.rel (0) target = $region97
    $region96: #{sentence_based_model_g.1} parent=1 // pred_region
      _
    $region97: #{sentence_based_model_g.1} parent=1 // pred_fallthru
      _
    // Predicated region
    $region98: #{sentence_based_model_g.1} parent=1 // pred_check
      _
    $region99: #{sentence_based_model_g.1} parent=1 // pred_check_branch
      %3817 = sbr.rel (0) target = $region101
    $region100: #{sentence_based_model_g.1} parent=1 // pred_region
      _
    $region101: #{sentence_based_model_g.1} parent=1 // pred_fallthru
      _
    // Predicated region
    $region102: #{sentence_based_model_g.1} parent=1 // pred_check
      _
    $region103: #{sentence_based_model_g.1} parent=1 // pred_check_branch
      %3819 = sbr.rel (0) target = $region105
    $region104: #{sentence_based_model_g.1} parent=1 // pred_region
      _
    $region105: #{sentence_based_model_g.1} parent=1 // pred_fallthru
      _
    %3820 = vsyncpa [#allocation4], 1
    %3821 = vsyncpa [#allocation5], 1
    %3822 = vsyncpa [#allocation7], 1

</llo_original>
